<compile_context>
chip_gen: v7x
topology: tpu7x:2x2x1
jax: 0.10.0
libtpu: 0.0.40
codegen_flags: <defaults>
</compile_context>

<pallas_src>
import functools

import jax
import jax.numpy as jnp
from jax.experimental import pallas as pl
from jax.experimental.pallas import tpu as pltpu


def _axial_attn_kernel(x_ref, w_ref, b_ref, o_ref, *, axis):
    # x_ref: (1, C, H, W)   NCHW slab for one batch element
    # w_ref: (Din, 3*Dout)  fused [scale*Wq | Wk | Wv] (transposed to (in, out))
    # b_ref: (1, 3*Dout)    fused [scale*bq | bk | bv]
    # o_ref: (1, C, N, Dout) for axis='height' (N=H, Din=W)
    #        (1, C, Dout, N) for axis='width'  (N=W, Din=H)
    x = x_ref[0]                                   # (C, H, W)
    Din = w_ref.shape[0]
    Dout = w_ref.shape[1] // 3

    # In-VMEM relayout of the raw NCHW tile to (N, C, Din) -- replaces the old
    # host-side permutes (two full HBM round trips per direction for 'width').
    if axis == 'height':
        C, N, _ = x.shape                          # Din == W (already last dim)
        xp = pltpu.einshape("cnd->ncd", x)         # (H, C, W)
    else:
        C, _, N = x.shape                          # Din == H
        xp = pltpu.einshape("cdn->ncd", x)         # (W, C, H)

    # Fused QKV projection: one (N*C, Din) x (Din, 3*Dout) MXU matmul.
    qkv = jnp.dot(xp.reshape(N * C, Din), w_ref[...],
                  preferred_element_type=jnp.float32) + b_ref[...]
    qkv = qkv.reshape(N, C, 3 * Dout)

    q = qkv[..., :Dout]                            # already pre-scaled by `scale`
    k = qkv[..., Dout:2 * Dout]
    v = qkv[..., 2 * Dout:]

    # Attention over the channel axis, batched over N; contraction on the last
    # dim of both operands -> no explicit k.T / extra XLU transpose.
    s = jnp.einsum('ncd,ned->nce', q, k,
                   preferred_element_type=jnp.float32)            # (N, C, C)

    # Numerically-stable softmax along the last dim.
    m = jnp.max(s, axis=-1, keepdims=True)
    p = jnp.exp(s - m)
    denom = jnp.sum(p, axis=-1, keepdims=True)
    attn = p * pl.reciprocal(denom, approx=False)  # exact, keeps 1e-5 reference check

    out = jnp.einsum('nce,ned->ncd', attn, v,
                     preferred_element_type=jnp.float32)          # (N, C, Dout)

    # Write straight into the PyTorch output layout (no host-side permute).
    if axis == 'height':
        o_ref[0] = pltpu.einshape("ncd->cnd", out).astype(o_ref.dtype)   # (C, H, Dout)
    else:
        o_ref[0] = pltpu.einshape("ncd->cdn", out).astype(o_ref.dtype)   # (C, Dout, W)


def axial_attention_pallas(x, w_qkv, b_qkv, *, axis='height'):
    """x: NCHW (B, C, H, W) f32 -> (B, C, H, Dout) ['height'] or (B, C, Dout, W) ['width'].

    One grid step handles one full (C, H, W) slab (all spatial slices of a batch
    element at once); all permutes happen on VMEM tiles inside the kernel."""
    B, C, H, W = x.shape
    Dout = w_qkv.shape[1] // 3
    if axis == 'height':
        out_shape = (B, C, H, Dout)
    elif axis == 'width':
        out_shape = (B, C, Dout, W)
    else:
        raise ValueError(f"unknown axis {axis!r}")

    kernel = functools.partial(_axial_attn_kernel, axis=axis)

    return pl.pallas_call(
        kernel,
        out_shape=jax.ShapeDtypeStruct(out_shape, jnp.float32),
        grid_spec=pltpu.PrefetchScalarGridSpec(
            num_scalar_prefetch=0,
            grid=(B,),
            in_specs=[
                pl.BlockSpec((1, C, H, W), lambda b: (b, 0, 0, 0)),   # NCHW slab
                pl.BlockSpec(w_qkv.shape, lambda b: (0, 0)),          # fused Wqkv
                pl.BlockSpec(b_qkv.shape, lambda b: (0, 0)),          # fused bias
            ],
            out_specs=pl.BlockSpec((1,) + out_shape[1:], lambda b: (b, 0, 0, 0)),
        ),
        compiler_params=pltpu.CompilerParams(
            dimension_semantics=("parallel",)),                       # megacore on v7x
    )(x, w_qkv, b_qkv)


class AxialAttentionBlockPallas:
    """JAX/Pallas port of the PyTorch AxialAttentionBlock."""

    def __init__(self, in_channels, out_channels, axis='height', *, key):
        # NOTE: PyTorch uses integer floor division; out_channels < 8 would divide
        # by zero there as well, so we guard it explicitly.
        assert out_channels >= 8, "scale=(out_channels//8)**-0.5 requires out_channels >= 8"
        self.axis = axis
        self.in_channels = in_channels
        self.out_channels = out_channels
        self.scale = float((out_channels // 8) ** (-0.5))

        kq, kk, kv, kbq, kbk, kbv = jax.random.split(key, 6)
        bound = 1.0 / float(in_channels) ** 0.5
        # nn.Linear stores (out, in); we keep the transpose (in, out).
        init_w = lambda k: jax.random.uniform(
            k, (in_channels, out_channels), jnp.float32, -bound, bound)
        init_b = lambda k: jax.random.uniform(
            k, (1, out_channels), jnp.float32, -bound, bound)
        self.wq, self.wk, self.wv = init_w(kq), init_w(kk), init_w(kv)
        self.bq, self.bk, self.bv = init_b(kbq), init_b(kbk), init_b(kbv)

        # Fused QKV parameters with the softmax scale folded into the query
        # projection: softmax((scale*q) @ k^T) == softmax((q @ k^T) * scale).
        self.w_qkv = jnp.concatenate(
            [self.wq * self.scale, self.wk, self.wv], axis=1)        # (Din, 3*Dout)
        self.b_qkv = jnp.concatenate(
            [self.bq * self.scale, self.bk, self.bv], axis=1)        # (1, 3*Dout)

    def __call__(self, x):
        # x: NCHW (B, C, H, W), float32
        B, C, H, W = x.shape
        if self.axis == 'height':
            assert W == self.in_channels, "Linear acts on the last dim (W) after permute"
        elif self.axis == 'width':
            assert H == self.in_channels, "Linear acts on the last dim (H) after permute"
        else:
            raise ValueError(f"unknown axis {self.axis!r}")
        return axial_attention_pallas(x, self.w_qkv, self.b_qkv, axis=self.axis)


def _reference(x, block):
    """Pure-JAX reference mirroring the PyTorch forward (for validation)."""
    if block.axis == 'height':
        xp = jnp.transpose(x, (0, 2, 1, 3))         # (B, H, C, W)
    else:
        xp = jnp.transpose(x, (0, 3, 1, 2))         # (B, W, C, H)
    q = xp @ block.wq + block.bq
    k = xp @ block.wk + block.bk
    v = xp @ block.wv + block.bv
    s = jnp.einsum('bncd,bned->bnce', q, k) * block.scale
    s = jax.nn.softmax(s, axis=-1)
    out = jnp.einsum('bnce,bned->bncd', s, v)
    if block.axis == 'height':
        return jnp.transpose(out, (0, 2, 1, 3))     # (B, C, H, Dout)
    return jnp.transpose(out, (0, 2, 3, 1))         # (B, C, Dout, W)


if __name__ == "__main__":
    key = jax.random.PRNGKey(0)
    kx, kh, kw = jax.random.split(key, 3)

    B, C, H, W = 2, 4, 16, 16
    out_channels = 32

    x = jax.random.normal(kx, (B, C, H, W), jnp.float32)

    # axis='height' (in_channels == W)
    blk_h = AxialAttentionBlockPallas(W, out_channels, axis='height', key=kh)
    out_h = jax.block_until_ready(blk_h(x))
    ref_h = _reference(x, blk_h)
    assert out_h.shape == (B, C, H, out_channels), out_h.shape
    assert jnp.allclose(out_h, ref_h, atol=1e-5, rtol=1e-5), "height mismatch vs reference"

    # axis='width' (in_channels == H)
    blk_w = AxialAttentionBlockPallas(H, out_channels, axis='width', key=kw)
    out_w = jax.block_until_ready(blk_w(x))
    ref_w = _reference(x, blk_w)
    assert out_w.shape == (B, C, out_channels, W), out_w.shape
    assert jnp.allclose(out_w, ref_w, atol=1e-5, rtol=1e-5), "width mismatch vs reference"

    print("KERNEL_OK")
</pallas_src>

<mosaic_0001>
module attributes {stable_mosaic.version = 11 : i64} {
  func.func @_axial_attn_kernel(%arg0: i32, %arg1: memref<1x4x16x16xf32, #tpu.memory_space<vmem>>, %arg2: memref<16x96xf32, #tpu.memory_space<vmem>>, %arg3: memref<1x96xf32, #tpu.memory_space<vmem>>, %arg4: memref<1x4x16x32xf32, #tpu.memory_space<vmem>>) attributes {dimension_semantics = [#tpu.dimension_semantics<parallel>], iteration_bounds = array<i64: 2>, scalar_prefetch = 0 : i64, scratch_operands = 0 : i64, tpu.core_type = #tpu.core_type<tc>, window_params = [{transform_indices = @transform_0, window_bounds = array<i64: 1, 4, 16, 16>}, {pipeline_mode = #tpu.pipeline_mode<synchronous>, transform_indices = @transform_1, window_bounds = array<i64: 16, 96>}, {pipeline_mode = #tpu.pipeline_mode<synchronous>, transform_indices = @transform_2, window_bounds = array<i64: 1, 96>}, {transform_indices = @transform_3, window_bounds = array<i64: 1, 4, 16, 32>}]} {
    %c0 = arith.constant 0 : index
    %c0_0 = arith.constant 0 : index
    %c0_1 = arith.constant 0 : index
    %c0_2 = arith.constant 0 : index
    %0 = vector.load %arg1[%c0, %c0_0, %c0_1, %c0_2] : memref<1x4x16x16xf32, #tpu.memory_space<vmem>>, vector<1x4x16x16xf32>
    %1 = vector.shape_cast %0 : vector<1x4x16x16xf32> to vector<4x16x16xf32>
    %2 = tpu.transpose %1, [1, 0, 2] : vector<4x16x16xf32> -> vector<16x4x16xf32>
    %3 = vector.shape_cast %2 : vector<16x4x16xf32> to vector<64x16xf32>
    %c0_3 = arith.constant 0 : index
    %c0_4 = arith.constant 0 : index
    %4 = vector.load %arg2[%c0_3, %c0_4] : memref<16x96xf32, #tpu.memory_space<vmem>>, vector<16x96xf32>
    %cst = arith.constant dense<0.000000e+00> : vector<64x96xf32>
    %5 = tpu.matmul %3, %4, %cst {dimension_numbers = #tpu.dot_dimension_numbers<[1], [0], [0], [1], [0, 0, 1, 1], [], []>} : vector<64x16xf32>, vector<16x96xf32>, vector<64x96xf32> -> vector<64x96xf32>
    %c0_5 = arith.constant 0 : index
    %c0_6 = arith.constant 0 : index
    %6 = vector.load %arg3[%c0_5, %c0_6] : memref<1x96xf32, #tpu.memory_space<vmem>>, vector<1x96xf32>
    %7 = vector.broadcast %6 : vector<1x96xf32> to vector<64x96xf32>
    %8 = arith.addf %5, %7 : vector<64x96xf32>
    %9 = vector.shape_cast %8 : vector<64x96xf32> to vector<16x4x96xf32>
    %10 = vector.extract_strided_slice %9 {offsets = [0, 0, 0], sizes = [16, 4, 32], strides = [1, 1, 1]} : vector<16x4x96xf32> to vector<16x4x32xf32>
    %11 = vector.extract_strided_slice %9 {offsets = [0, 0, 32], sizes = [16, 4, 32], strides = [1, 1, 1]} : vector<16x4x96xf32> to vector<16x4x32xf32>
    %12 = vector.extract_strided_slice %9 {offsets = [0, 0, 64], sizes = [16, 4, 32], strides = [1, 1, 1]} : vector<16x4x96xf32> to vector<16x4x32xf32>
    "tpu.trace_start"() <{level = 10 : i32, message = "ncd,ned->nce"}> : () -> ()
    %cst_7 = arith.constant dense<0.000000e+00> : vector<16x4x4xf32>
    %13 = tpu.matmul %10, %11, %cst_7 {dimension_numbers = #tpu.dot_dimension_numbers<[2], [2], [1], [1], [0, 0, 0, 1, 1, 1], [0], [0]>} : vector<16x4x32xf32>, vector<16x4x32xf32>, vector<16x4x4xf32> -> vector<16x4x4xf32>
    "tpu.trace_stop"() : () -> ()
    %cst_8 = arith.constant dense<0xFF800000> : vector<16x4xf32>
    %14 = vector.multi_reduction <maximumf>, %13, %cst_8 [2] : vector<16x4x4xf32> to vector<16x4xf32>
    %15 = vector.shape_cast %14 : vector<16x4xf32> to vector<16x4x1xf32>
    %16 = vector.broadcast %15 : vector<16x4x1xf32> to vector<16x4x4xf32>
    %17 = arith.subf %13, %16 : vector<16x4x4xf32>
    %18 = math.exp %17 : vector<16x4x4xf32>
    %cst_9 = arith.constant dense<0.000000e+00> : vector<16x4xf32>
    %19 = vector.multi_reduction <add>, %18, %cst_9 [2] : vector<16x4x4xf32> to vector<16x4xf32>
    %20 = vector.shape_cast %19 : vector<16x4xf32> to vector<16x4x1xf32>
    %21 = tpu.reciprocal %20 : vector<16x4x1xf32> -> vector<16x4x1xf32>
    %22 = vector.broadcast %21 : vector<16x4x1xf32> to vector<16x4x4xf32>
    %23 = arith.mulf %18, %22 : vector<16x4x4xf32>
    "tpu.trace_start"() <{level = 10 : i32, message = "nce,ned->ncd"}> : () -> ()
    %cst_10 = arith.constant dense<0.000000e+00> : vector<16x4x32xf32>
    %24 = tpu.matmul %23, %12, %cst_10 {dimension_numbers = #tpu.dot_dimension_numbers<[2], [1], [1], [2], [0, 0, 0, 1, 1, 2], [0], [0]>} : vector<16x4x4xf32>, vector<16x4x32xf32>, vector<16x4x32xf32> -> vector<16x4x32xf32>
    "tpu.trace_stop"() : () -> ()
    %25 = tpu.transpose %24, [1, 0, 2] : vector<16x4x32xf32> -> vector<4x16x32xf32>
    %c0_11 = arith.constant 0 : index
    %c0_12 = arith.constant 0 : index
    %c0_13 = arith.constant 0 : index
    %c0_14 = arith.constant 0 : index
    %26 = vector.load %arg4[%c0_11, %c0_12, %c0_13, %c0_14] : memref<1x4x16x32xf32, #tpu.memory_space<vmem>>, vector<1x4x16x32xf32>
    %27 = vector.shape_cast %26 : vector<1x4x16x32xf32> to vector<4x16x32xf32>
    %28 = vector.shape_cast %25 : vector<4x16x32xf32> to vector<1x4x16x32xf32>
    tpu.vector_store %arg4[%c0_11, %c0_12, %c0_13, %c0_14], %28 {strides = array<i32>} : memref<1x4x16x32xf32, #tpu.memory_space<vmem>>, vector<1x4x16x32xf32>,
    return
  }
  func.func @transform_0(%arg0: i32) -> (i32, i32, i32, i32) {
    %c0_i32 = arith.constant 0 : i32
    %c0_i32_0 = arith.constant 0 : i32
    %c0_i32_1 = arith.constant 0 : i32
    %c0_i32_2 = arith.constant 0 : i32
    return %arg0, %c0_i32, %c0_i32_0, %c0_i32_1 : i32, i32, i32, i32
  }
  func.func @transform_1(%arg0: i32) -> (i32, i32) {
    %c0_i32 = arith.constant 0 : i32
    %c0_i32_0 = arith.constant 0 : i32
    %c0_i32_1 = arith.constant 0 : i32
    return %c0_i32, %c0_i32_0 : i32, i32
  }
  func.func @transform_2(%arg0: i32) -> (i32, i32) {
    %c0_i32 = arith.constant 0 : i32
    %c0_i32_0 = arith.constant 0 : i32
    %c0_i32_1 = arith.constant 0 : i32
    return %c0_i32, %c0_i32_0 : i32, i32
  }
  func.func @transform_3(%arg0: i32) -> (i32, i32, i32, i32) {
    %c0_i32 = arith.constant 0 : i32
    %c0_i32_0 = arith.constant 0 : i32
    %c0_i32_1 = arith.constant 0 : i32
    %c0_i32_2 = arith.constant 0 : i32
    return %arg0, %c0_i32, %c0_i32_0, %c0_i32_1 : i32, i32, i32, i32
  }
}

</mosaic_0001>

<llo_original>
// kernel: tpu_custom_call.1
$region0: #{tpu_custom_call.1}
  #allocation0 [shape = 'u32[]', space=smem, size = 0x4, offset = 0x4, fixed_abs, tag = 'smem constant byte address 0x4 - core index']
  #allocation1 [shape = 'u32[144,128]{1,0:T(1,128)}', space=vmem, size = 0x12000, scoped, tag = 'internal scratch']
  %s0 = inlined_call_operand.hbm [shape: f32[2,4,16,16], index: 0, kind: input, shape index: {}]
  %s1 = inlined_call_operand.hbm [shape: f32[16,96], index: 1, kind: input, shape index: {}]
  %s2 = inlined_call_operand.vmem [shape: f32[1,96], index: 2, kind: input, shape index: {}]
  %s3 = inlined_call_operand.hbm [shape: f32[2,4,16,32], index: 3, kind: output, shape index: {}]
  %s4 = sld [smem:[#allocation0]]
  $region53: #{tpu_custom_call.1} parent=0
    _
  %s6 = ssub.s32 1, %s4
  %s7 = scalar_select 0, %s6, %s4
  $region1: #{tpu_custom_call.1} parent=0
    #allocation2 [shape = 'u8[65536]{0}', space=vmem, size = 0x10000, scoped, tag = 'input window, operand 0']
    #allocation3 [shape = 's32[2]{0}', space=sflag, size = 0x8, scoped, tag = 'scoped memory for tpu_custom_call.1']
    #allocation4 [shape = 's32[2]{0}', space=sflag, size = 0x8, scoped, tag = 'scoped memory for tpu_custom_call.1']
    #allocation5 [shape = 'u8[8192]{0}', space=vmem, size = 0x2000, scoped, tag = 'input window, operand 1, single buffered']
    #allocation6 [shape = 's32[1]{0}', space=sflag, size = 0x4, scoped, tag = 'scoped memory for tpu_custom_call.1']
    #allocation7 [shape = 'u8[65536]{0}', space=vmem, size = 0x10000, scoped, tag = 'output window, operand 0']
    %8 = vsyncpa [#allocation3], 0
    %s9 = scalar_lea.sflag [#allocation3], 1
    %10 = vsyncpa %s9, 0
    %11 = vsyncpa [#allocation6], 0
    %12 = vsyncpa [#allocation4], 0
    %s13 = scalar_lea.sflag [#allocation4], 1
    %14 = vsyncpa %s13, 0
    loop: start=0, step=1, limit=4
    $region2: #{tpu_custom_call.1} parent=1 // loop_pre_header
      _
    $region3: #{tpu_custom_call.1} parent=1 // loop_header
      %s16 = sphi 0, %s20
      %p17 = scmp.ge.s32.totalorder %s16, 4
      %s26 = sphi 0, %s28
      %s29 = sphi 0, %s26
      %s30 = sphi 0, %s29
      %s46 = sphi 0, %s30
      %s50 = sphi 0, %s50
      %s52 = sphi 0, %s50
      %s53 = sphi 0, %s52
      %s67 = sphi 0, %s53
      %s71 = sphi 0, %s71
      %s73 = sphi 0, %s71
      %s74 = sphi 0, %s73
      %s88 = sphi 0, %s74
      %s94 = sphi 0, %s96
      %s97 = sphi 0, %s94
      %s98 = sphi 0, %s97
      %s114 = sphi 0, %s98
    $region4: #{tpu_custom_call.1} parent=1 // loop_header_branch
      %19 = sbr.rel (%p17) target = $region8
    $region5: #{tpu_custom_call.1} parent=1 // loop_body
      %s21 = ssub.s32 %s16, 1
      %s22 = ssub.s32 %s16, 2
      %s23 = sadd.s32 %s16, 1
      %s24 = ssub.s32 %s16, %s23
      %p25 = scmp.eq.s32.totalorder %s24, 0
      %s27 = sadd.s32 %s26, 1
      %s28 = scalar_select %p25, %s26, %s27
      %p31 = pneg %p25
      %p32 = scmp.eq.s32.totalorder %s16, 1
      %p33 = por %p31, %p32
      %p34 = scmp.ne.s32.totalorder %s26, %s29
      %p35 = scmp.eq.s32.totalorder %s16, 0
      %p36 = por %p34, %p35
      %p37 = scmp.ne.s32.totalorder %s26, %s29
      %p38 = scmp.eq.s32.totalorder %s21, 1
      %p39 = por %p37, %p38
      %p40 = scmp.ne.s32.totalorder %s29, %s30
      %p41 = scmp.eq.s32.totalorder %s21, 0
      %p42 = por %p40, %p41
      %p43 = scmp.ne.s32.totalorder %s29, %s30
      %p44 = scmp.eq.s32.totalorder %s22, 1
      %p45 = por %p43, %p44
      %p47 = scmp.ne.s32.totalorder %s30, %s46
      %p48 = scmp.eq.s32.totalorder %s22, 0
      %p49 = por %p47, %p48
      %s51 = sadd.s32 %s50, 1
      %p54 = scmp.eq.s32.totalorder %s16, 1
      %p55 = scmp.ne.s32.totalorder %s50, %s52
      %p56 = scmp.eq.s32.totalorder %s16, 0
      %p57 = por %p55, %p56
      %p58 = scmp.ne.s32.totalorder %s50, %s52
      %p59 = scmp.eq.s32.totalorder %s21, 1
      %p60 = por %p58, %p59
      %p61 = scmp.ne.s32.totalorder %s52, %s53
      %p62 = scmp.eq.s32.totalorder %s21, 0
      %p63 = por %p61, %p62
      %p64 = scmp.ne.s32.totalorder %s52, %s53
      %p65 = scmp.eq.s32.totalorder %s22, 1
      %p66 = por %p64, %p65
      %p68 = scmp.ne.s32.totalorder %s53, %s67
      %p69 = scmp.eq.s32.totalorder %s22, 0
      %p70 = por %p68, %p69
      %s72 = sadd.s32 %s71, 1
      %p75 = scmp.eq.s32.totalorder %s16, 1
      %p76 = scmp.ne.s32.totalorder %s71, %s73
      %p77 = scmp.eq.s32.totalorder %s16, 0
      %p78 = por %p76, %p77
      %p79 = scmp.ne.s32.totalorder %s71, %s73
      %p80 = scmp.eq.s32.totalorder %s21, 1
      %p81 = por %p79, %p80
      %p82 = scmp.ne.s32.totalorder %s73, %s74
      %p83 = scmp.eq.s32.totalorder %s21, 0
      %p84 = por %p82, %p83
      %p85 = scmp.ne.s32.totalorder %s73, %s74
      %p86 = scmp.eq.s32.totalorder %s22, 1
      %p87 = por %p85, %p86
      %p89 = scmp.ne.s32.totalorder %s74, %s88
      %p90 = scmp.eq.s32.totalorder %s22, 0
      %p91 = por %p89, %p90
      %s92 = ssub.s32 %s16, %s23
      %p93 = scmp.eq.s32.totalorder %s92, 0
      %s95 = sadd.s32 %s94, 1
      %s96 = scalar_select %p93, %s94, %s95
      %p99 = pneg %p93
      %p100 = scmp.eq.s32.totalorder %s16, 1
      %p101 = por %p99, %p100
      %p102 = scmp.ne.s32.totalorder %s94, %s97
      %p103 = scmp.eq.s32.totalorder %s16, 0
      %p104 = por %p102, %p103
      %p105 = scmp.ne.s32.totalorder %s94, %s97
      %p106 = scmp.eq.s32.totalorder %s21, 1
      %p107 = por %p105, %p106
      %p108 = scmp.ne.s32.totalorder %s97, %s98
      %p109 = scmp.eq.s32.totalorder %s21, 0
      %p110 = por %p108, %p109
      %p111 = scmp.ne.s32.totalorder %s97, %s98
      %p112 = scmp.eq.s32.totalorder %s22, 1
      %p113 = por %p111, %p112
      %p115 = scmp.ne.s32.totalorder %s98, %s114
      %p116 = scmp.eq.s32.totalorder %s22, 0
      %p117 = por %p115, %p116
      %p118 = scmp.le.s32.totalorder 1, %s16
      %p119 = scmp.lt.s32.totalorder %s16, 3
      %p120 = pnand %p118, %p119
      %p121 = pneg %p120
      // Predicated region
      $region9: #{tpu_custom_call.1} parent=5 // pred_check
        _
      $region10: #{tpu_custom_call.1} parent=5 // pred_check_branch
        %123 = sbr.rel (%p120) target = $region12
      $region11: #{tpu_custom_call.1} parent=5 // pred_region
        %s124 = ssub.s32 %s16, 1
        // Predicated region
        $region13: #{tpu_custom_call.1} parent=11 // pred_check
          %p125 = pneg %p63
        $region14: #{tpu_custom_call.1} parent=11 // pred_check_branch
          %127 = sbr.rel (%p125) target = $region16
        $region15: #{tpu_custom_call.1} parent=11 // pred_region
          %s129 = ssub.s32 256, 256
          %130 = vsyncadd [#allocation6], %s129
          %s131 = sshll.u32 [#allocation5], 4
          %s132 = int_to_ptr.vmem [resolvable:$true] %s131
          %137 = dma.hbm_to_vmem [thread:$0]  %s1, 256, %s132, [#allocation6], 128, 128, 8
        $region16: #{tpu_custom_call.1} parent=11 // pred_fallthru
          _
        // Predicated region
        $region17: #{tpu_custom_call.1} parent=11 // pred_check
          %p138 = pneg %p84
        $region18: #{tpu_custom_call.1} parent=11 // pred_check_branch
          %140 = sbr.rel (%p138) target = $region20
        $region19: #{tpu_custom_call.1} parent=11 // pred_region
          _
        $region20: #{tpu_custom_call.1} parent=11 // pred_fallthru
          _
      $region12: #{tpu_custom_call.1} parent=5 // pred_fallthru
        _
      %p141 = scmp.lt.s32.totalorder %s16, 2
      // Predicated region
      $region21: #{tpu_custom_call.1} parent=5 // pred_check
        %p142 = pneg %p141
      $region22: #{tpu_custom_call.1} parent=5 // pred_check_branch
        %144 = sbr.rel (%p142) target = $region24
      $region23: #{tpu_custom_call.1} parent=5 // pred_region
        // Predicated region
        $region25: #{tpu_custom_call.1} parent=23 // pred_check
          %p145 = pneg %p36
        $region26: #{tpu_custom_call.1} parent=23 // pred_check_branch
          %147 = sbr.rel (%p145) target = $region28
        $region27: #{tpu_custom_call.1} parent=23 // pred_region
          %s148 = sand.u32 %s26, 1
          %s149 = scalar_lea.sflag [#allocation3], %s148
          %s150 = sand.u32 %s26, 1
          %s151 = smul.addr %s150, 64
          %s152 = scalar_lea.vmem [#allocation2], %s151
          %s154 = ssub.s32 1024, 1024
          %155 = vsyncadd %s149, %s154
          %s156 = smul.addr %s16, 8
          %s157 = smul.addr %s156, 128
          %s158 = scalar_lea.hbm %s0, %s157
          %s159 = sshll.u32 %s152, 4
          %s160 = int_to_ptr.vmem [resolvable:$true] %s159
          %165 = dma.hbm_to_vmem [thread:$0]  %s158, 1024, %s160, %s149, 128, 128, 8
        $region28: #{tpu_custom_call.1} parent=23 // pred_fallthru
          _
      $region24: #{tpu_custom_call.1} parent=5 // pred_fallthru
        _
      %p166 = scmp.le.s32.totalorder 1, %s16
      %p167 = scmp.lt.s32.totalorder %s16, 3
      %p168 = pnand %p166, %p167
      %p169 = pneg %p168
      // Predicated region
      $region29: #{tpu_custom_call.1} parent=5 // pred_check
        _
      $region30: #{tpu_custom_call.1} parent=5 // pred_check_branch
        %171 = sbr.rel (%p168) target = $region32
      $region31: #{tpu_custom_call.1} parent=5 // pred_region
        %s172 = ssub.s32 %s16, 1
        %s173 = sand.u32 %s29, 1
        %s174 = scalar_lea.sflag [#allocation3], %s173
        %s175 = sand.u32 %s29, 1
        %s176 = smul.addr %s175, 64
        %s177 = scalar_lea.vmem [#allocation2], %s176
        // Predicated region
        $region33: #{tpu_custom_call.1} parent=31 // pred_check
          %p178 = pneg %p42
        $region34: #{tpu_custom_call.1} parent=31 // pred_check_branch
          %180 = sbr.rel (%p178) target = $region36
        $region35: #{tpu_custom_call.1} parent=31 // pred_region
          %181 = dma.done %s174, 1024
        $region36: #{tpu_custom_call.1} parent=31 // pred_fallthru
          _
        // Predicated region
        $region37: #{tpu_custom_call.1} parent=31 // pred_check
          %p182 = pneg %p63
        $region38: #{tpu_custom_call.1} parent=31 // pred_check_branch
          %184 = sbr.rel (%p182) target = $region40
        $region39: #{tpu_custom_call.1} parent=31 // pred_region
          %185 = dma.done [#allocation6], 256
        $region40: #{tpu_custom_call.1} parent=31 // pred_fallthru
          _
        %s186 = sand.u32 %s29, 1
        %s187 = scalar_lea.sflag [#allocation3], %s186
        %s188 = sand.u32 %s29, 1
        %s189 = smul.addr %s188, 64
        %s190 = scalar_lea.vmem [#allocation2], %s189
        %p191 = pneg %p42
        %p192 = pneg %p39
        %p193 = pneg %p63
        %p194 = pneg %p60
        %p195 = pneg %p84
        %p196 = pneg %p81
        %p197 = pneg %p110
        %p198 = pneg %p107
        %s199 = sand.u32 %s97, 1
        %s200 = scalar_lea.sflag [#allocation4], %s199
        %s201 = sand.u32 %s97, 1
        %s202 = smul.addr %s201, 64
        %s203 = scalar_lea.vmem [#allocation7], %s202
        %v204 = vld [vmem:[%s177] sm:$0xff]
        %v205 = vld [vmem:[%s177 + $0x8] sm:$0xff]
        %v206 = vld [vmem:[%s177 + $0x10] sm:$0xff]
        %v207 = vld [vmem:[%s177 + $0x18] sm:$0xff]
        %v208 = vld [vmem:[%s177 + $0x20] sm:$0xff]
        %v209 = vld [vmem:[%s177 + $0x28] sm:$0xff]
        %v210 = vld [vmem:[%s177 + $0x30] sm:$0xff]
        %v211 = vld [vmem:[%s177 + $0x38] sm:$0xff]
        %v212 = vcombine.low %v204, %v208
        %v213 = vcombine.high %v204, %v208
        %v215 = vunpack.c.l.s4 1983009808
        %v216 = vunpack.c.0.s8 %v215
        %v217 = vlaneseq
        %v218 = vshrl.u32 %v217, 7
        %v219 = vsub.s32 %v216, %v218
        %v220 = vrot.slane %v212, %v219
        %v222 = vunpack.c.l.s4 1983009808
        %v223 = vunpack.c.0.s8 %v222
        %v224 = vlaneseq
        %v225 = vshrl.u32 %v224, 7
        %v226 = vsub.s32 %v223, %v225
        %v227 = vrot.slane %v213, %v226
        %v228 = vcombine.low %v206, %v210
        %v229 = vcombine.high %v206, %v210
        %v231 = vunpack.c.l.s4 1983009808
        %v232 = vunpack.c.0.s8 %v231
        %v233 = vlaneseq
        %v234 = vshrl.u32 %v233, 7
        %v235 = vsub.s32 %v232, %v234
        %v236 = vrot.slane %v228, %v235
        %v238 = vunpack.c.l.s4 1983009808
        %v239 = vunpack.c.0.s8 %v238
        %v240 = vlaneseq
        %v241 = vshrl.u32 %v240, 7
        %v242 = vsub.s32 %v239, %v241
        %v243 = vrot.slane %v229, %v242
        %v244 = vcombine.low %v220, %v236
        %v245 = vcombine.high %v220, %v236
        %v247 = vunpack.c.l.s4 1934713408
        %v248 = vunpack.c.0.s8 %v247
        %v249 = vlaneseq
        %v250 = vshrl.u32 %v249, 7
        %v251 = vsub.s32 %v248, %v250
        %v252 = vrot.slane %v244, %v251
        %v254 = vunpack.c.l.s4 1934713408
        %v255 = vunpack.c.0.s8 %v254
        %v256 = vlaneseq
        %v257 = vshrl.u32 %v256, 7
        %v258 = vsub.s32 %v255, %v257
        %v259 = vrot.slane %v245, %v258
        %v260 = vcombine.low %v227, %v243
        %v261 = vcombine.high %v227, %v243
        %v263 = vunpack.c.l.s4 1934713408
        %v264 = vunpack.c.0.s8 %v263
        %v265 = vlaneseq
        %v266 = vshrl.u32 %v265, 7
        %v267 = vsub.s32 %v264, %v266
        %v268 = vrot.slane %v260, %v267
        %v270 = vunpack.c.l.s4 1934713408
        %v271 = vunpack.c.0.s8 %v270
        %v272 = vlaneseq
        %v273 = vshrl.u32 %v272, 7
        %v274 = vsub.s32 %v271, %v273
        %v275 = vrot.slane %v261, %v274
        %v276 = vcombine.high %v252, 0.0
        %v277 = vcombine.high %v259, 0.0
        %v278 = vcombine.high %v268, 0.0
        %v279 = vcombine.high %v275, 0.0
        %v280 = vcombine.low %v205, %v209
        %v281 = vcombine.high %v205, %v209
        %v283 = vunpack.c.l.s4 1983009808
        %v284 = vunpack.c.0.s8 %v283
        %v285 = vlaneseq
        %v286 = vshrl.u32 %v285, 7
        %v287 = vsub.s32 %v284, %v286
        %v288 = vrot.slane %v280, %v287
        %v290 = vunpack.c.l.s4 1983009808
        %v291 = vunpack.c.0.s8 %v290
        %v292 = vlaneseq
        %v293 = vshrl.u32 %v292, 7
        %v294 = vsub.s32 %v291, %v293
        %v295 = vrot.slane %v281, %v294
        %v296 = vcombine.low %v207, %v211
        %v297 = vcombine.high %v207, %v211
        %v299 = vunpack.c.l.s4 1983009808
        %v300 = vunpack.c.0.s8 %v299
        %v301 = vlaneseq
        %v302 = vshrl.u32 %v301, 7
        %v303 = vsub.s32 %v300, %v302
        %v304 = vrot.slane %v296, %v303
        %v306 = vunpack.c.l.s4 1983009808
        %v307 = vunpack.c.0.s8 %v306
        %v308 = vlaneseq
        %v309 = vshrl.u32 %v308, 7
        %v310 = vsub.s32 %v307, %v309
        %v311 = vrot.slane %v297, %v310
        %v312 = vcombine.low %v288, %v304
        %v313 = vcombine.high %v288, %v304
        %v315 = vunpack.c.l.s4 1934713408
        %v316 = vunpack.c.0.s8 %v315
        %v317 = vlaneseq
        %v318 = vshrl.u32 %v317, 7
        %v319 = vsub.s32 %v316, %v318
        %v320 = vrot.slane %v312, %v319
        %v322 = vunpack.c.l.s4 1934713408
        %v323 = vunpack.c.0.s8 %v322
        %v324 = vlaneseq
        %v325 = vshrl.u32 %v324, 7
        %v326 = vsub.s32 %v323, %v325
        %v327 = vrot.slane %v313, %v326
        %v328 = vcombine.low %v295, %v311
        %v329 = vcombine.high %v295, %v311
        %v331 = vunpack.c.l.s4 1934713408
        %v332 = vunpack.c.0.s8 %v331
        %v333 = vlaneseq
        %v334 = vshrl.u32 %v333, 7
        %v335 = vsub.s32 %v332, %v334
        %v336 = vrot.slane %v328, %v335
        %v338 = vunpack.c.l.s4 1934713408
        %v339 = vunpack.c.0.s8 %v338
        %v340 = vlaneseq
        %v341 = vshrl.u32 %v340, 7
        %v342 = vsub.s32 %v339, %v341
        %v343 = vrot.slane %v329, %v342
        %v344 = vcombine.high %v320, 0.0
        %v345 = vcombine.high %v327, 0.0
        %v346 = vcombine.high %v336, 0.0
        %v347 = vcombine.high %v343, 0.0
        %v348 = vld [vmem:[#allocation5] sm:$0xff]
        %v349 = vld [vmem:[#allocation5 + $0x8] sm:$0xff]
        %v350 = vld [vmem:[%s2] sm:$0x1]
        %v352 = vlaneseq
        %v353 = vshrl.u32 %v352, 7
        %v354 = vsub.s32 0, %v353
        %v355 = vrot.slane %v350, %v354
        %v373 = vcombine.low %v252, %v276
        %v374 = vcombine.low %v259, %v277
        %v375 = vcombine.low %v268, %v278
        %v376 = vcombine.low %v275, %v279
        %v377 = vcombine.low %v320, %v344
        %v378 = vcombine.low %v327, %v345
        %v379 = vcombine.low %v336, %v346
        %v380 = vcombine.low %v343, %v347
        %vm381 = vcmask 130048
        %v382 = vsel %vm381, %v373, 0
        %v384 = vsel %vm381, %v374, 0
        %v386 = vsel %vm381, %v375, 0
        %v388 = vsel %vm381, %v376, 0
        %v390 = vsel %vm381, %v377, 0
        %v392 = vsel %vm381, %v378, 0
        %v394 = vsel %vm381, %v379, 0
        %v396 = vsel %vm381, %v380, 0
        %398 = vmatprep.subr.mxu0 0.0
        %399 = vmatpush1.msra.mxu0 %v348
        %400 = vmatprep.subr.mxu0 0.0
        %401 = vmatpush1.msra.mxu0 %v349
        %402 = vmatprep.subr.mxu0 0.0
        %403 = vmatpush1.msra.mxu0 0.0
        %404 = vmatprep.subr.mxu0 0.0
        %405 = vmatpush1.msra.mxu0 0.0
        %406 = vmatprep.subr.mxu0 0.0
        %407 = vmatpush1.msra.mxu0 0.0
        %408 = vmatprep.subr.mxu0 0.0
        %409 = vmatpush1.msra.mxu0 0.0
        %410 = vmatprep.subr.mxu0 0.0
        %411 = vmatpush1.msra.mxu0 0.0
        %412 = vmatprep.subr.mxu0 0.0
        %413 = vmatpush1.msra.mxu0 0.0
        %414 = vmatprep.subr.mxu0 0.0
        %415 = vmatpush1.msra.mxu0 0.0
        %416 = vmatprep.subr.mxu0 0.0
        %417 = vmatpush1.msra.mxu0 0.0
        %418 = vmatprep.subr.mxu0 0.0
        %419 = vmatpush1.msra.mxu0 0.0
        %420 = vmatprep.subr.mxu0 0.0
        %421 = vmatpush1.msra.mxu0 0.0
        %422 = vmatprep.subr.mxu0 0.0
        %423 = vmatpush1.msra.mxu0 0.0
        %424 = vmatprep.subr.mxu0 0.0
        %425 = vmatpush1.msra.mxu0 0.0
        %426 = vmatprep.subr.mxu0 0.0
        %427 = vmatpush1.msra.mxu0 0.0
        %428 = vmatprep.subr.mxu0 0.0
        %429 = vmatpush1.msra.mxu0 0.0
        %430 = vmatprep.subr.mxu0 0.0
        %431 = vmatpush1.msra.mxu0 0.0
        %432 = vmatprep.subr.mxu0 0.0
        %433 = vmatpush1.msra.mxu0 0.0
        %434 = vmatprep.subr.mxu0 0.0
        %435 = vmatpush1.msra.mxu0 0.0
        %436 = vmatprep.subr.mxu0 0.0
        %437 = vmatpush1.msra.mxu0 0.0
        %438 = vmatprep.subr.mxu0 0.0
        %439 = vmatpush1.msra.mxu0 0.0
        %440 = vmatprep.subr.mxu0 0.0
        %441 = vmatpush1.msra.mxu0 0.0
        %442 = vmatprep.subr.mxu0 0.0
        %443 = vmatpush1.msra.mxu0 0.0
        %444 = vmatprep.subr.mxu0 0.0
        %445 = vmatpush1.msra.mxu0 0.0
        %446 = vmatprep.subr.mxu0 0.0
        %447 = vmatpush1.msra.mxu0 0.0
        %448 = vmatprep.subr.mxu0 0.0
        %449 = vmatpush1.msra.mxu0 0.0
        %450 = vmatprep.subr.mxu0 0.0
        %451 = vmatpush1.msra.mxu0 0.0
        %452 = vmatprep.subr.mxu0 0.0
        %453 = vmatpush1.msra.mxu0 0.0
        %454 = vmatprep.subr.mxu0 0.0
        %455 = vmatpush1.msra.mxu0 0.0
        %456 = vmatprep.subr.mxu0 0.0
        %457 = vmatpush1.msra.mxu0 0.0
        %458 = vmatprep.subr.mxu0 0.0
        %459 = vmatpush1.msra.mxu0 0.0
        %460 = vmatprep.subr.mxu0 0.0
        %461 = vmatpush1.msra.mxu0 0.0
        %462 = vmatprep.mubr.f32.mxu0 0.0
        %463 = vmatmul.mubr.f32.gmra.mrb[0].mxu0 %v382
        %v464 = vpop.f32.mrb[0].mxu0
        %v465 = vadd.f32 %v355, %v464
        %v466 = vpop.f32.mrb[0].mxu0
        %467 = vmatprep.mubr.f32.mxu0 0.0
        %468 = vmatmul.mubr.f32.gmra.mrb[0].mxu0 %v384
        %v469 = vpop.f32.mrb[0].mxu0
        %v470 = vadd.f32 %v355, %v469
        %v471 = vpop.f32.mrb[0].mxu0
        %472 = vmatprep.mubr.f32.mxu0 0.0
        %473 = vmatmul.mubr.f32.gmra.mrb[0].mxu0 %v386
        %v474 = vpop.f32.mrb[0].mxu0
        %v475 = vadd.f32 %v355, %v474
        %v476 = vpop.f32.mrb[0].mxu0
        %477 = vmatprep.mubr.f32.mxu0 0.0
        %478 = vmatmul.mubr.f32.gmra.mrb[0].mxu0 %v388
        %v479 = vpop.f32.mrb[0].mxu0
        %v480 = vadd.f32 %v355, %v479
        %v481 = vpop.f32.mrb[0].mxu0
        %482 = vmatprep.mubr.f32.mxu0 0.0
        %483 = vmatmul.mubr.f32.gmra.mrb[0].mxu0 %v390
        %v484 = vpop.f32.mrb[0].mxu0
        %v485 = vadd.f32 %v355, %v484
        %v486 = vpop.f32.mrb[0].mxu0
        %487 = vmatprep.mubr.f32.mxu0 0.0
        %488 = vmatmul.mubr.f32.gmra.mrb[0].mxu0 %v392
        %v489 = vpop.f32.mrb[0].mxu0
        %v490 = vadd.f32 %v355, %v489
        %v491 = vpop.f32.mrb[0].mxu0
        %492 = vmatprep.mubr.f32.mxu0 0.0
        %493 = vmatmul.mubr.f32.gmra.mrb[0].mxu0 %v394
        %v494 = vpop.f32.mrb[0].mxu0
        %v495 = vadd.f32 %v355, %v494
        %v496 = vpop.f32.mrb[0].mxu0
        %497 = vmatprep.mubr.f32.mxu0 0.0
        %498 = vmatmul.mubr.f32.gmra.mrb[0].mxu0 %v396
        %v499 = vpop.f32.mrb[0].mxu0
        %v500 = vadd.f32 %v355, %v499
        %v501 = vpop.f32.mrb[0].mxu0
        %502 = vdwg.mxu0
        %v511 = vcombine.high %v465, %v465
        %v512 = vcombine.high %v470, %v470
        %v513 = vcombine.high %v475, %v475
        %v514 = vcombine.high %v480, %v480
        %v515 = vcombine.high %v485, %v485
        %v516 = vcombine.high %v490, %v490
        %v517 = vcombine.high %v495, %v495
        %v518 = vcombine.high %v500, %v500
        %519 = vrot.lane.b32.xlu0 %v465, 96
        %v520 = vpop.permute.xlu0 %519
        %vm521 = vcmask 261120
        %v522 = vsel %vm521, %v465, 0
        %v524 = vsel %vm521, %v520, 0
        %526 = vmatprep.subr.mxu0 0.0
        %527 = vmatpush1.xpose.msra.mxu0 %v524
        %528 = vmatprep.subr.mxu0 0.0
        %529 = vmatpush1.xpose.msra.mxu0 0.0
        %530 = vmatprep.subr.mxu0 0.0
        %531 = vmatpush1.xpose.msra.mxu0 0.0
        %532 = vmatprep.subr.mxu0 0.0
        %533 = vmatpush1.xpose.msra.mxu0 0.0
        %534 = vmatprep.subr.mxu0 0.0
        %535 = vmatpush1.xpose.msra.mxu0 0.0
        %536 = vmatprep.subr.mxu0 0.0
        %537 = vmatpush1.xpose.msra.mxu0 0.0
        %538 = vmatprep.subr.mxu0 0.0
        %539 = vmatpush1.xpose.msra.mxu0 0.0
        %540 = vmatprep.subr.mxu0 0.0
        %541 = vmatpush1.xpose.msra.mxu0 0.0
        %542 = vmatprep.subr.mxu0 0.0
        %543 = vmatpush1.xpose.msra.mxu0 0.0
        %544 = vmatprep.subr.mxu0 0.0
        %545 = vmatpush1.xpose.msra.mxu0 0.0
        %546 = vmatprep.subr.mxu0 0.0
        %547 = vmatpush1.xpose.msra.mxu0 0.0
        %548 = vmatprep.subr.mxu0 0.0
        %549 = vmatpush1.xpose.msra.mxu0 0.0
        %550 = vmatprep.subr.mxu0 0.0
        %551 = vmatpush1.xpose.msra.mxu0 0.0
        %552 = vmatprep.subr.mxu0 0.0
        %553 = vmatpush1.xpose.msra.mxu0 0.0
        %554 = vmatprep.subr.mxu0 0.0
        %555 = vmatpush1.xpose.msra.mxu0 0.0
        %556 = vmatprep.subr.mxu0 0.0
        %557 = vmatpush1.xpose.msra.mxu0 0.0
        %558 = vmatprep.subr.mxu0 0.0
        %559 = vmatpush1.xpose.msra.mxu0 0.0
        %560 = vmatprep.subr.mxu0 0.0
        %561 = vmatpush1.xpose.msra.mxu0 0.0
        %562 = vmatprep.subr.mxu0 0.0
        %563 = vmatpush1.xpose.msra.mxu0 0.0
        %564 = vmatprep.subr.mxu0 0.0
        %565 = vmatpush1.xpose.msra.mxu0 0.0
        %566 = vmatprep.subr.mxu0 0.0
        %567 = vmatpush1.xpose.msra.mxu0 0.0
        %568 = vmatprep.subr.mxu0 0.0
        %569 = vmatpush1.xpose.msra.mxu0 0.0
        %570 = vmatprep.subr.mxu0 0.0
        %571 = vmatpush1.xpose.msra.mxu0 0.0
        %572 = vmatprep.subr.mxu0 0.0
        %573 = vmatpush1.xpose.msra.mxu0 0.0
        %574 = vmatprep.subr.mxu0 0.0
        %575 = vmatpush1.xpose.msra.mxu0 0.0
        %576 = vmatprep.subr.mxu0 0.0
        %577 = vmatpush1.xpose.msra.mxu0 0.0
        %578 = vmatprep.subr.mxu0 0.0
        %579 = vmatpush1.xpose.msra.mxu0 0.0
        %580 = vmatprep.subr.mxu0 0.0
        %581 = vmatpush1.xpose.msra.mxu0 0.0
        %582 = vmatprep.subr.mxu0 0.0
        %583 = vmatpush1.xpose.msra.mxu0 0.0
        %584 = vmatprep.subr.mxu0 0.0
        %585 = vmatpush1.xpose.msra.mxu0 0.0
        %586 = vmatprep.subr.mxu0 0.0
        %587 = vmatpush1.xpose.msra.mxu0 0.0
        %588 = vmatprep.subr.mxu0 0.0
        %589 = vmatpush1.xpose.msra.mxu0 0.0
        %590 = vmatprep.mubr.f32.mxu0 0.0
        %591 = vmatmul.mubr.f32.gmra.mrb[0].mxu0 %v522
        %v592 = vpop.f32.mrb[0].mxu0
        %v593 = vadd.f32 0.0, %v592
        %v594 = vpop.f32.mrb[0].mxu0
        %595 = vdwg.mxu0
        %596 = vrot.lane.b32.xlu0 %v511, 96
        %v597 = vpop.permute.xlu0 %596
        %v598 = vsel %vm521, %v511, 0
        %v600 = vsel %vm521, %v597, 0
        %602 = vmatprep.subr.mxu0 0.0
        %603 = vmatpush1.xpose.msra.mxu0 %v600
        %604 = vmatprep.subr.mxu0 0.0
        %605 = vmatpush1.xpose.msra.mxu0 0.0
        %606 = vmatprep.subr.mxu0 0.0
        %607 = vmatpush1.xpose.msra.mxu0 0.0
        %608 = vmatprep.subr.mxu0 0.0
        %609 = vmatpush1.xpose.msra.mxu0 0.0
        %610 = vmatprep.subr.mxu0 0.0
        %611 = vmatpush1.xpose.msra.mxu0 0.0
        %612 = vmatprep.subr.mxu0 0.0
        %613 = vmatpush1.xpose.msra.mxu0 0.0
        %614 = vmatprep.subr.mxu0 0.0
        %615 = vmatpush1.xpose.msra.mxu0 0.0
        %616 = vmatprep.subr.mxu0 0.0
        %617 = vmatpush1.xpose.msra.mxu0 0.0
        %618 = vmatprep.subr.mxu0 0.0
        %619 = vmatpush1.xpose.msra.mxu0 0.0
        %620 = vmatprep.subr.mxu0 0.0
        %621 = vmatpush1.xpose.msra.mxu0 0.0
        %622 = vmatprep.subr.mxu0 0.0
        %623 = vmatpush1.xpose.msra.mxu0 0.0
        %624 = vmatprep.subr.mxu0 0.0
        %625 = vmatpush1.xpose.msra.mxu0 0.0
        %626 = vmatprep.subr.mxu0 0.0
        %627 = vmatpush1.xpose.msra.mxu0 0.0
        %628 = vmatprep.subr.mxu0 0.0
        %629 = vmatpush1.xpose.msra.mxu0 0.0
        %630 = vmatprep.subr.mxu0 0.0
        %631 = vmatpush1.xpose.msra.mxu0 0.0
        %632 = vmatprep.subr.mxu0 0.0
        %633 = vmatpush1.xpose.msra.mxu0 0.0
        %634 = vmatprep.subr.mxu0 0.0
        %635 = vmatpush1.xpose.msra.mxu0 0.0
        %636 = vmatprep.subr.mxu0 0.0
        %637 = vmatpush1.xpose.msra.mxu0 0.0
        %638 = vmatprep.subr.mxu0 0.0
        %639 = vmatpush1.xpose.msra.mxu0 0.0
        %640 = vmatprep.subr.mxu0 0.0
        %641 = vmatpush1.xpose.msra.mxu0 0.0
        %642 = vmatprep.subr.mxu0 0.0
        %643 = vmatpush1.xpose.msra.mxu0 0.0
        %644 = vmatprep.subr.mxu0 0.0
        %645 = vmatpush1.xpose.msra.mxu0 0.0
        %646 = vmatprep.subr.mxu0 0.0
        %647 = vmatpush1.xpose.msra.mxu0 0.0
        %648 = vmatprep.subr.mxu0 0.0
        %649 = vmatpush1.xpose.msra.mxu0 0.0
        %650 = vmatprep.subr.mxu0 0.0
        %651 = vmatpush1.xpose.msra.mxu0 0.0
        %652 = vmatprep.subr.mxu0 0.0
        %653 = vmatpush1.xpose.msra.mxu0 0.0
        %654 = vmatprep.subr.mxu0 0.0
        %655 = vmatpush1.xpose.msra.mxu0 0.0
        %656 = vmatprep.subr.mxu0 0.0
        %657 = vmatpush1.xpose.msra.mxu0 0.0
        %658 = vmatprep.subr.mxu0 0.0
        %659 = vmatpush1.xpose.msra.mxu0 0.0
        %660 = vmatprep.subr.mxu0 0.0
        %661 = vmatpush1.xpose.msra.mxu0 0.0
        %662 = vmatprep.subr.mxu0 0.0
        %663 = vmatpush1.xpose.msra.mxu0 0.0
        %664 = vmatprep.subr.mxu0 0.0
        %665 = vmatpush1.xpose.msra.mxu0 0.0
        %666 = vmatprep.mubr.f32.mxu0 0.0
        %667 = vmatmul.mubr.f32.gmra.mrb[0].mxu0 %v598
        %v668 = vpop.f32.mrb[0].mxu0
        %v669 = vadd.f32 0.0, %v668
        %v670 = vpop.f32.mrb[0].mxu0
        %671 = vdwg.mxu0
        %672 = vrot.lane.b32.xlu0 %v470, 96
        %v673 = vpop.permute.xlu0 %672
        %v674 = vsel %vm521, %v470, 0
        %v676 = vsel %vm521, %v673, 0
        %678 = vmatprep.subr.mxu0 0.0
        %679 = vmatpush1.xpose.msra.mxu0 %v676
        %680 = vmatprep.subr.mxu0 0.0
        %681 = vmatpush1.xpose.msra.mxu0 0.0
        %682 = vmatprep.subr.mxu0 0.0
        %683 = vmatpush1.xpose.msra.mxu0 0.0
        %684 = vmatprep.subr.mxu0 0.0
        %685 = vmatpush1.xpose.msra.mxu0 0.0
        %686 = vmatprep.subr.mxu0 0.0
        %687 = vmatpush1.xpose.msra.mxu0 0.0
        %688 = vmatprep.subr.mxu0 0.0
        %689 = vmatpush1.xpose.msra.mxu0 0.0
        %690 = vmatprep.subr.mxu0 0.0
        %691 = vmatpush1.xpose.msra.mxu0 0.0
        %692 = vmatprep.subr.mxu0 0.0
        %693 = vmatpush1.xpose.msra.mxu0 0.0
        %694 = vmatprep.subr.mxu0 0.0
        %695 = vmatpush1.xpose.msra.mxu0 0.0
        %696 = vmatprep.subr.mxu0 0.0
        %697 = vmatpush1.xpose.msra.mxu0 0.0
        %698 = vmatprep.subr.mxu0 0.0
        %699 = vmatpush1.xpose.msra.mxu0 0.0
        %700 = vmatprep.subr.mxu0 0.0
        %701 = vmatpush1.xpose.msra.mxu0 0.0
        %702 = vmatprep.subr.mxu0 0.0
        %703 = vmatpush1.xpose.msra.mxu0 0.0
        %704 = vmatprep.subr.mxu0 0.0
        %705 = vmatpush1.xpose.msra.mxu0 0.0
        %706 = vmatprep.subr.mxu0 0.0
        %707 = vmatpush1.xpose.msra.mxu0 0.0
        %708 = vmatprep.subr.mxu0 0.0
        %709 = vmatpush1.xpose.msra.mxu0 0.0
        %710 = vmatprep.subr.mxu0 0.0
        %711 = vmatpush1.xpose.msra.mxu0 0.0
        %712 = vmatprep.subr.mxu0 0.0
        %713 = vmatpush1.xpose.msra.mxu0 0.0
        %714 = vmatprep.subr.mxu0 0.0
        %715 = vmatpush1.xpose.msra.mxu0 0.0
        %716 = vmatprep.subr.mxu0 0.0
        %717 = vmatpush1.xpose.msra.mxu0 0.0
        %718 = vmatprep.subr.mxu0 0.0
        %719 = vmatpush1.xpose.msra.mxu0 0.0
        %720 = vmatprep.subr.mxu0 0.0
        %721 = vmatpush1.xpose.msra.mxu0 0.0
        %722 = vmatprep.subr.mxu0 0.0
        %723 = vmatpush1.xpose.msra.mxu0 0.0
        %724 = vmatprep.subr.mxu0 0.0
        %725 = vmatpush1.xpose.msra.mxu0 0.0
        %726 = vmatprep.subr.mxu0 0.0
        %727 = vmatpush1.xpose.msra.mxu0 0.0
        %728 = vmatprep.subr.mxu0 0.0
        %729 = vmatpush1.xpose.msra.mxu0 0.0
        %730 = vmatprep.subr.mxu0 0.0
        %731 = vmatpush1.xpose.msra.mxu0 0.0
        %732 = vmatprep.subr.mxu0 0.0
        %733 = vmatpush1.xpose.msra.mxu0 0.0
        %734 = vmatprep.subr.mxu0 0.0
        %735 = vmatpush1.xpose.msra.mxu0 0.0
        %736 = vmatprep.subr.mxu0 0.0
        %737 = vmatpush1.xpose.msra.mxu0 0.0
        %738 = vmatprep.subr.mxu0 0.0
        %739 = vmatpush1.xpose.msra.mxu0 0.0
        %740 = vmatprep.subr.mxu0 0.0
        %741 = vmatpush1.xpose.msra.mxu0 0.0
        %742 = vmatprep.mubr.f32.mxu0 0.0
        %743 = vmatmul.mubr.f32.gmra.mrb[0].mxu0 %v674
        %v744 = vpop.f32.mrb[0].mxu0
        %v745 = vadd.f32 0.0, %v744
        %v746 = vpop.f32.mrb[0].mxu0
        %747 = vdwg.mxu0
        %748 = vrot.lane.b32.xlu0 %v512, 96
        %v749 = vpop.permute.xlu0 %748
        %v750 = vsel %vm521, %v512, 0
        %v752 = vsel %vm521, %v749, 0
        %754 = vmatprep.subr.mxu0 0.0
        %755 = vmatpush1.xpose.msra.mxu0 %v752
        %756 = vmatprep.subr.mxu0 0.0
        %757 = vmatpush1.xpose.msra.mxu0 0.0
        %758 = vmatprep.subr.mxu0 0.0
        %759 = vmatpush1.xpose.msra.mxu0 0.0
        %760 = vmatprep.subr.mxu0 0.0
        %761 = vmatpush1.xpose.msra.mxu0 0.0
        %762 = vmatprep.subr.mxu0 0.0
        %763 = vmatpush1.xpose.msra.mxu0 0.0
        %764 = vmatprep.subr.mxu0 0.0
        %765 = vmatpush1.xpose.msra.mxu0 0.0
        %766 = vmatprep.subr.mxu0 0.0
        %767 = vmatpush1.xpose.msra.mxu0 0.0
        %768 = vmatprep.subr.mxu0 0.0
        %769 = vmatpush1.xpose.msra.mxu0 0.0
        %770 = vmatprep.subr.mxu0 0.0
        %771 = vmatpush1.xpose.msra.mxu0 0.0
        %772 = vmatprep.subr.mxu0 0.0
        %773 = vmatpush1.xpose.msra.mxu0 0.0
        %774 = vmatprep.subr.mxu0 0.0
        %775 = vmatpush1.xpose.msra.mxu0 0.0
        %776 = vmatprep.subr.mxu0 0.0
        %777 = vmatpush1.xpose.msra.mxu0 0.0
        %778 = vmatprep.subr.mxu0 0.0
        %779 = vmatpush1.xpose.msra.mxu0 0.0
        %780 = vmatprep.subr.mxu0 0.0
        %781 = vmatpush1.xpose.msra.mxu0 0.0
        %782 = vmatprep.subr.mxu0 0.0
        %783 = vmatpush1.xpose.msra.mxu0 0.0
        %784 = vmatprep.subr.mxu0 0.0
        %785 = vmatpush1.xpose.msra.mxu0 0.0
        %786 = vmatprep.subr.mxu0 0.0
        %787 = vmatpush1.xpose.msra.mxu0 0.0
        %788 = vmatprep.subr.mxu0 0.0
        %789 = vmatpush1.xpose.msra.mxu0 0.0
        %790 = vmatprep.subr.mxu0 0.0
        %791 = vmatpush1.xpose.msra.mxu0 0.0
        %792 = vmatprep.subr.mxu0 0.0
        %793 = vmatpush1.xpose.msra.mxu0 0.0
        %794 = vmatprep.subr.mxu0 0.0
        %795 = vmatpush1.xpose.msra.mxu0 0.0
        %796 = vmatprep.subr.mxu0 0.0
        %797 = vmatpush1.xpose.msra.mxu0 0.0
        %798 = vmatprep.subr.mxu0 0.0
        %799 = vmatpush1.xpose.msra.mxu0 0.0
        %800 = vmatprep.subr.mxu0 0.0
        %801 = vmatpush1.xpose.msra.mxu0 0.0
        %802 = vmatprep.subr.mxu0 0.0
        %803 = vmatpush1.xpose.msra.mxu0 0.0
        %804 = vmatprep.subr.mxu0 0.0
        %805 = vmatpush1.xpose.msra.mxu0 0.0
        %806 = vmatprep.subr.mxu0 0.0
        %807 = vmatpush1.xpose.msra.mxu0 0.0
        %808 = vmatprep.subr.mxu0 0.0
        %809 = vmatpush1.xpose.msra.mxu0 0.0
        %810 = vmatprep.subr.mxu0 0.0
        %811 = vmatpush1.xpose.msra.mxu0 0.0
        %812 = vmatprep.subr.mxu0 0.0
        %813 = vmatpush1.xpose.msra.mxu0 0.0
        %814 = vmatprep.subr.mxu0 0.0
        %815 = vmatpush1.xpose.msra.mxu0 0.0
        %816 = vmatprep.subr.mxu0 0.0
        %817 = vmatpush1.xpose.msra.mxu0 0.0
        %818 = vmatprep.mubr.f32.mxu0 0.0
        %819 = vmatmul.mubr.f32.gmra.mrb[0].mxu0 %v750
        %v820 = vpop.f32.mrb[0].mxu0
        %v821 = vadd.f32 0.0, %v820
        %v822 = vpop.f32.mrb[0].mxu0
        %823 = vdwg.mxu0
        %824 = vrot.lane.b32.xlu0 %v475, 96
        %v825 = vpop.permute.xlu0 %824
        %v826 = vsel %vm521, %v475, 0
        %v828 = vsel %vm521, %v825, 0
        %830 = vmatprep.subr.mxu0 0.0
        %831 = vmatpush1.xpose.msra.mxu0 %v828
        %832 = vmatprep.subr.mxu0 0.0
        %833 = vmatpush1.xpose.msra.mxu0 0.0
        %834 = vmatprep.subr.mxu0 0.0
        %835 = vmatpush1.xpose.msra.mxu0 0.0
        %836 = vmatprep.subr.mxu0 0.0
        %837 = vmatpush1.xpose.msra.mxu0 0.0
        %838 = vmatprep.subr.mxu0 0.0
        %839 = vmatpush1.xpose.msra.mxu0 0.0
        %840 = vmatprep.subr.mxu0 0.0
        %841 = vmatpush1.xpose.msra.mxu0 0.0
        %842 = vmatprep.subr.mxu0 0.0
        %843 = vmatpush1.xpose.msra.mxu0 0.0
        %844 = vmatprep.subr.mxu0 0.0
        %845 = vmatpush1.xpose.msra.mxu0 0.0
        %846 = vmatprep.subr.mxu0 0.0
        %847 = vmatpush1.xpose.msra.mxu0 0.0
        %848 = vmatprep.subr.mxu0 0.0
        %849 = vmatpush1.xpose.msra.mxu0 0.0
        %850 = vmatprep.subr.mxu0 0.0
        %851 = vmatpush1.xpose.msra.mxu0 0.0
        %852 = vmatprep.subr.mxu0 0.0
        %853 = vmatpush1.xpose.msra.mxu0 0.0
        %854 = vmatprep.subr.mxu0 0.0
        %855 = vmatpush1.xpose.msra.mxu0 0.0
        %856 = vmatprep.subr.mxu0 0.0
        %857 = vmatpush1.xpose.msra.mxu0 0.0
        %858 = vmatprep.subr.mxu0 0.0
        %859 = vmatpush1.xpose.msra.mxu0 0.0
        %860 = vmatprep.subr.mxu0 0.0
        %861 = vmatpush1.xpose.msra.mxu0 0.0
        %862 = vmatprep.subr.mxu0 0.0
        %863 = vmatpush1.xpose.msra.mxu0 0.0
        %864 = vmatprep.subr.mxu0 0.0
        %865 = vmatpush1.xpose.msra.mxu0 0.0
        %866 = vmatprep.subr.mxu0 0.0
        %867 = vmatpush1.xpose.msra.mxu0 0.0
        %868 = vmatprep.subr.mxu0 0.0
        %869 = vmatpush1.xpose.msra.mxu0 0.0
        %870 = vmatprep.subr.mxu0 0.0
        %871 = vmatpush1.xpose.msra.mxu0 0.0
        %872 = vmatprep.subr.mxu0 0.0
        %873 = vmatpush1.xpose.msra.mxu0 0.0
        %874 = vmatprep.subr.mxu0 0.0
        %875 = vmatpush1.xpose.msra.mxu0 0.0
        %876 = vmatprep.subr.mxu0 0.0
        %877 = vmatpush1.xpose.msra.mxu0 0.0
        %878 = vmatprep.subr.mxu0 0.0
        %879 = vmatpush1.xpose.msra.mxu0 0.0
        %880 = vmatprep.subr.mxu0 0.0
        %881 = vmatpush1.xpose.msra.mxu0 0.0
        %882 = vmatprep.subr.mxu0 0.0
        %883 = vmatpush1.xpose.msra.mxu0 0.0
        %884 = vmatprep.subr.mxu0 0.0
        %885 = vmatpush1.xpose.msra.mxu0 0.0
        %886 = vmatprep.subr.mxu0 0.0
        %887 = vmatpush1.xpose.msra.mxu0 0.0
        %888 = vmatprep.subr.mxu0 0.0
        %889 = vmatpush1.xpose.msra.mxu0 0.0
        %890 = vmatprep.subr.mxu0 0.0
        %891 = vmatpush1.xpose.msra.mxu0 0.0
        %892 = vmatprep.subr.mxu0 0.0
        %893 = vmatpush1.xpose.msra.mxu0 0.0
        %894 = vmatprep.mubr.f32.mxu0 0.0
        %895 = vmatmul.mubr.f32.gmra.mrb[0].mxu0 %v826
        %v896 = vpop.f32.mrb[0].mxu0
        %v897 = vadd.f32 0.0, %v896
        %v898 = vpop.f32.mrb[0].mxu0
        %899 = vdwg.mxu0
        %900 = vrot.lane.b32.xlu0 %v513, 96
        %v901 = vpop.permute.xlu0 %900
        %v902 = vsel %vm521, %v513, 0
        %v904 = vsel %vm521, %v901, 0
        %906 = vmatprep.subr.mxu0 0.0
        %907 = vmatpush1.xpose.msra.mxu0 %v904
        %908 = vmatprep.subr.mxu0 0.0
        %909 = vmatpush1.xpose.msra.mxu0 0.0
        %910 = vmatprep.subr.mxu0 0.0
        %911 = vmatpush1.xpose.msra.mxu0 0.0
        %912 = vmatprep.subr.mxu0 0.0
        %913 = vmatpush1.xpose.msra.mxu0 0.0
        %914 = vmatprep.subr.mxu0 0.0
        %915 = vmatpush1.xpose.msra.mxu0 0.0
        %916 = vmatprep.subr.mxu0 0.0
        %917 = vmatpush1.xpose.msra.mxu0 0.0
        %918 = vmatprep.subr.mxu0 0.0
        %919 = vmatpush1.xpose.msra.mxu0 0.0
        %920 = vmatprep.subr.mxu0 0.0
        %921 = vmatpush1.xpose.msra.mxu0 0.0
        %922 = vmatprep.subr.mxu0 0.0
        %923 = vmatpush1.xpose.msra.mxu0 0.0
        %924 = vmatprep.subr.mxu0 0.0
        %925 = vmatpush1.xpose.msra.mxu0 0.0
        %926 = vmatprep.subr.mxu0 0.0
        %927 = vmatpush1.xpose.msra.mxu0 0.0
        %928 = vmatprep.subr.mxu0 0.0
        %929 = vmatpush1.xpose.msra.mxu0 0.0
        %930 = vmatprep.subr.mxu0 0.0
        %931 = vmatpush1.xpose.msra.mxu0 0.0
        %932 = vmatprep.subr.mxu0 0.0
        %933 = vmatpush1.xpose.msra.mxu0 0.0
        %934 = vmatprep.subr.mxu0 0.0
        %935 = vmatpush1.xpose.msra.mxu0 0.0
        %936 = vmatprep.subr.mxu0 0.0
        %937 = vmatpush1.xpose.msra.mxu0 0.0
        %938 = vmatprep.subr.mxu0 0.0
        %939 = vmatpush1.xpose.msra.mxu0 0.0
        %940 = vmatprep.subr.mxu0 0.0
        %941 = vmatpush1.xpose.msra.mxu0 0.0
        %942 = vmatprep.subr.mxu0 0.0
        %943 = vmatpush1.xpose.msra.mxu0 0.0
        %944 = vmatprep.subr.mxu0 0.0
        %945 = vmatpush1.xpose.msra.mxu0 0.0
        %946 = vmatprep.subr.mxu0 0.0
        %947 = vmatpush1.xpose.msra.mxu0 0.0
        %948 = vmatprep.subr.mxu0 0.0
        %949 = vmatpush1.xpose.msra.mxu0 0.0
        %950 = vmatprep.subr.mxu0 0.0
        %951 = vmatpush1.xpose.msra.mxu0 0.0
        %952 = vmatprep.subr.mxu0 0.0
        %953 = vmatpush1.xpose.msra.mxu0 0.0
        %954 = vmatprep.subr.mxu0 0.0
        %955 = vmatpush1.xpose.msra.mxu0 0.0
        %956 = vmatprep.subr.mxu0 0.0
        %957 = vmatpush1.xpose.msra.mxu0 0.0
        %958 = vmatprep.subr.mxu0 0.0
        %959 = vmatpush1.xpose.msra.mxu0 0.0
        %960 = vmatprep.subr.mxu0 0.0
        %961 = vmatpush1.xpose.msra.mxu0 0.0
        %962 = vmatprep.subr.mxu0 0.0
        %963 = vmatpush1.xpose.msra.mxu0 0.0
        %964 = vmatprep.subr.mxu0 0.0
        %965 = vmatpush1.xpose.msra.mxu0 0.0
        %966 = vmatprep.subr.mxu0 0.0
        %967 = vmatpush1.xpose.msra.mxu0 0.0
        %968 = vmatprep.subr.mxu0 0.0
        %969 = vmatpush1.xpose.msra.mxu0 0.0
        %970 = vmatprep.mubr.f32.mxu0 0.0
        %971 = vmatmul.mubr.f32.gmra.mrb[0].mxu0 %v902
        %v972 = vpop.f32.mrb[0].mxu0
        %v973 = vadd.f32 0.0, %v972
        %v974 = vpop.f32.mrb[0].mxu0
        %975 = vdwg.mxu0
        %976 = vrot.lane.b32.xlu0 %v480, 96
        %v977 = vpop.permute.xlu0 %976
        %v978 = vsel %vm521, %v480, 0
        %v980 = vsel %vm521, %v977, 0
        %982 = vmatprep.subr.mxu0 0.0
        %983 = vmatpush1.xpose.msra.mxu0 %v980
        %984 = vmatprep.subr.mxu0 0.0
        %985 = vmatpush1.xpose.msra.mxu0 0.0
        %986 = vmatprep.subr.mxu0 0.0
        %987 = vmatpush1.xpose.msra.mxu0 0.0
        %988 = vmatprep.subr.mxu0 0.0
        %989 = vmatpush1.xpose.msra.mxu0 0.0
        %990 = vmatprep.subr.mxu0 0.0
        %991 = vmatpush1.xpose.msra.mxu0 0.0
        %992 = vmatprep.subr.mxu0 0.0
        %993 = vmatpush1.xpose.msra.mxu0 0.0
        %994 = vmatprep.subr.mxu0 0.0
        %995 = vmatpush1.xpose.msra.mxu0 0.0
        %996 = vmatprep.subr.mxu0 0.0
        %997 = vmatpush1.xpose.msra.mxu0 0.0
        %998 = vmatprep.subr.mxu0 0.0
        %999 = vmatpush1.xpose.msra.mxu0 0.0
        %1000 = vmatprep.subr.mxu0 0.0
        %1001 = vmatpush1.xpose.msra.mxu0 0.0
        %1002 = vmatprep.subr.mxu0 0.0
        %1003 = vmatpush1.xpose.msra.mxu0 0.0
        %1004 = vmatprep.subr.mxu0 0.0
        %1005 = vmatpush1.xpose.msra.mxu0 0.0
        %1006 = vmatprep.subr.mxu0 0.0
        %1007 = vmatpush1.xpose.msra.mxu0 0.0
        %1008 = vmatprep.subr.mxu0 0.0
        %1009 = vmatpush1.xpose.msra.mxu0 0.0
        %1010 = vmatprep.subr.mxu0 0.0
        %1011 = vmatpush1.xpose.msra.mxu0 0.0
        %1012 = vmatprep.subr.mxu0 0.0
        %1013 = vmatpush1.xpose.msra.mxu0 0.0
        %1014 = vmatprep.subr.mxu0 0.0
        %1015 = vmatpush1.xpose.msra.mxu0 0.0
        %1016 = vmatprep.subr.mxu0 0.0
        %1017 = vmatpush1.xpose.msra.mxu0 0.0
        %1018 = vmatprep.subr.mxu0 0.0
        %1019 = vmatpush1.xpose.msra.mxu0 0.0
        %1020 = vmatprep.subr.mxu0 0.0
        %1021 = vmatpush1.xpose.msra.mxu0 0.0
        %1022 = vmatprep.subr.mxu0 0.0
        %1023 = vmatpush1.xpose.msra.mxu0 0.0
        %1024 = vmatprep.subr.mxu0 0.0
        %1025 = vmatpush1.xpose.msra.mxu0 0.0
        %1026 = vmatprep.subr.mxu0 0.0
        %1027 = vmatpush1.xpose.msra.mxu0 0.0
        %1028 = vmatprep.subr.mxu0 0.0
        %1029 = vmatpush1.xpose.msra.mxu0 0.0
        %1030 = vmatprep.subr.mxu0 0.0
        %1031 = vmatpush1.xpose.msra.mxu0 0.0
        %1032 = vmatprep.subr.mxu0 0.0
        %1033 = vmatpush1.xpose.msra.mxu0 0.0
        %1034 = vmatprep.subr.mxu0 0.0
        %1035 = vmatpush1.xpose.msra.mxu0 0.0
        %1036 = vmatprep.subr.mxu0 0.0
        %1037 = vmatpush1.xpose.msra.mxu0 0.0
        %1038 = vmatprep.subr.mxu0 0.0
        %1039 = vmatpush1.xpose.msra.mxu0 0.0
        %1040 = vmatprep.subr.mxu0 0.0
        %1041 = vmatpush1.xpose.msra.mxu0 0.0
        %1042 = vmatprep.subr.mxu0 0.0
        %1043 = vmatpush1.xpose.msra.mxu0 0.0
        %1044 = vmatprep.subr.mxu0 0.0
        %1045 = vmatpush1.xpose.msra.mxu0 0.0
        %1046 = vmatprep.mubr.f32.mxu0 0.0
        %1047 = vmatmul.mubr.f32.gmra.mrb[0].mxu0 %v978
        %v1048 = vpop.f32.mrb[0].mxu0
        %v1049 = vadd.f32 0.0, %v1048
        %v1050 = vpop.f32.mrb[0].mxu0
        %1051 = vdwg.mxu0
        %1052 = vrot.lane.b32.xlu0 %v514, 96
        %v1053 = vpop.permute.xlu0 %1052
        %v1054 = vsel %vm521, %v514, 0
        %v1056 = vsel %vm521, %v1053, 0
        %1058 = vmatprep.subr.mxu0 0.0
        %1059 = vmatpush1.xpose.msra.mxu0 %v1056
        %1060 = vmatprep.subr.mxu0 0.0
        %1061 = vmatpush1.xpose.msra.mxu0 0.0
        %1062 = vmatprep.subr.mxu0 0.0
        %1063 = vmatpush1.xpose.msra.mxu0 0.0
        %1064 = vmatprep.subr.mxu0 0.0
        %1065 = vmatpush1.xpose.msra.mxu0 0.0
        %1066 = vmatprep.subr.mxu0 0.0
        %1067 = vmatpush1.xpose.msra.mxu0 0.0
        %1068 = vmatprep.subr.mxu0 0.0
        %1069 = vmatpush1.xpose.msra.mxu0 0.0
        %1070 = vmatprep.subr.mxu0 0.0
        %1071 = vmatpush1.xpose.msra.mxu0 0.0
        %1072 = vmatprep.subr.mxu0 0.0
        %1073 = vmatpush1.xpose.msra.mxu0 0.0
        %1074 = vmatprep.subr.mxu0 0.0
        %1075 = vmatpush1.xpose.msra.mxu0 0.0
        %1076 = vmatprep.subr.mxu0 0.0
        %1077 = vmatpush1.xpose.msra.mxu0 0.0
        %1078 = vmatprep.subr.mxu0 0.0
        %1079 = vmatpush1.xpose.msra.mxu0 0.0
        %1080 = vmatprep.subr.mxu0 0.0
        %1081 = vmatpush1.xpose.msra.mxu0 0.0
        %1082 = vmatprep.subr.mxu0 0.0
        %1083 = vmatpush1.xpose.msra.mxu0 0.0
        %1084 = vmatprep.subr.mxu0 0.0
        %1085 = vmatpush1.xpose.msra.mxu0 0.0
        %1086 = vmatprep.subr.mxu0 0.0
        %1087 = vmatpush1.xpose.msra.mxu0 0.0
        %1088 = vmatprep.subr.mxu0 0.0
        %1089 = vmatpush1.xpose.msra.mxu0 0.0
        %1090 = vmatprep.subr.mxu0 0.0
        %1091 = vmatpush1.xpose.msra.mxu0 0.0
        %1092 = vmatprep.subr.mxu0 0.0
        %1093 = vmatpush1.xpose.msra.mxu0 0.0
        %1094 = vmatprep.subr.mxu0 0.0
        %1095 = vmatpush1.xpose.msra.mxu0 0.0
        %1096 = vmatprep.subr.mxu0 0.0
        %1097 = vmatpush1.xpose.msra.mxu0 0.0
        %1098 = vmatprep.subr.mxu0 0.0
        %1099 = vmatpush1.xpose.msra.mxu0 0.0
        %1100 = vmatprep.subr.mxu0 0.0
        %1101 = vmatpush1.xpose.msra.mxu0 0.0
        %1102 = vmatprep.subr.mxu0 0.0
        %1103 = vmatpush1.xpose.msra.mxu0 0.0
        %1104 = vmatprep.subr.mxu0 0.0
        %1105 = vmatpush1.xpose.msra.mxu0 0.0
        %1106 = vmatprep.subr.mxu0 0.0
        %1107 = vmatpush1.xpose.msra.mxu0 0.0
        %1108 = vmatprep.subr.mxu0 0.0
        %1109 = vmatpush1.xpose.msra.mxu0 0.0
        %1110 = vmatprep.subr.mxu0 0.0
        %1111 = vmatpush1.xpose.msra.mxu0 0.0
        %1112 = vmatprep.subr.mxu0 0.0
        %1113 = vmatpush1.xpose.msra.mxu0 0.0
        %1114 = vmatprep.subr.mxu0 0.0
        %1115 = vmatpush1.xpose.msra.mxu0 0.0
        %1116 = vmatprep.subr.mxu0 0.0
        %1117 = vmatpush1.xpose.msra.mxu0 0.0
        %1118 = vmatprep.subr.mxu0 0.0
        %1119 = vmatpush1.xpose.msra.mxu0 0.0
        %1120 = vmatprep.subr.mxu0 0.0
        %1121 = vmatpush1.xpose.msra.mxu0 0.0
        %1122 = vmatprep.mubr.f32.mxu0 0.0
        %1123 = vmatmul.mubr.f32.gmra.mrb[0].mxu0 %v1054
        %v1124 = vpop.f32.mrb[0].mxu0
        %v1125 = vadd.f32 0.0, %v1124
        %v1126 = vpop.f32.mrb[0].mxu0
        %1127 = vdwg.mxu0
        %1128 = vrot.lane.b32.xlu0 %v485, 96
        %v1129 = vpop.permute.xlu0 %1128
        %v1130 = vsel %vm521, %v485, 0
        %v1132 = vsel %vm521, %v1129, 0
        %1134 = vmatprep.subr.mxu0 0.0
        %1135 = vmatpush1.xpose.msra.mxu0 %v1132
        %1136 = vmatprep.subr.mxu0 0.0
        %1137 = vmatpush1.xpose.msra.mxu0 0.0
        %1138 = vmatprep.subr.mxu0 0.0
        %1139 = vmatpush1.xpose.msra.mxu0 0.0
        %1140 = vmatprep.subr.mxu0 0.0
        %1141 = vmatpush1.xpose.msra.mxu0 0.0
        %1142 = vmatprep.subr.mxu0 0.0
        %1143 = vmatpush1.xpose.msra.mxu0 0.0
        %1144 = vmatprep.subr.mxu0 0.0
        %1145 = vmatpush1.xpose.msra.mxu0 0.0
        %1146 = vmatprep.subr.mxu0 0.0
        %1147 = vmatpush1.xpose.msra.mxu0 0.0
        %1148 = vmatprep.subr.mxu0 0.0
        %1149 = vmatpush1.xpose.msra.mxu0 0.0
        %1150 = vmatprep.subr.mxu0 0.0
        %1151 = vmatpush1.xpose.msra.mxu0 0.0
        %1152 = vmatprep.subr.mxu0 0.0
        %1153 = vmatpush1.xpose.msra.mxu0 0.0
        %1154 = vmatprep.subr.mxu0 0.0
        %1155 = vmatpush1.xpose.msra.mxu0 0.0
        %1156 = vmatprep.subr.mxu0 0.0
        %1157 = vmatpush1.xpose.msra.mxu0 0.0
        %1158 = vmatprep.subr.mxu0 0.0
        %1159 = vmatpush1.xpose.msra.mxu0 0.0
        %1160 = vmatprep.subr.mxu0 0.0
        %1161 = vmatpush1.xpose.msra.mxu0 0.0
        %1162 = vmatprep.subr.mxu0 0.0
        %1163 = vmatpush1.xpose.msra.mxu0 0.0
        %1164 = vmatprep.subr.mxu0 0.0
        %1165 = vmatpush1.xpose.msra.mxu0 0.0
        %1166 = vmatprep.subr.mxu0 0.0
        %1167 = vmatpush1.xpose.msra.mxu0 0.0
        %1168 = vmatprep.subr.mxu0 0.0
        %1169 = vmatpush1.xpose.msra.mxu0 0.0
        %1170 = vmatprep.subr.mxu0 0.0
        %1171 = vmatpush1.xpose.msra.mxu0 0.0
        %1172 = vmatprep.subr.mxu0 0.0
        %1173 = vmatpush1.xpose.msra.mxu0 0.0
        %1174 = vmatprep.subr.mxu0 0.0
        %1175 = vmatpush1.xpose.msra.mxu0 0.0
        %1176 = vmatprep.subr.mxu0 0.0
        %1177 = vmatpush1.xpose.msra.mxu0 0.0
        %1178 = vmatprep.subr.mxu0 0.0
        %1179 = vmatpush1.xpose.msra.mxu0 0.0
        %1180 = vmatprep.subr.mxu0 0.0
        %1181 = vmatpush1.xpose.msra.mxu0 0.0
        %1182 = vmatprep.subr.mxu0 0.0
        %1183 = vmatpush1.xpose.msra.mxu0 0.0
        %1184 = vmatprep.subr.mxu0 0.0
        %1185 = vmatpush1.xpose.msra.mxu0 0.0
        %1186 = vmatprep.subr.mxu0 0.0
        %1187 = vmatpush1.xpose.msra.mxu0 0.0
        %1188 = vmatprep.subr.mxu0 0.0
        %1189 = vmatpush1.xpose.msra.mxu0 0.0
        %1190 = vmatprep.subr.mxu0 0.0
        %1191 = vmatpush1.xpose.msra.mxu0 0.0
        %1192 = vmatprep.subr.mxu0 0.0
        %1193 = vmatpush1.xpose.msra.mxu0 0.0
        %1194 = vmatprep.subr.mxu0 0.0
        %1195 = vmatpush1.xpose.msra.mxu0 0.0
        %1196 = vmatprep.subr.mxu0 0.0
        %1197 = vmatpush1.xpose.msra.mxu0 0.0
        %1198 = vmatprep.mubr.f32.mxu0 0.0
        %1199 = vmatmul.mubr.f32.gmra.mrb[0].mxu0 %v1130
        %v1200 = vpop.f32.mrb[0].mxu0
        %v1201 = vadd.f32 0.0, %v1200
        %v1202 = vpop.f32.mrb[0].mxu0
        %1203 = vdwg.mxu0
        %1204 = vrot.lane.b32.xlu0 %v515, 96
        %v1205 = vpop.permute.xlu0 %1204
        %v1206 = vsel %vm521, %v515, 0
        %v1208 = vsel %vm521, %v1205, 0
        %1210 = vmatprep.subr.mxu0 0.0
        %1211 = vmatpush1.xpose.msra.mxu0 %v1208
        %1212 = vmatprep.subr.mxu0 0.0
        %1213 = vmatpush1.xpose.msra.mxu0 0.0
        %1214 = vmatprep.subr.mxu0 0.0
        %1215 = vmatpush1.xpose.msra.mxu0 0.0
        %1216 = vmatprep.subr.mxu0 0.0
        %1217 = vmatpush1.xpose.msra.mxu0 0.0
        %1218 = vmatprep.subr.mxu0 0.0
        %1219 = vmatpush1.xpose.msra.mxu0 0.0
        %1220 = vmatprep.subr.mxu0 0.0
        %1221 = vmatpush1.xpose.msra.mxu0 0.0
        %1222 = vmatprep.subr.mxu0 0.0
        %1223 = vmatpush1.xpose.msra.mxu0 0.0
        %1224 = vmatprep.subr.mxu0 0.0
        %1225 = vmatpush1.xpose.msra.mxu0 0.0
        %1226 = vmatprep.subr.mxu0 0.0
        %1227 = vmatpush1.xpose.msra.mxu0 0.0
        %1228 = vmatprep.subr.mxu0 0.0
        %1229 = vmatpush1.xpose.msra.mxu0 0.0
        %1230 = vmatprep.subr.mxu0 0.0
        %1231 = vmatpush1.xpose.msra.mxu0 0.0
        %1232 = vmatprep.subr.mxu0 0.0
        %1233 = vmatpush1.xpose.msra.mxu0 0.0
        %1234 = vmatprep.subr.mxu0 0.0
        %1235 = vmatpush1.xpose.msra.mxu0 0.0
        %1236 = vmatprep.subr.mxu0 0.0
        %1237 = vmatpush1.xpose.msra.mxu0 0.0
        %1238 = vmatprep.subr.mxu0 0.0
        %1239 = vmatpush1.xpose.msra.mxu0 0.0
        %1240 = vmatprep.subr.mxu0 0.0
        %1241 = vmatpush1.xpose.msra.mxu0 0.0
        %1242 = vmatprep.subr.mxu0 0.0
        %1243 = vmatpush1.xpose.msra.mxu0 0.0
        %1244 = vmatprep.subr.mxu0 0.0
        %1245 = vmatpush1.xpose.msra.mxu0 0.0
        %1246 = vmatprep.subr.mxu0 0.0
        %1247 = vmatpush1.xpose.msra.mxu0 0.0
        %1248 = vmatprep.subr.mxu0 0.0
        %1249 = vmatpush1.xpose.msra.mxu0 0.0
        %1250 = vmatprep.subr.mxu0 0.0
        %1251 = vmatpush1.xpose.msra.mxu0 0.0
        %1252 = vmatprep.subr.mxu0 0.0
        %1253 = vmatpush1.xpose.msra.mxu0 0.0
        %1254 = vmatprep.subr.mxu0 0.0
        %1255 = vmatpush1.xpose.msra.mxu0 0.0
        %1256 = vmatprep.subr.mxu0 0.0
        %1257 = vmatpush1.xpose.msra.mxu0 0.0
        %1258 = vmatprep.subr.mxu0 0.0
        %1259 = vmatpush1.xpose.msra.mxu0 0.0
        %1260 = vmatprep.subr.mxu0 0.0
        %1261 = vmatpush1.xpose.msra.mxu0 0.0
        %1262 = vmatprep.subr.mxu0 0.0
        %1263 = vmatpush1.xpose.msra.mxu0 0.0
        %1264 = vmatprep.subr.mxu0 0.0
        %1265 = vmatpush1.xpose.msra.mxu0 0.0
        %1266 = vmatprep.subr.mxu0 0.0
        %1267 = vmatpush1.xpose.msra.mxu0 0.0
        %1268 = vmatprep.subr.mxu0 0.0
        %1269 = vmatpush1.xpose.msra.mxu0 0.0
        %1270 = vmatprep.subr.mxu0 0.0
        %1271 = vmatpush1.xpose.msra.mxu0 0.0
        %1272 = vmatprep.subr.mxu0 0.0
        %1273 = vmatpush1.xpose.msra.mxu0 0.0
        %1274 = vmatprep.mubr.f32.mxu0 0.0
        %1275 = vmatmul.mubr.f32.gmra.mrb[0].mxu0 %v1206
        %v1276 = vpop.f32.mrb[0].mxu0
        %v1277 = vadd.f32 0.0, %v1276
        %v1278 = vpop.f32.mrb[0].mxu0
        %1279 = vdwg.mxu0
        %1280 = vrot.lane.b32.xlu0 %v490, 96
        %v1281 = vpop.permute.xlu0 %1280
        %v1282 = vsel %vm521, %v490, 0
        %v1284 = vsel %vm521, %v1281, 0
        %1286 = vmatprep.subr.mxu0 0.0
        %1287 = vmatpush1.xpose.msra.mxu0 %v1284
        %1288 = vmatprep.subr.mxu0 0.0
        %1289 = vmatpush1.xpose.msra.mxu0 0.0
        %1290 = vmatprep.subr.mxu0 0.0
        %1291 = vmatpush1.xpose.msra.mxu0 0.0
        %1292 = vmatprep.subr.mxu0 0.0
        %1293 = vmatpush1.xpose.msra.mxu0 0.0
        %1294 = vmatprep.subr.mxu0 0.0
        %1295 = vmatpush1.xpose.msra.mxu0 0.0
        %1296 = vmatprep.subr.mxu0 0.0
        %1297 = vmatpush1.xpose.msra.mxu0 0.0
        %1298 = vmatprep.subr.mxu0 0.0
        %1299 = vmatpush1.xpose.msra.mxu0 0.0
        %1300 = vmatprep.subr.mxu0 0.0
        %1301 = vmatpush1.xpose.msra.mxu0 0.0
        %1302 = vmatprep.subr.mxu0 0.0
        %1303 = vmatpush1.xpose.msra.mxu0 0.0
        %1304 = vmatprep.subr.mxu0 0.0
        %1305 = vmatpush1.xpose.msra.mxu0 0.0
        %1306 = vmatprep.subr.mxu0 0.0
        %1307 = vmatpush1.xpose.msra.mxu0 0.0
        %1308 = vmatprep.subr.mxu0 0.0
        %1309 = vmatpush1.xpose.msra.mxu0 0.0
        %1310 = vmatprep.subr.mxu0 0.0
        %1311 = vmatpush1.xpose.msra.mxu0 0.0
        %1312 = vmatprep.subr.mxu0 0.0
        %1313 = vmatpush1.xpose.msra.mxu0 0.0
        %1314 = vmatprep.subr.mxu0 0.0
        %1315 = vmatpush1.xpose.msra.mxu0 0.0
        %1316 = vmatprep.subr.mxu0 0.0
        %1317 = vmatpush1.xpose.msra.mxu0 0.0
        %1318 = vmatprep.subr.mxu0 0.0
        %1319 = vmatpush1.xpose.msra.mxu0 0.0
        %1320 = vmatprep.subr.mxu0 0.0
        %1321 = vmatpush1.xpose.msra.mxu0 0.0
        %1322 = vmatprep.subr.mxu0 0.0
        %1323 = vmatpush1.xpose.msra.mxu0 0.0
        %1324 = vmatprep.subr.mxu0 0.0
        %1325 = vmatpush1.xpose.msra.mxu0 0.0
        %1326 = vmatprep.subr.mxu0 0.0
        %1327 = vmatpush1.xpose.msra.mxu0 0.0
        %1328 = vmatprep.subr.mxu0 0.0
        %1329 = vmatpush1.xpose.msra.mxu0 0.0
        %1330 = vmatprep.subr.mxu0 0.0
        %1331 = vmatpush1.xpose.msra.mxu0 0.0
        %1332 = vmatprep.subr.mxu0 0.0
        %1333 = vmatpush1.xpose.msra.mxu0 0.0
        %1334 = vmatprep.subr.mxu0 0.0
        %1335 = vmatpush1.xpose.msra.mxu0 0.0
        %1336 = vmatprep.subr.mxu0 0.0
        %1337 = vmatpush1.xpose.msra.mxu0 0.0
        %1338 = vmatprep.subr.mxu0 0.0
        %1339 = vmatpush1.xpose.msra.mxu0 0.0
        %1340 = vmatprep.subr.mxu0 0.0
        %1341 = vmatpush1.xpose.msra.mxu0 0.0
        %1342 = vmatprep.subr.mxu0 0.0
        %1343 = vmatpush1.xpose.msra.mxu0 0.0
        %1344 = vmatprep.subr.mxu0 0.0
        %1345 = vmatpush1.xpose.msra.mxu0 0.0
        %1346 = vmatprep.subr.mxu0 0.0
        %1347 = vmatpush1.xpose.msra.mxu0 0.0
        %1348 = vmatprep.subr.mxu0 0.0
        %1349 = vmatpush1.xpose.msra.mxu0 0.0
        %1350 = vmatprep.mubr.f32.mxu0 0.0
        %1351 = vmatmul.mubr.f32.gmra.mrb[0].mxu0 %v1282
        %v1352 = vpop.f32.mrb[0].mxu0
        %v1353 = vadd.f32 0.0, %v1352
        %v1354 = vpop.f32.mrb[0].mxu0
        %1355 = vdwg.mxu0
        %1356 = vrot.lane.b32.xlu0 %v516, 96
        %v1357 = vpop.permute.xlu0 %1356
        %v1358 = vsel %vm521, %v516, 0
        %v1360 = vsel %vm521, %v1357, 0
        %1362 = vmatprep.subr.mxu0 0.0
        %1363 = vmatpush1.xpose.msra.mxu0 %v1360
        %1364 = vmatprep.subr.mxu0 0.0
        %1365 = vmatpush1.xpose.msra.mxu0 0.0
        %1366 = vmatprep.subr.mxu0 0.0
        %1367 = vmatpush1.xpose.msra.mxu0 0.0
        %1368 = vmatprep.subr.mxu0 0.0
        %1369 = vmatpush1.xpose.msra.mxu0 0.0
        %1370 = vmatprep.subr.mxu0 0.0
        %1371 = vmatpush1.xpose.msra.mxu0 0.0
        %1372 = vmatprep.subr.mxu0 0.0
        %1373 = vmatpush1.xpose.msra.mxu0 0.0
        %1374 = vmatprep.subr.mxu0 0.0
        %1375 = vmatpush1.xpose.msra.mxu0 0.0
        %1376 = vmatprep.subr.mxu0 0.0
        %1377 = vmatpush1.xpose.msra.mxu0 0.0
        %1378 = vmatprep.subr.mxu0 0.0
        %1379 = vmatpush1.xpose.msra.mxu0 0.0
        %1380 = vmatprep.subr.mxu0 0.0
        %1381 = vmatpush1.xpose.msra.mxu0 0.0
        %1382 = vmatprep.subr.mxu0 0.0
        %1383 = vmatpush1.xpose.msra.mxu0 0.0
        %1384 = vmatprep.subr.mxu0 0.0
        %1385 = vmatpush1.xpose.msra.mxu0 0.0
        %1386 = vmatprep.subr.mxu0 0.0
        %1387 = vmatpush1.xpose.msra.mxu0 0.0
        %1388 = vmatprep.subr.mxu0 0.0
        %1389 = vmatpush1.xpose.msra.mxu0 0.0
        %1390 = vmatprep.subr.mxu0 0.0
        %1391 = vmatpush1.xpose.msra.mxu0 0.0
        %1392 = vmatprep.subr.mxu0 0.0
        %1393 = vmatpush1.xpose.msra.mxu0 0.0
        %1394 = vmatprep.subr.mxu0 0.0
        %1395 = vmatpush1.xpose.msra.mxu0 0.0
        %1396 = vmatprep.subr.mxu0 0.0
        %1397 = vmatpush1.xpose.msra.mxu0 0.0
        %1398 = vmatprep.subr.mxu0 0.0
        %1399 = vmatpush1.xpose.msra.mxu0 0.0
        %1400 = vmatprep.subr.mxu0 0.0
        %1401 = vmatpush1.xpose.msra.mxu0 0.0
        %1402 = vmatprep.subr.mxu0 0.0
        %1403 = vmatpush1.xpose.msra.mxu0 0.0
        %1404 = vmatprep.subr.mxu0 0.0
        %1405 = vmatpush1.xpose.msra.mxu0 0.0
        %1406 = vmatprep.subr.mxu0 0.0
        %1407 = vmatpush1.xpose.msra.mxu0 0.0
        %1408 = vmatprep.subr.mxu0 0.0
        %1409 = vmatpush1.xpose.msra.mxu0 0.0
        %1410 = vmatprep.subr.mxu0 0.0
        %1411 = vmatpush1.xpose.msra.mxu0 0.0
        %1412 = vmatprep.subr.mxu0 0.0
        %1413 = vmatpush1.xpose.msra.mxu0 0.0
        %1414 = vmatprep.subr.mxu0 0.0
        %1415 = vmatpush1.xpose.msra.mxu0 0.0
        %1416 = vmatprep.subr.mxu0 0.0
        %1417 = vmatpush1.xpose.msra.mxu0 0.0
        %1418 = vmatprep.subr.mxu0 0.0
        %1419 = vmatpush1.xpose.msra.mxu0 0.0
        %1420 = vmatprep.subr.mxu0 0.0
        %1421 = vmatpush1.xpose.msra.mxu0 0.0
        %1422 = vmatprep.subr.mxu0 0.0
        %1423 = vmatpush1.xpose.msra.mxu0 0.0
        %1424 = vmatprep.subr.mxu0 0.0
        %1425 = vmatpush1.xpose.msra.mxu0 0.0
        %1426 = vmatprep.mubr.f32.mxu0 0.0
        %1427 = vmatmul.mubr.f32.gmra.mrb[0].mxu0 %v1358
        %v1428 = vpop.f32.mrb[0].mxu0
        %v1429 = vadd.f32 0.0, %v1428
        %v1430 = vpop.f32.mrb[0].mxu0
        %1431 = vdwg.mxu0
        %1432 = vrot.lane.b32.xlu0 %v495, 96
        %v1433 = vpop.permute.xlu0 %1432
        %v1434 = vsel %vm521, %v495, 0
        %v1436 = vsel %vm521, %v1433, 0
        %1438 = vmatprep.subr.mxu0 0.0
        %1439 = vmatpush1.xpose.msra.mxu0 %v1436
        %1440 = vmatprep.subr.mxu0 0.0
        %1441 = vmatpush1.xpose.msra.mxu0 0.0
        %1442 = vmatprep.subr.mxu0 0.0
        %1443 = vmatpush1.xpose.msra.mxu0 0.0
        %1444 = vmatprep.subr.mxu0 0.0
        %1445 = vmatpush1.xpose.msra.mxu0 0.0
        %1446 = vmatprep.subr.mxu0 0.0
        %1447 = vmatpush1.xpose.msra.mxu0 0.0
        %1448 = vmatprep.subr.mxu0 0.0
        %1449 = vmatpush1.xpose.msra.mxu0 0.0
        %1450 = vmatprep.subr.mxu0 0.0
        %1451 = vmatpush1.xpose.msra.mxu0 0.0
        %1452 = vmatprep.subr.mxu0 0.0
        %1453 = vmatpush1.xpose.msra.mxu0 0.0
        %1454 = vmatprep.subr.mxu0 0.0
        %1455 = vmatpush1.xpose.msra.mxu0 0.0
        %1456 = vmatprep.subr.mxu0 0.0
        %1457 = vmatpush1.xpose.msra.mxu0 0.0
        %1458 = vmatprep.subr.mxu0 0.0
        %1459 = vmatpush1.xpose.msra.mxu0 0.0
        %1460 = vmatprep.subr.mxu0 0.0
        %1461 = vmatpush1.xpose.msra.mxu0 0.0
        %1462 = vmatprep.subr.mxu0 0.0
        %1463 = vmatpush1.xpose.msra.mxu0 0.0
        %1464 = vmatprep.subr.mxu0 0.0
        %1465 = vmatpush1.xpose.msra.mxu0 0.0
        %1466 = vmatprep.subr.mxu0 0.0
        %1467 = vmatpush1.xpose.msra.mxu0 0.0
        %1468 = vmatprep.subr.mxu0 0.0
        %1469 = vmatpush1.xpose.msra.mxu0 0.0
        %1470 = vmatprep.subr.mxu0 0.0
        %1471 = vmatpush1.xpose.msra.mxu0 0.0
        %1472 = vmatprep.subr.mxu0 0.0
        %1473 = vmatpush1.xpose.msra.mxu0 0.0
        %1474 = vmatprep.subr.mxu0 0.0
        %1475 = vmatpush1.xpose.msra.mxu0 0.0
        %1476 = vmatprep.subr.mxu0 0.0
        %1477 = vmatpush1.xpose.msra.mxu0 0.0
        %1478 = vmatprep.subr.mxu0 0.0
        %1479 = vmatpush1.xpose.msra.mxu0 0.0
        %1480 = vmatprep.subr.mxu0 0.0
        %1481 = vmatpush1.xpose.msra.mxu0 0.0
        %1482 = vmatprep.subr.mxu0 0.0
        %1483 = vmatpush1.xpose.msra.mxu0 0.0
        %1484 = vmatprep.subr.mxu0 0.0
        %1485 = vmatpush1.xpose.msra.mxu0 0.0
        %1486 = vmatprep.subr.mxu0 0.0
        %1487 = vmatpush1.xpose.msra.mxu0 0.0
        %1488 = vmatprep.subr.mxu0 0.0
        %1489 = vmatpush1.xpose.msra.mxu0 0.0
        %1490 = vmatprep.subr.mxu0 0.0
        %1491 = vmatpush1.xpose.msra.mxu0 0.0
        %1492 = vmatprep.subr.mxu0 0.0
        %1493 = vmatpush1.xpose.msra.mxu0 0.0
        %1494 = vmatprep.subr.mxu0 0.0
        %1495 = vmatpush1.xpose.msra.mxu0 0.0
        %1496 = vmatprep.subr.mxu0 0.0
        %1497 = vmatpush1.xpose.msra.mxu0 0.0
        %1498 = vmatprep.subr.mxu0 0.0
        %1499 = vmatpush1.xpose.msra.mxu0 0.0
        %1500 = vmatprep.subr.mxu0 0.0
        %1501 = vmatpush1.xpose.msra.mxu0 0.0
        %1502 = vmatprep.mubr.f32.mxu0 0.0
        %1503 = vmatmul.mubr.f32.gmra.mrb[0].mxu0 %v1434
        %v1504 = vpop.f32.mrb[0].mxu0
        %v1505 = vadd.f32 0.0, %v1504
        %v1506 = vpop.f32.mrb[0].mxu0
        %1507 = vdwg.mxu0
        %1508 = vrot.lane.b32.xlu0 %v517, 96
        %v1509 = vpop.permute.xlu0 %1508
        %v1510 = vsel %vm521, %v517, 0
        %v1512 = vsel %vm521, %v1509, 0
        %1514 = vmatprep.subr.mxu0 0.0
        %1515 = vmatpush1.xpose.msra.mxu0 %v1512
        %1516 = vmatprep.subr.mxu0 0.0
        %1517 = vmatpush1.xpose.msra.mxu0 0.0
        %1518 = vmatprep.subr.mxu0 0.0
        %1519 = vmatpush1.xpose.msra.mxu0 0.0
        %1520 = vmatprep.subr.mxu0 0.0
        %1521 = vmatpush1.xpose.msra.mxu0 0.0
        %1522 = vmatprep.subr.mxu0 0.0
        %1523 = vmatpush1.xpose.msra.mxu0 0.0
        %1524 = vmatprep.subr.mxu0 0.0
        %1525 = vmatpush1.xpose.msra.mxu0 0.0
        %1526 = vmatprep.subr.mxu0 0.0
        %1527 = vmatpush1.xpose.msra.mxu0 0.0
        %1528 = vmatprep.subr.mxu0 0.0
        %1529 = vmatpush1.xpose.msra.mxu0 0.0
        %1530 = vmatprep.subr.mxu0 0.0
        %1531 = vmatpush1.xpose.msra.mxu0 0.0
        %1532 = vmatprep.subr.mxu0 0.0
        %1533 = vmatpush1.xpose.msra.mxu0 0.0
        %1534 = vmatprep.subr.mxu0 0.0
        %1535 = vmatpush1.xpose.msra.mxu0 0.0
        %1536 = vmatprep.subr.mxu0 0.0
        %1537 = vmatpush1.xpose.msra.mxu0 0.0
        %1538 = vmatprep.subr.mxu0 0.0
        %1539 = vmatpush1.xpose.msra.mxu0 0.0
        %1540 = vmatprep.subr.mxu0 0.0
        %1541 = vmatpush1.xpose.msra.mxu0 0.0
        %1542 = vmatprep.subr.mxu0 0.0
        %1543 = vmatpush1.xpose.msra.mxu0 0.0
        %1544 = vmatprep.subr.mxu0 0.0
        %1545 = vmatpush1.xpose.msra.mxu0 0.0
        %1546 = vmatprep.subr.mxu0 0.0
        %1547 = vmatpush1.xpose.msra.mxu0 0.0
        %1548 = vmatprep.subr.mxu0 0.0
        %1549 = vmatpush1.xpose.msra.mxu0 0.0
        %1550 = vmatprep.subr.mxu0 0.0
        %1551 = vmatpush1.xpose.msra.mxu0 0.0
        %1552 = vmatprep.subr.mxu0 0.0
        %1553 = vmatpush1.xpose.msra.mxu0 0.0
        %1554 = vmatprep.subr.mxu0 0.0
        %1555 = vmatpush1.xpose.msra.mxu0 0.0
        %1556 = vmatprep.subr.mxu0 0.0
        %1557 = vmatpush1.xpose.msra.mxu0 0.0
        %1558 = vmatprep.subr.mxu0 0.0
        %1559 = vmatpush1.xpose.msra.mxu0 0.0
        %1560 = vmatprep.subr.mxu0 0.0
        %1561 = vmatpush1.xpose.msra.mxu0 0.0
        %1562 = vmatprep.subr.mxu0 0.0
        %1563 = vmatpush1.xpose.msra.mxu0 0.0
        %1564 = vmatprep.subr.mxu0 0.0
        %1565 = vmatpush1.xpose.msra.mxu0 0.0
        %1566 = vmatprep.subr.mxu0 0.0
        %1567 = vmatpush1.xpose.msra.mxu0 0.0
        %1568 = vmatprep.subr.mxu0 0.0
        %1569 = vmatpush1.xpose.msra.mxu0 0.0
        %1570 = vmatprep.subr.mxu0 0.0
        %1571 = vmatpush1.xpose.msra.mxu0 0.0
        %1572 = vmatprep.subr.mxu0 0.0
        %1573 = vmatpush1.xpose.msra.mxu0 0.0
        %1574 = vmatprep.subr.mxu0 0.0
        %1575 = vmatpush1.xpose.msra.mxu0 0.0
        %1576 = vmatprep.subr.mxu0 0.0
        %1577 = vmatpush1.xpose.msra.mxu0 0.0
        %1578 = vmatprep.mubr.f32.mxu0 0.0
        %1579 = vmatmul.mubr.f32.gmra.mrb[0].mxu0 %v1510
        %v1580 = vpop.f32.mrb[0].mxu0
        %v1581 = vadd.f32 0.0, %v1580
        %v1582 = vpop.f32.mrb[0].mxu0
        %1583 = vdwg.mxu0
        %1584 = vrot.lane.b32.xlu0 %v500, 96
        %v1585 = vpop.permute.xlu0 %1584
        %v1586 = vsel %vm521, %v500, 0
        %v1588 = vsel %vm521, %v1585, 0
        %1590 = vmatprep.subr.mxu0 0.0
        %1591 = vmatpush1.xpose.msra.mxu0 %v1588
        %1592 = vmatprep.subr.mxu0 0.0
        %1593 = vmatpush1.xpose.msra.mxu0 0.0
        %1594 = vmatprep.subr.mxu0 0.0
        %1595 = vmatpush1.xpose.msra.mxu0 0.0
        %1596 = vmatprep.subr.mxu0 0.0
        %1597 = vmatpush1.xpose.msra.mxu0 0.0
        %1598 = vmatprep.subr.mxu0 0.0
        %1599 = vmatpush1.xpose.msra.mxu0 0.0
        %1600 = vmatprep.subr.mxu0 0.0
        %1601 = vmatpush1.xpose.msra.mxu0 0.0
        %1602 = vmatprep.subr.mxu0 0.0
        %1603 = vmatpush1.xpose.msra.mxu0 0.0
        %1604 = vmatprep.subr.mxu0 0.0
        %1605 = vmatpush1.xpose.msra.mxu0 0.0
        %1606 = vmatprep.subr.mxu0 0.0
        %1607 = vmatpush1.xpose.msra.mxu0 0.0
        %1608 = vmatprep.subr.mxu0 0.0
        %1609 = vmatpush1.xpose.msra.mxu0 0.0
        %1610 = vmatprep.subr.mxu0 0.0
        %1611 = vmatpush1.xpose.msra.mxu0 0.0
        %1612 = vmatprep.subr.mxu0 0.0
        %1613 = vmatpush1.xpose.msra.mxu0 0.0
        %1614 = vmatprep.subr.mxu0 0.0
        %1615 = vmatpush1.xpose.msra.mxu0 0.0
        %1616 = vmatprep.subr.mxu0 0.0
        %1617 = vmatpush1.xpose.msra.mxu0 0.0
        %1618 = vmatprep.subr.mxu0 0.0
        %1619 = vmatpush1.xpose.msra.mxu0 0.0
        %1620 = vmatprep.subr.mxu0 0.0
        %1621 = vmatpush1.xpose.msra.mxu0 0.0
        %1622 = vmatprep.subr.mxu0 0.0
        %1623 = vmatpush1.xpose.msra.mxu0 0.0
        %1624 = vmatprep.subr.mxu0 0.0
        %1625 = vmatpush1.xpose.msra.mxu0 0.0
        %1626 = vmatprep.subr.mxu0 0.0
        %1627 = vmatpush1.xpose.msra.mxu0 0.0
        %1628 = vmatprep.subr.mxu0 0.0
        %1629 = vmatpush1.xpose.msra.mxu0 0.0
        %1630 = vmatprep.subr.mxu0 0.0
        %1631 = vmatpush1.xpose.msra.mxu0 0.0
        %1632 = vmatprep.subr.mxu0 0.0
        %1633 = vmatpush1.xpose.msra.mxu0 0.0
        %1634 = vmatprep.subr.mxu0 0.0
        %1635 = vmatpush1.xpose.msra.mxu0 0.0
        %1636 = vmatprep.subr.mxu0 0.0
        %1637 = vmatpush1.xpose.msra.mxu0 0.0
        %1638 = vmatprep.subr.mxu0 0.0
        %1639 = vmatpush1.xpose.msra.mxu0 0.0
        %1640 = vmatprep.subr.mxu0 0.0
        %1641 = vmatpush1.xpose.msra.mxu0 0.0
        %1642 = vmatprep.subr.mxu0 0.0
        %1643 = vmatpush1.xpose.msra.mxu0 0.0
        %1644 = vmatprep.subr.mxu0 0.0
        %1645 = vmatpush1.xpose.msra.mxu0 0.0
        %1646 = vmatprep.subr.mxu0 0.0
        %1647 = vmatpush1.xpose.msra.mxu0 0.0
        %1648 = vmatprep.subr.mxu0 0.0
        %1649 = vmatpush1.xpose.msra.mxu0 0.0
        %1650 = vmatprep.subr.mxu0 0.0
        %1651 = vmatpush1.xpose.msra.mxu0 0.0
        %1652 = vmatprep.subr.mxu0 0.0
        %1653 = vmatpush1.xpose.msra.mxu0 0.0
        %1654 = vmatprep.mubr.f32.mxu0 0.0
        %1655 = vmatmul.mubr.f32.gmra.mrb[0].mxu0 %v1586
        %v1656 = vpop.f32.mrb[0].mxu0
        %v1657 = vadd.f32 0.0, %v1656
        %v1658 = vpop.f32.mrb[0].mxu0
        %1659 = vdwg.mxu0
        %1660 = vrot.lane.b32.xlu0 %v518, 96
        %v1661 = vpop.permute.xlu0 %1660
        %v1662 = vsel %vm521, %v518, 0
        %v1664 = vsel %vm521, %v1661, 0
        %1666 = vmatprep.subr.mxu0 0.0
        %1667 = vmatpush1.xpose.msra.mxu0 %v1664
        %1668 = vmatprep.subr.mxu0 0.0
        %1669 = vmatpush1.xpose.msra.mxu0 0.0
        %1670 = vmatprep.subr.mxu0 0.0
        %1671 = vmatpush1.xpose.msra.mxu0 0.0
        %1672 = vmatprep.subr.mxu0 0.0
        %1673 = vmatpush1.xpose.msra.mxu0 0.0
        %1674 = vmatprep.subr.mxu0 0.0
        %1675 = vmatpush1.xpose.msra.mxu0 0.0
        %1676 = vmatprep.subr.mxu0 0.0
        %1677 = vmatpush1.xpose.msra.mxu0 0.0
        %1678 = vmatprep.subr.mxu0 0.0
        %1679 = vmatpush1.xpose.msra.mxu0 0.0
        %1680 = vmatprep.subr.mxu0 0.0
        %1681 = vmatpush1.xpose.msra.mxu0 0.0
        %1682 = vmatprep.subr.mxu0 0.0
        %1683 = vmatpush1.xpose.msra.mxu0 0.0
        %1684 = vmatprep.subr.mxu0 0.0
        %1685 = vmatpush1.xpose.msra.mxu0 0.0
        %1686 = vmatprep.subr.mxu0 0.0
        %1687 = vmatpush1.xpose.msra.mxu0 0.0
        %1688 = vmatprep.subr.mxu0 0.0
        %1689 = vmatpush1.xpose.msra.mxu0 0.0
        %1690 = vmatprep.subr.mxu0 0.0
        %1691 = vmatpush1.xpose.msra.mxu0 0.0
        %1692 = vmatprep.subr.mxu0 0.0
        %1693 = vmatpush1.xpose.msra.mxu0 0.0
        %1694 = vmatprep.subr.mxu0 0.0
        %1695 = vmatpush1.xpose.msra.mxu0 0.0
        %1696 = vmatprep.subr.mxu0 0.0
        %1697 = vmatpush1.xpose.msra.mxu0 0.0
        %1698 = vmatprep.subr.mxu0 0.0
        %1699 = vmatpush1.xpose.msra.mxu0 0.0
        %1700 = vmatprep.subr.mxu0 0.0
        %1701 = vmatpush1.xpose.msra.mxu0 0.0
        %1702 = vmatprep.subr.mxu0 0.0
        %1703 = vmatpush1.xpose.msra.mxu0 0.0
        %1704 = vmatprep.subr.mxu0 0.0
        %1705 = vmatpush1.xpose.msra.mxu0 0.0
        %1706 = vmatprep.subr.mxu0 0.0
        %1707 = vmatpush1.xpose.msra.mxu0 0.0
        %1708 = vmatprep.subr.mxu0 0.0
        %1709 = vmatpush1.xpose.msra.mxu0 0.0
        %1710 = vmatprep.subr.mxu0 0.0
        %1711 = vmatpush1.xpose.msra.mxu0 0.0
        %1712 = vmatprep.subr.mxu0 0.0
        %1713 = vmatpush1.xpose.msra.mxu0 0.0
        %1714 = vmatprep.subr.mxu0 0.0
        %1715 = vmatpush1.xpose.msra.mxu0 0.0
        %1716 = vmatprep.subr.mxu0 0.0
        %1717 = vmatpush1.xpose.msra.mxu0 0.0
        %1718 = vmatprep.subr.mxu0 0.0
        %1719 = vmatpush1.xpose.msra.mxu0 0.0
        %1720 = vmatprep.subr.mxu0 0.0
        %1721 = vmatpush1.xpose.msra.mxu0 0.0
        %1722 = vmatprep.subr.mxu0 0.0
        %1723 = vmatpush1.xpose.msra.mxu0 0.0
        %1724 = vmatprep.subr.mxu0 0.0
        %1725 = vmatpush1.xpose.msra.mxu0 0.0
        %1726 = vmatprep.subr.mxu0 0.0
        %1727 = vmatpush1.xpose.msra.mxu0 0.0
        %1728 = vmatprep.subr.mxu0 0.0
        %1729 = vmatpush1.xpose.msra.mxu0 0.0
        %1730 = vmatprep.mubr.f32.mxu0 0.0
        %1731 = vmatmul.mubr.f32.gmra.mrb[0].mxu0 %v1662
        %v1732 = vpop.f32.mrb[0].mxu0
        %v1733 = vadd.f32 0.0, %v1732
        %v1734 = vpop.f32.mrb[0].mxu0
        %1735 = vdwg.mxu0
        %vm1736 = vcmask 27648
        %v1737 = vsel %vm1736, %v593, -inf
        %1738 = vmax.xlane.f32.xlu0 %v1737
        %v1739 = vpop.xlane.xlu0 %1738
        %v1740 = vsel %vm1736, %v669, -inf
        %1741 = vmax.xlane.f32.xlu0 %v1740
        %v1742 = vpop.xlane.xlu0 %1741
        %v1743 = vsel %vm1736, %v745, -inf
        %1744 = vmax.xlane.f32.xlu0 %v1743
        %v1745 = vpop.xlane.xlu0 %1744
        %v1746 = vsel %vm1736, %v821, -inf
        %1747 = vmax.xlane.f32.xlu0 %v1746
        %v1748 = vpop.xlane.xlu0 %1747
        %v1749 = vsel %vm1736, %v897, -inf
        %1750 = vmax.xlane.f32.xlu0 %v1749
        %v1751 = vpop.xlane.xlu0 %1750
        %v1752 = vsel %vm1736, %v973, -inf
        %1753 = vmax.xlane.f32.xlu0 %v1752
        %v1754 = vpop.xlane.xlu0 %1753
        %v1755 = vsel %vm1736, %v1049, -inf
        %1756 = vmax.xlane.f32.xlu0 %v1755
        %v1757 = vpop.xlane.xlu0 %1756
        %v1758 = vsel %vm1736, %v1125, -inf
        %1759 = vmax.xlane.f32.xlu0 %v1758
        %v1760 = vpop.xlane.xlu0 %1759
        %v1761 = vsel %vm1736, %v1201, -inf
        %1762 = vmax.xlane.f32.xlu0 %v1761
        %v1763 = vpop.xlane.xlu0 %1762
        %v1764 = vsel %vm1736, %v1277, -inf
        %1765 = vmax.xlane.f32.xlu0 %v1764
        %v1766 = vpop.xlane.xlu0 %1765
        %v1767 = vsel %vm1736, %v1353, -inf
        %1768 = vmax.xlane.f32.xlu0 %v1767
        %v1769 = vpop.xlane.xlu0 %1768
        %v1770 = vsel %vm1736, %v1429, -inf
        %1771 = vmax.xlane.f32.xlu0 %v1770
        %v1772 = vpop.xlane.xlu0 %1771
        %v1773 = vsel %vm1736, %v1505, -inf
        %1774 = vmax.xlane.f32.xlu0 %v1773
        %v1775 = vpop.xlane.xlu0 %1774
        %v1776 = vsel %vm1736, %v1581, -inf
        %1777 = vmax.xlane.f32.xlu0 %v1776
        %v1778 = vpop.xlane.xlu0 %1777
        %v1779 = vsel %vm1736, %v1657, -inf
        %1780 = vmax.xlane.f32.xlu0 %v1779
        %v1781 = vpop.xlane.xlu0 %1780
        %v1782 = vsel %vm1736, %v1733, -inf
        %1783 = vmax.xlane.f32.xlu0 %v1782
        %v1784 = vpop.xlane.xlu0 %1783
        %v1785 = vsub.f32 %v593, %v1739
        %v1786 = vsub.f32 %v669, %v1742
        %v1787 = vsub.f32 %v745, %v1745
        %v1788 = vsub.f32 %v821, %v1748
        %v1789 = vsub.f32 %v897, %v1751
        %v1790 = vsub.f32 %v973, %v1754
        %v1791 = vsub.f32 %v1049, %v1757
        %v1792 = vsub.f32 %v1125, %v1760
        %v1793 = vsub.f32 %v1201, %v1763
        %v1794 = vsub.f32 %v1277, %v1766
        %v1795 = vsub.f32 %v1353, %v1769
        %v1796 = vsub.f32 %v1429, %v1772
        %v1797 = vsub.f32 %v1505, %v1775
        %v1798 = vsub.f32 %v1581, %v1778
        %v1799 = vsub.f32 %v1657, %v1781
        %v1800 = vsub.f32 %v1733, %v1784
        %v1801 = vmul.f32 %v1785, 1.442695
        %v1802 = vpow.pop %v1801
        %v1803 = vmul.f32 %v1786, 1.442695
        %v1804 = vpow.pop %v1803
        %v1805 = vmul.f32 %v1787, 1.442695
        %v1806 = vpow.pop %v1805
        %v1807 = vmul.f32 %v1788, 1.442695
        %v1808 = vpow.pop %v1807
        %v1809 = vmul.f32 %v1789, 1.442695
        %v1810 = vpow.pop %v1809
        %v1811 = vmul.f32 %v1790, 1.442695
        %v1812 = vpow.pop %v1811
        %v1813 = vmul.f32 %v1791, 1.442695
        %v1814 = vpow.pop %v1813
        %v1815 = vmul.f32 %v1792, 1.442695
        %v1816 = vpow.pop %v1815
        %v1817 = vmul.f32 %v1793, 1.442695
        %v1818 = vpow.pop %v1817
        %v1819 = vmul.f32 %v1794, 1.442695
        %v1820 = vpow.pop %v1819
        %v1821 = vmul.f32 %v1795, 1.442695
        %v1822 = vpow.pop %v1821
        %v1823 = vmul.f32 %v1796, 1.442695
        %v1824 = vpow.pop %v1823
        %v1825 = vmul.f32 %v1797, 1.442695
        %v1826 = vpow.pop %v1825
        %v1827 = vmul.f32 %v1798, 1.442695
        %v1828 = vpow.pop %v1827
        %v1829 = vmul.f32 %v1799, 1.442695
        %v1830 = vpow.pop %v1829
        %v1831 = vmul.f32 %v1800, 1.442695
        %v1832 = vpow.pop %v1831
        %v1833 = vsel %vm1736, %v1802, 0.0
        %1834 = vadd.xlane.f32.xlu0 %v1833
        %v1835 = vpop.xlane.xlu0 %1834
        %v1836 = vsel %vm1736, %v1804, 0.0
        %1837 = vadd.xlane.f32.xlu0 %v1836
        %v1838 = vpop.xlane.xlu0 %1837
        %v1839 = vsel %vm1736, %v1806, 0.0
        %1840 = vadd.xlane.f32.xlu0 %v1839
        %v1841 = vpop.xlane.xlu0 %1840
        %v1842 = vsel %vm1736, %v1808, 0.0
        %1843 = vadd.xlane.f32.xlu0 %v1842
        %v1844 = vpop.xlane.xlu0 %1843
        %v1845 = vsel %vm1736, %v1810, 0.0
        %1846 = vadd.xlane.f32.xlu0 %v1845
        %v1847 = vpop.xlane.xlu0 %1846
        %v1848 = vsel %vm1736, %v1812, 0.0
        %1849 = vadd.xlane.f32.xlu0 %v1848
        %v1850 = vpop.xlane.xlu0 %1849
        %v1851 = vsel %vm1736, %v1814, 0.0
        %1852 = vadd.xlane.f32.xlu0 %v1851
        %v1853 = vpop.xlane.xlu0 %1852
        %v1854 = vsel %vm1736, %v1816, 0.0
        %1855 = vadd.xlane.f32.xlu0 %v1854
        %v1856 = vpop.xlane.xlu0 %1855
        %v1857 = vsel %vm1736, %v1818, 0.0
        %1858 = vadd.xlane.f32.xlu0 %v1857
        %v1859 = vpop.xlane.xlu0 %1858
        %v1860 = vsel %vm1736, %v1820, 0.0
        %1861 = vadd.xlane.f32.xlu0 %v1860
        %v1862 = vpop.xlane.xlu0 %1861
        %v1863 = vsel %vm1736, %v1822, 0.0
        %1864 = vadd.xlane.f32.xlu0 %v1863
        %v1865 = vpop.xlane.xlu0 %1864
        %v1866 = vsel %vm1736, %v1824, 0.0
        %1867 = vadd.xlane.f32.xlu0 %v1866
        %v1868 = vpop.xlane.xlu0 %1867
        %v1869 = vsel %vm1736, %v1826, 0.0
        %1870 = vadd.xlane.f32.xlu0 %v1869
        %v1871 = vpop.xlane.xlu0 %1870
        %v1872 = vsel %vm1736, %v1828, 0.0
        %1873 = vadd.xlane.f32.xlu0 %v1872
        %v1874 = vpop.xlane.xlu0 %1873
        %v1875 = vsel %vm1736, %v1830, 0.0
        %1876 = vadd.xlane.f32.xlu0 %v1875
        %v1877 = vpop.xlane.xlu0 %1876
        %v1878 = vsel %vm1736, %v1832, 0.0
        %1879 = vadd.xlane.f32.xlu0 %v1878
        %v1880 = vpop.xlane.xlu0 %1879
        %v1881 = vrcp.pop %v1835
        %v1882 = vrcp.pop %v1838
        %v1883 = vrcp.pop %v1841
        %v1884 = vrcp.pop %v1844
        %v1885 = vrcp.pop %v1847
        %v1886 = vrcp.pop %v1850
        %v1887 = vrcp.pop %v1853
        %v1888 = vrcp.pop %v1856
        %v1889 = vrcp.pop %v1859
        %v1890 = vrcp.pop %v1862
        %v1891 = vrcp.pop %v1865
        %v1892 = vrcp.pop %v1868
        %v1893 = vrcp.pop %v1871
        %v1894 = vrcp.pop %v1874
        %v1895 = vrcp.pop %v1877
        %v1896 = vrcp.pop %v1880
        %v1897 = vmul.f32 %v1802, %v1881
        %v1898 = vmul.f32 %v1804, %v1882
        %v1899 = vmul.f32 %v1806, %v1883
        %v1900 = vmul.f32 %v1808, %v1884
        %v1901 = vmul.f32 %v1810, %v1885
        %v1902 = vmul.f32 %v1812, %v1886
        %v1903 = vmul.f32 %v1814, %v1887
        %v1904 = vmul.f32 %v1816, %v1888
        %v1905 = vmul.f32 %v1818, %v1889
        %v1906 = vmul.f32 %v1820, %v1890
        %v1907 = vmul.f32 %v1822, %v1891
        %v1908 = vmul.f32 %v1824, %v1892
        %v1909 = vmul.f32 %v1826, %v1893
        %v1910 = vmul.f32 %v1828, %v1894
        %v1911 = vmul.f32 %v1830, %v1895
        %v1912 = vmul.f32 %v1832, %v1896
        %1913 = vrot.lane.b32.xlu0 %v465, 64
        %v1914 = vpop.permute.xlu0 %1913
        %vm1915 = vcmask 31744
        %v1917 = vsel %vm1915, %v1897, 0
        %vm1919 = vcmask 1043456
        %v1920 = vsel %vm1919, %v1914, 0
        %1922 = vmatprep.subr.mxu0 0.0
        %1923 = vmatpush1.msra.mxu0 %v1920
        %1924 = vmatprep.subr.mxu0 0.0
        %1925 = vmatpush1.msra.mxu0 0.0
        %1926 = vmatprep.subr.mxu0 0.0
        %1927 = vmatpush1.msra.mxu0 0.0
        %1928 = vmatprep.subr.mxu0 0.0
        %1929 = vmatpush1.msra.mxu0 0.0
        %1930 = vmatprep.subr.mxu0 0.0
        %1931 = vmatpush1.msra.mxu0 0.0
        %1932 = vmatprep.subr.mxu0 0.0
        %1933 = vmatpush1.msra.mxu0 0.0
        %1934 = vmatprep.subr.mxu0 0.0
        %1935 = vmatpush1.msra.mxu0 0.0
        %1936 = vmatprep.subr.mxu0 0.0
        %1937 = vmatpush1.msra.mxu0 0.0
        %1938 = vmatprep.subr.mxu0 0.0
        %1939 = vmatpush1.msra.mxu0 0.0
        %1940 = vmatprep.subr.mxu0 0.0
        %1941 = vmatpush1.msra.mxu0 0.0
        %1942 = vmatprep.subr.mxu0 0.0
        %1943 = vmatpush1.msra.mxu0 0.0
        %1944 = vmatprep.subr.mxu0 0.0
        %1945 = vmatpush1.msra.mxu0 0.0
        %1946 = vmatprep.subr.mxu0 0.0
        %1947 = vmatpush1.msra.mxu0 0.0
        %1948 = vmatprep.subr.mxu0 0.0
        %1949 = vmatpush1.msra.mxu0 0.0
        %1950 = vmatprep.subr.mxu0 0.0
        %1951 = vmatpush1.msra.mxu0 0.0
        %1952 = vmatprep.subr.mxu0 0.0
        %1953 = vmatpush1.msra.mxu0 0.0
        %1954 = vmatprep.subr.mxu0 0.0
        %1955 = vmatpush1.msra.mxu0 0.0
        %1956 = vmatprep.subr.mxu0 0.0
        %1957 = vmatpush1.msra.mxu0 0.0
        %1958 = vmatprep.subr.mxu0 0.0
        %1959 = vmatpush1.msra.mxu0 0.0
        %1960 = vmatprep.subr.mxu0 0.0
        %1961 = vmatpush1.msra.mxu0 0.0
        %1962 = vmatprep.subr.mxu0 0.0
        %1963 = vmatpush1.msra.mxu0 0.0
        %1964 = vmatprep.subr.mxu0 0.0
        %1965 = vmatpush1.msra.mxu0 0.0
        %1966 = vmatprep.subr.mxu0 0.0
        %1967 = vmatpush1.msra.mxu0 0.0
        %1968 = vmatprep.subr.mxu0 0.0
        %1969 = vmatpush1.msra.mxu0 0.0
        %1970 = vmatprep.subr.mxu0 0.0
        %1971 = vmatpush1.msra.mxu0 0.0
        %1972 = vmatprep.subr.mxu0 0.0
        %1973 = vmatpush1.msra.mxu0 0.0
        %1974 = vmatprep.subr.mxu0 0.0
        %1975 = vmatpush1.msra.mxu0 0.0
        %1976 = vmatprep.subr.mxu0 0.0
        %1977 = vmatpush1.msra.mxu0 0.0
        %1978 = vmatprep.subr.mxu0 0.0
        %1979 = vmatpush1.msra.mxu0 0.0
        %1980 = vmatprep.subr.mxu0 0.0
        %1981 = vmatpush1.msra.mxu0 0.0
        %1982 = vmatprep.subr.mxu0 0.0
        %1983 = vmatpush1.msra.mxu0 0.0
        %1984 = vmatprep.subr.mxu0 0.0
        %1985 = vmatpush1.msra.mxu0 0.0
        %1986 = vmatprep.mubr.f32.mxu0 0.0
        %1987 = vmatmul.mubr.f32.gmra.mrb[0].mxu0 %v1917
        %v1988 = vpop.f32.mrb[0].mxu0
        %v1989 = vadd.f32 0.0, %v1988
        %v1990 = vpop.f32.mrb[0].mxu0
        %1991 = vdwg.mxu0
        %1992 = vrot.lane.b32.xlu0 %v511, 64
        %v1993 = vpop.permute.xlu0 %1992
        %v1995 = vsel %vm1915, %v1898, 0
        %v1997 = vsel %vm1919, %v1993, 0
        %1999 = vmatprep.subr.mxu0 0.0
        %2000 = vmatpush1.msra.mxu0 %v1997
        %2001 = vmatprep.subr.mxu0 0.0
        %2002 = vmatpush1.msra.mxu0 0.0
        %2003 = vmatprep.subr.mxu0 0.0
        %2004 = vmatpush1.msra.mxu0 0.0
        %2005 = vmatprep.subr.mxu0 0.0
        %2006 = vmatpush1.msra.mxu0 0.0
        %2007 = vmatprep.subr.mxu0 0.0
        %2008 = vmatpush1.msra.mxu0 0.0
        %2009 = vmatprep.subr.mxu0 0.0
        %2010 = vmatpush1.msra.mxu0 0.0
        %2011 = vmatprep.subr.mxu0 0.0
        %2012 = vmatpush1.msra.mxu0 0.0
        %2013 = vmatprep.subr.mxu0 0.0
        %2014 = vmatpush1.msra.mxu0 0.0
        %2015 = vmatprep.subr.mxu0 0.0
        %2016 = vmatpush1.msra.mxu0 0.0
        %2017 = vmatprep.subr.mxu0 0.0
        %2018 = vmatpush1.msra.mxu0 0.0
        %2019 = vmatprep.subr.mxu0 0.0
        %2020 = vmatpush1.msra.mxu0 0.0
        %2021 = vmatprep.subr.mxu0 0.0
        %2022 = vmatpush1.msra.mxu0 0.0
        %2023 = vmatprep.subr.mxu0 0.0
        %2024 = vmatpush1.msra.mxu0 0.0
        %2025 = vmatprep.subr.mxu0 0.0
        %2026 = vmatpush1.msra.mxu0 0.0
        %2027 = vmatprep.subr.mxu0 0.0
        %2028 = vmatpush1.msra.mxu0 0.0
        %2029 = vmatprep.subr.mxu0 0.0
        %2030 = vmatpush1.msra.mxu0 0.0
        %2031 = vmatprep.subr.mxu0 0.0
        %2032 = vmatpush1.msra.mxu0 0.0
        %2033 = vmatprep.subr.mxu0 0.0
        %2034 = vmatpush1.msra.mxu0 0.0
        %2035 = vmatprep.subr.mxu0 0.0
        %2036 = vmatpush1.msra.mxu0 0.0
        %2037 = vmatprep.subr.mxu0 0.0
        %2038 = vmatpush1.msra.mxu0 0.0
        %2039 = vmatprep.subr.mxu0 0.0
        %2040 = vmatpush1.msra.mxu0 0.0
        %2041 = vmatprep.subr.mxu0 0.0
        %2042 = vmatpush1.msra.mxu0 0.0
        %2043 = vmatprep.subr.mxu0 0.0
        %2044 = vmatpush1.msra.mxu0 0.0
        %2045 = vmatprep.subr.mxu0 0.0
        %2046 = vmatpush1.msra.mxu0 0.0
        %2047 = vmatprep.subr.mxu0 0.0
        %2048 = vmatpush1.msra.mxu0 0.0
        %2049 = vmatprep.subr.mxu0 0.0
        %2050 = vmatpush1.msra.mxu0 0.0
        %2051 = vmatprep.subr.mxu0 0.0
        %2052 = vmatpush1.msra.mxu0 0.0
        %2053 = vmatprep.subr.mxu0 0.0
        %2054 = vmatpush1.msra.mxu0 0.0
        %2055 = vmatprep.subr.mxu0 0.0
        %2056 = vmatpush1.msra.mxu0 0.0
        %2057 = vmatprep.subr.mxu0 0.0
        %2058 = vmatpush1.msra.mxu0 0.0
        %2059 = vmatprep.subr.mxu0 0.0
        %2060 = vmatpush1.msra.mxu0 0.0
        %2061 = vmatprep.subr.mxu0 0.0
        %2062 = vmatpush1.msra.mxu0 0.0
        %2063 = vmatprep.mubr.f32.mxu0 0.0
        %2064 = vmatmul.mubr.f32.gmra.mrb[0].mxu0 %v1995
        %v2065 = vpop.f32.mrb[0].mxu0
        %v2066 = vadd.f32 0.0, %v2065
        %v2067 = vpop.f32.mrb[0].mxu0
        %2068 = vdwg.mxu0
        %2069 = vrot.lane.b32.xlu0 %v470, 64
        %v2070 = vpop.permute.xlu0 %2069
        %v2072 = vsel %vm1915, %v1899, 0
        %v2074 = vsel %vm1919, %v2070, 0
        %2076 = vmatprep.subr.mxu0 0.0
        %2077 = vmatpush1.msra.mxu0 %v2074
        %2078 = vmatprep.subr.mxu0 0.0
        %2079 = vmatpush1.msra.mxu0 0.0
        %2080 = vmatprep.subr.mxu0 0.0
        %2081 = vmatpush1.msra.mxu0 0.0
        %2082 = vmatprep.subr.mxu0 0.0
        %2083 = vmatpush1.msra.mxu0 0.0
        %2084 = vmatprep.subr.mxu0 0.0
        %2085 = vmatpush1.msra.mxu0 0.0
        %2086 = vmatprep.subr.mxu0 0.0
        %2087 = vmatpush1.msra.mxu0 0.0
        %2088 = vmatprep.subr.mxu0 0.0
        %2089 = vmatpush1.msra.mxu0 0.0
        %2090 = vmatprep.subr.mxu0 0.0
        %2091 = vmatpush1.msra.mxu0 0.0
        %2092 = vmatprep.subr.mxu0 0.0
        %2093 = vmatpush1.msra.mxu0 0.0
        %2094 = vmatprep.subr.mxu0 0.0
        %2095 = vmatpush1.msra.mxu0 0.0
        %2096 = vmatprep.subr.mxu0 0.0
        %2097 = vmatpush1.msra.mxu0 0.0
        %2098 = vmatprep.subr.mxu0 0.0
        %2099 = vmatpush1.msra.mxu0 0.0
        %2100 = vmatprep.subr.mxu0 0.0
        %2101 = vmatpush1.msra.mxu0 0.0
        %2102 = vmatprep.subr.mxu0 0.0
        %2103 = vmatpush1.msra.mxu0 0.0
        %2104 = vmatprep.subr.mxu0 0.0
        %2105 = vmatpush1.msra.mxu0 0.0
        %2106 = vmatprep.subr.mxu0 0.0
        %2107 = vmatpush1.msra.mxu0 0.0
        %2108 = vmatprep.subr.mxu0 0.0
        %2109 = vmatpush1.msra.mxu0 0.0
        %2110 = vmatprep.subr.mxu0 0.0
        %2111 = vmatpush1.msra.mxu0 0.0
        %2112 = vmatprep.subr.mxu0 0.0
        %2113 = vmatpush1.msra.mxu0 0.0
        %2114 = vmatprep.subr.mxu0 0.0
        %2115 = vmatpush1.msra.mxu0 0.0
        %2116 = vmatprep.subr.mxu0 0.0
        %2117 = vmatpush1.msra.mxu0 0.0
        %2118 = vmatprep.subr.mxu0 0.0
        %2119 = vmatpush1.msra.mxu0 0.0
        %2120 = vmatprep.subr.mxu0 0.0
        %2121 = vmatpush1.msra.mxu0 0.0
        %2122 = vmatprep.subr.mxu0 0.0
        %2123 = vmatpush1.msra.mxu0 0.0
        %2124 = vmatprep.subr.mxu0 0.0
        %2125 = vmatpush1.msra.mxu0 0.0
        %2126 = vmatprep.subr.mxu0 0.0
        %2127 = vmatpush1.msra.mxu0 0.0
        %2128 = vmatprep.subr.mxu0 0.0
        %2129 = vmatpush1.msra.mxu0 0.0
        %2130 = vmatprep.subr.mxu0 0.0
        %2131 = vmatpush1.msra.mxu0 0.0
        %2132 = vmatprep.subr.mxu0 0.0
        %2133 = vmatpush1.msra.mxu0 0.0
        %2134 = vmatprep.subr.mxu0 0.0
        %2135 = vmatpush1.msra.mxu0 0.0
        %2136 = vmatprep.subr.mxu0 0.0
        %2137 = vmatpush1.msra.mxu0 0.0
        %2138 = vmatprep.subr.mxu0 0.0
        %2139 = vmatpush1.msra.mxu0 0.0
        %2140 = vmatprep.mubr.f32.mxu0 0.0
        %2141 = vmatmul.mubr.f32.gmra.mrb[0].mxu0 %v2072
        %v2142 = vpop.f32.mrb[0].mxu0
        %v2143 = vadd.f32 0.0, %v2142
        %v2144 = vpop.f32.mrb[0].mxu0
        %2145 = vdwg.mxu0
        %2146 = vrot.lane.b32.xlu0 %v512, 64
        %v2147 = vpop.permute.xlu0 %2146
        %v2149 = vsel %vm1915, %v1900, 0
        %v2151 = vsel %vm1919, %v2147, 0
        %2153 = vmatprep.subr.mxu0 0.0
        %2154 = vmatpush1.msra.mxu0 %v2151
        %2155 = vmatprep.subr.mxu0 0.0
        %2156 = vmatpush1.msra.mxu0 0.0
        %2157 = vmatprep.subr.mxu0 0.0
        %2158 = vmatpush1.msra.mxu0 0.0
        %2159 = vmatprep.subr.mxu0 0.0
        %2160 = vmatpush1.msra.mxu0 0.0
        %2161 = vmatprep.subr.mxu0 0.0
        %2162 = vmatpush1.msra.mxu0 0.0
        %2163 = vmatprep.subr.mxu0 0.0
        %2164 = vmatpush1.msra.mxu0 0.0
        %2165 = vmatprep.subr.mxu0 0.0
        %2166 = vmatpush1.msra.mxu0 0.0
        %2167 = vmatprep.subr.mxu0 0.0
        %2168 = vmatpush1.msra.mxu0 0.0
        %2169 = vmatprep.subr.mxu0 0.0
        %2170 = vmatpush1.msra.mxu0 0.0
        %2171 = vmatprep.subr.mxu0 0.0
        %2172 = vmatpush1.msra.mxu0 0.0
        %2173 = vmatprep.subr.mxu0 0.0
        %2174 = vmatpush1.msra.mxu0 0.0
        %2175 = vmatprep.subr.mxu0 0.0
        %2176 = vmatpush1.msra.mxu0 0.0
        %2177 = vmatprep.subr.mxu0 0.0
        %2178 = vmatpush1.msra.mxu0 0.0
        %2179 = vmatprep.subr.mxu0 0.0
        %2180 = vmatpush1.msra.mxu0 0.0
        %2181 = vmatprep.subr.mxu0 0.0
        %2182 = vmatpush1.msra.mxu0 0.0
        %2183 = vmatprep.subr.mxu0 0.0
        %2184 = vmatpush1.msra.mxu0 0.0
        %2185 = vmatprep.subr.mxu0 0.0
        %2186 = vmatpush1.msra.mxu0 0.0
        %2187 = vmatprep.subr.mxu0 0.0
        %2188 = vmatpush1.msra.mxu0 0.0
        %2189 = vmatprep.subr.mxu0 0.0
        %2190 = vmatpush1.msra.mxu0 0.0
        %2191 = vmatprep.subr.mxu0 0.0
        %2192 = vmatpush1.msra.mxu0 0.0
        %2193 = vmatprep.subr.mxu0 0.0
        %2194 = vmatpush1.msra.mxu0 0.0
        %2195 = vmatprep.subr.mxu0 0.0
        %2196 = vmatpush1.msra.mxu0 0.0
        %2197 = vmatprep.subr.mxu0 0.0
        %2198 = vmatpush1.msra.mxu0 0.0
        %2199 = vmatprep.subr.mxu0 0.0
        %2200 = vmatpush1.msra.mxu0 0.0
        %2201 = vmatprep.subr.mxu0 0.0
        %2202 = vmatpush1.msra.mxu0 0.0
        %2203 = vmatprep.subr.mxu0 0.0
        %2204 = vmatpush1.msra.mxu0 0.0
        %2205 = vmatprep.subr.mxu0 0.0
        %2206 = vmatpush1.msra.mxu0 0.0
        %2207 = vmatprep.subr.mxu0 0.0
        %2208 = vmatpush1.msra.mxu0 0.0
        %2209 = vmatprep.subr.mxu0 0.0
        %2210 = vmatpush1.msra.mxu0 0.0
        %2211 = vmatprep.subr.mxu0 0.0
        %2212 = vmatpush1.msra.mxu0 0.0
        %2213 = vmatprep.subr.mxu0 0.0
        %2214 = vmatpush1.msra.mxu0 0.0
        %2215 = vmatprep.subr.mxu0 0.0
        %2216 = vmatpush1.msra.mxu0 0.0
        %2217 = vmatprep.mubr.f32.mxu0 0.0
        %2218 = vmatmul.mubr.f32.gmra.mrb[0].mxu0 %v2149
        %v2219 = vpop.f32.mrb[0].mxu0
        %v2220 = vadd.f32 0.0, %v2219
        %v2221 = vpop.f32.mrb[0].mxu0
        %2222 = vdwg.mxu0
        %2223 = vrot.lane.b32.xlu0 %v475, 64
        %v2224 = vpop.permute.xlu0 %2223
        %v2226 = vsel %vm1915, %v1901, 0
        %v2228 = vsel %vm1919, %v2224, 0
        %2230 = vmatprep.subr.mxu0 0.0
        %2231 = vmatpush1.msra.mxu0 %v2228
        %2232 = vmatprep.subr.mxu0 0.0
        %2233 = vmatpush1.msra.mxu0 0.0
        %2234 = vmatprep.subr.mxu0 0.0
        %2235 = vmatpush1.msra.mxu0 0.0
        %2236 = vmatprep.subr.mxu0 0.0
        %2237 = vmatpush1.msra.mxu0 0.0
        %2238 = vmatprep.subr.mxu0 0.0
        %2239 = vmatpush1.msra.mxu0 0.0
        %2240 = vmatprep.subr.mxu0 0.0
        %2241 = vmatpush1.msra.mxu0 0.0
        %2242 = vmatprep.subr.mxu0 0.0
        %2243 = vmatpush1.msra.mxu0 0.0
        %2244 = vmatprep.subr.mxu0 0.0
        %2245 = vmatpush1.msra.mxu0 0.0
        %2246 = vmatprep.subr.mxu0 0.0
        %2247 = vmatpush1.msra.mxu0 0.0
        %2248 = vmatprep.subr.mxu0 0.0
        %2249 = vmatpush1.msra.mxu0 0.0
        %2250 = vmatprep.subr.mxu0 0.0
        %2251 = vmatpush1.msra.mxu0 0.0
        %2252 = vmatprep.subr.mxu0 0.0
        %2253 = vmatpush1.msra.mxu0 0.0
        %2254 = vmatprep.subr.mxu0 0.0
        %2255 = vmatpush1.msra.mxu0 0.0
        %2256 = vmatprep.subr.mxu0 0.0
        %2257 = vmatpush1.msra.mxu0 0.0
        %2258 = vmatprep.subr.mxu0 0.0
        %2259 = vmatpush1.msra.mxu0 0.0
        %2260 = vmatprep.subr.mxu0 0.0
        %2261 = vmatpush1.msra.mxu0 0.0
        %2262 = vmatprep.subr.mxu0 0.0
        %2263 = vmatpush1.msra.mxu0 0.0
        %2264 = vmatprep.subr.mxu0 0.0
        %2265 = vmatpush1.msra.mxu0 0.0
        %2266 = vmatprep.subr.mxu0 0.0
        %2267 = vmatpush1.msra.mxu0 0.0
        %2268 = vmatprep.subr.mxu0 0.0
        %2269 = vmatpush1.msra.mxu0 0.0
        %2270 = vmatprep.subr.mxu0 0.0
        %2271 = vmatpush1.msra.mxu0 0.0
        %2272 = vmatprep.subr.mxu0 0.0
        %2273 = vmatpush1.msra.mxu0 0.0
        %2274 = vmatprep.subr.mxu0 0.0
        %2275 = vmatpush1.msra.mxu0 0.0
        %2276 = vmatprep.subr.mxu0 0.0
        %2277 = vmatpush1.msra.mxu0 0.0
        %2278 = vmatprep.subr.mxu0 0.0
        %2279 = vmatpush1.msra.mxu0 0.0
        %2280 = vmatprep.subr.mxu0 0.0
        %2281 = vmatpush1.msra.mxu0 0.0
        %2282 = vmatprep.subr.mxu0 0.0
        %2283 = vmatpush1.msra.mxu0 0.0
        %2284 = vmatprep.subr.mxu0 0.0
        %2285 = vmatpush1.msra.mxu0 0.0
        %2286 = vmatprep.subr.mxu0 0.0
        %2287 = vmatpush1.msra.mxu0 0.0
        %2288 = vmatprep.subr.mxu0 0.0
        %2289 = vmatpush1.msra.mxu0 0.0
        %2290 = vmatprep.subr.mxu0 0.0
        %2291 = vmatpush1.msra.mxu0 0.0
        %2292 = vmatprep.subr.mxu0 0.0
        %2293 = vmatpush1.msra.mxu0 0.0
        %2294 = vmatprep.mubr.f32.mxu0 0.0
        %2295 = vmatmul.mubr.f32.gmra.mrb[0].mxu0 %v2226
        %v2296 = vpop.f32.mrb[0].mxu0
        %v2297 = vadd.f32 0.0, %v2296
        %v2298 = vpop.f32.mrb[0].mxu0
        %2299 = vdwg.mxu0
        %2300 = vrot.lane.b32.xlu0 %v513, 64
        %v2301 = vpop.permute.xlu0 %2300
        %v2303 = vsel %vm1915, %v1902, 0
        %v2305 = vsel %vm1919, %v2301, 0
        %2307 = vmatprep.subr.mxu0 0.0
        %2308 = vmatpush1.msra.mxu0 %v2305
        %2309 = vmatprep.subr.mxu0 0.0
        %2310 = vmatpush1.msra.mxu0 0.0
        %2311 = vmatprep.subr.mxu0 0.0
        %2312 = vmatpush1.msra.mxu0 0.0
        %2313 = vmatprep.subr.mxu0 0.0
        %2314 = vmatpush1.msra.mxu0 0.0
        %2315 = vmatprep.subr.mxu0 0.0
        %2316 = vmatpush1.msra.mxu0 0.0
        %2317 = vmatprep.subr.mxu0 0.0
        %2318 = vmatpush1.msra.mxu0 0.0
        %2319 = vmatprep.subr.mxu0 0.0
        %2320 = vmatpush1.msra.mxu0 0.0
        %2321 = vmatprep.subr.mxu0 0.0
        %2322 = vmatpush1.msra.mxu0 0.0
        %2323 = vmatprep.subr.mxu0 0.0
        %2324 = vmatpush1.msra.mxu0 0.0
        %2325 = vmatprep.subr.mxu0 0.0
        %2326 = vmatpush1.msra.mxu0 0.0
        %2327 = vmatprep.subr.mxu0 0.0
        %2328 = vmatpush1.msra.mxu0 0.0
        %2329 = vmatprep.subr.mxu0 0.0
        %2330 = vmatpush1.msra.mxu0 0.0
        %2331 = vmatprep.subr.mxu0 0.0
        %2332 = vmatpush1.msra.mxu0 0.0
        %2333 = vmatprep.subr.mxu0 0.0
        %2334 = vmatpush1.msra.mxu0 0.0
        %2335 = vmatprep.subr.mxu0 0.0
        %2336 = vmatpush1.msra.mxu0 0.0
        %2337 = vmatprep.subr.mxu0 0.0
        %2338 = vmatpush1.msra.mxu0 0.0
        %2339 = vmatprep.subr.mxu0 0.0
        %2340 = vmatpush1.msra.mxu0 0.0
        %2341 = vmatprep.subr.mxu0 0.0
        %2342 = vmatpush1.msra.mxu0 0.0
        %2343 = vmatprep.subr.mxu0 0.0
        %2344 = vmatpush1.msra.mxu0 0.0
        %2345 = vmatprep.subr.mxu0 0.0
        %2346 = vmatpush1.msra.mxu0 0.0
        %2347 = vmatprep.subr.mxu0 0.0
        %2348 = vmatpush1.msra.mxu0 0.0
        %2349 = vmatprep.subr.mxu0 0.0
        %2350 = vmatpush1.msra.mxu0 0.0
        %2351 = vmatprep.subr.mxu0 0.0
        %2352 = vmatpush1.msra.mxu0 0.0
        %2353 = vmatprep.subr.mxu0 0.0
        %2354 = vmatpush1.msra.mxu0 0.0
        %2355 = vmatprep.subr.mxu0 0.0
        %2356 = vmatpush1.msra.mxu0 0.0
        %2357 = vmatprep.subr.mxu0 0.0
        %2358 = vmatpush1.msra.mxu0 0.0
        %2359 = vmatprep.subr.mxu0 0.0
        %2360 = vmatpush1.msra.mxu0 0.0
        %2361 = vmatprep.subr.mxu0 0.0
        %2362 = vmatpush1.msra.mxu0 0.0
        %2363 = vmatprep.subr.mxu0 0.0
        %2364 = vmatpush1.msra.mxu0 0.0
        %2365 = vmatprep.subr.mxu0 0.0
        %2366 = vmatpush1.msra.mxu0 0.0
        %2367 = vmatprep.subr.mxu0 0.0
        %2368 = vmatpush1.msra.mxu0 0.0
        %2369 = vmatprep.subr.mxu0 0.0
        %2370 = vmatpush1.msra.mxu0 0.0
        %2371 = vmatprep.mubr.f32.mxu0 0.0
        %2372 = vmatmul.mubr.f32.gmra.mrb[0].mxu0 %v2303
        %v2373 = vpop.f32.mrb[0].mxu0
        %v2374 = vadd.f32 0.0, %v2373
        %v2375 = vpop.f32.mrb[0].mxu0
        %2376 = vdwg.mxu0
        %2377 = vrot.lane.b32.xlu0 %v480, 64
        %v2378 = vpop.permute.xlu0 %2377
        %v2380 = vsel %vm1915, %v1903, 0
        %v2382 = vsel %vm1919, %v2378, 0
        %2384 = vmatprep.subr.mxu0 0.0
        %2385 = vmatpush1.msra.mxu0 %v2382
        %2386 = vmatprep.subr.mxu0 0.0
        %2387 = vmatpush1.msra.mxu0 0.0
        %2388 = vmatprep.subr.mxu0 0.0
        %2389 = vmatpush1.msra.mxu0 0.0
        %2390 = vmatprep.subr.mxu0 0.0
        %2391 = vmatpush1.msra.mxu0 0.0
        %2392 = vmatprep.subr.mxu0 0.0
        %2393 = vmatpush1.msra.mxu0 0.0
        %2394 = vmatprep.subr.mxu0 0.0
        %2395 = vmatpush1.msra.mxu0 0.0
        %2396 = vmatprep.subr.mxu0 0.0
        %2397 = vmatpush1.msra.mxu0 0.0
        %2398 = vmatprep.subr.mxu0 0.0
        %2399 = vmatpush1.msra.mxu0 0.0
        %2400 = vmatprep.subr.mxu0 0.0
        %2401 = vmatpush1.msra.mxu0 0.0
        %2402 = vmatprep.subr.mxu0 0.0
        %2403 = vmatpush1.msra.mxu0 0.0
        %2404 = vmatprep.subr.mxu0 0.0
        %2405 = vmatpush1.msra.mxu0 0.0
        %2406 = vmatprep.subr.mxu0 0.0
        %2407 = vmatpush1.msra.mxu0 0.0
        %2408 = vmatprep.subr.mxu0 0.0
        %2409 = vmatpush1.msra.mxu0 0.0
        %2410 = vmatprep.subr.mxu0 0.0
        %2411 = vmatpush1.msra.mxu0 0.0
        %2412 = vmatprep.subr.mxu0 0.0
        %2413 = vmatpush1.msra.mxu0 0.0
        %2414 = vmatprep.subr.mxu0 0.0
        %2415 = vmatpush1.msra.mxu0 0.0
        %2416 = vmatprep.subr.mxu0 0.0
        %2417 = vmatpush1.msra.mxu0 0.0
        %2418 = vmatprep.subr.mxu0 0.0
        %2419 = vmatpush1.msra.mxu0 0.0
        %2420 = vmatprep.subr.mxu0 0.0
        %2421 = vmatpush1.msra.mxu0 0.0
        %2422 = vmatprep.subr.mxu0 0.0
        %2423 = vmatpush1.msra.mxu0 0.0
        %2424 = vmatprep.subr.mxu0 0.0
        %2425 = vmatpush1.msra.mxu0 0.0
        %2426 = vmatprep.subr.mxu0 0.0
        %2427 = vmatpush1.msra.mxu0 0.0
        %2428 = vmatprep.subr.mxu0 0.0
        %2429 = vmatpush1.msra.mxu0 0.0
        %2430 = vmatprep.subr.mxu0 0.0
        %2431 = vmatpush1.msra.mxu0 0.0
        %2432 = vmatprep.subr.mxu0 0.0
        %2433 = vmatpush1.msra.mxu0 0.0
        %2434 = vmatprep.subr.mxu0 0.0
        %2435 = vmatpush1.msra.mxu0 0.0
        %2436 = vmatprep.subr.mxu0 0.0
        %2437 = vmatpush1.msra.mxu0 0.0
        %2438 = vmatprep.subr.mxu0 0.0
        %2439 = vmatpush1.msra.mxu0 0.0
        %2440 = vmatprep.subr.mxu0 0.0
        %2441 = vmatpush1.msra.mxu0 0.0
        %2442 = vmatprep.subr.mxu0 0.0
        %2443 = vmatpush1.msra.mxu0 0.0
        %2444 = vmatprep.subr.mxu0 0.0
        %2445 = vmatpush1.msra.mxu0 0.0
        %2446 = vmatprep.subr.mxu0 0.0
        %2447 = vmatpush1.msra.mxu0 0.0
        %2448 = vmatprep.mubr.f32.mxu0 0.0
        %2449 = vmatmul.mubr.f32.gmra.mrb[0].mxu0 %v2380
        %v2450 = vpop.f32.mrb[0].mxu0
        %v2451 = vadd.f32 0.0, %v2450
        %v2452 = vpop.f32.mrb[0].mxu0
        %2453 = vdwg.mxu0
        %2454 = vrot.lane.b32.xlu0 %v514, 64
        %v2455 = vpop.permute.xlu0 %2454
        %v2457 = vsel %vm1915, %v1904, 0
        %v2459 = vsel %vm1919, %v2455, 0
        %2461 = vmatprep.subr.mxu0 0.0
        %2462 = vmatpush1.msra.mxu0 %v2459
        %2463 = vmatprep.subr.mxu0 0.0
        %2464 = vmatpush1.msra.mxu0 0.0
        %2465 = vmatprep.subr.mxu0 0.0
        %2466 = vmatpush1.msra.mxu0 0.0
        %2467 = vmatprep.subr.mxu0 0.0
        %2468 = vmatpush1.msra.mxu0 0.0
        %2469 = vmatprep.subr.mxu0 0.0
        %2470 = vmatpush1.msra.mxu0 0.0
        %2471 = vmatprep.subr.mxu0 0.0
        %2472 = vmatpush1.msra.mxu0 0.0
        %2473 = vmatprep.subr.mxu0 0.0
        %2474 = vmatpush1.msra.mxu0 0.0
        %2475 = vmatprep.subr.mxu0 0.0
        %2476 = vmatpush1.msra.mxu0 0.0
        %2477 = vmatprep.subr.mxu0 0.0
        %2478 = vmatpush1.msra.mxu0 0.0
        %2479 = vmatprep.subr.mxu0 0.0
        %2480 = vmatpush1.msra.mxu0 0.0
        %2481 = vmatprep.subr.mxu0 0.0
        %2482 = vmatpush1.msra.mxu0 0.0
        %2483 = vmatprep.subr.mxu0 0.0
        %2484 = vmatpush1.msra.mxu0 0.0
        %2485 = vmatprep.subr.mxu0 0.0
        %2486 = vmatpush1.msra.mxu0 0.0
        %2487 = vmatprep.subr.mxu0 0.0
        %2488 = vmatpush1.msra.mxu0 0.0
        %2489 = vmatprep.subr.mxu0 0.0
        %2490 = vmatpush1.msra.mxu0 0.0
        %2491 = vmatprep.subr.mxu0 0.0
        %2492 = vmatpush1.msra.mxu0 0.0
        %2493 = vmatprep.subr.mxu0 0.0
        %2494 = vmatpush1.msra.mxu0 0.0
        %2495 = vmatprep.subr.mxu0 0.0
        %2496 = vmatpush1.msra.mxu0 0.0
        %2497 = vmatprep.subr.mxu0 0.0
        %2498 = vmatpush1.msra.mxu0 0.0
        %2499 = vmatprep.subr.mxu0 0.0
        %2500 = vmatpush1.msra.mxu0 0.0
        %2501 = vmatprep.subr.mxu0 0.0
        %2502 = vmatpush1.msra.mxu0 0.0
        %2503 = vmatprep.subr.mxu0 0.0
        %2504 = vmatpush1.msra.mxu0 0.0
        %2505 = vmatprep.subr.mxu0 0.0
        %2506 = vmatpush1.msra.mxu0 0.0
        %2507 = vmatprep.subr.mxu0 0.0
        %2508 = vmatpush1.msra.mxu0 0.0
        %2509 = vmatprep.subr.mxu0 0.0
        %2510 = vmatpush1.msra.mxu0 0.0
        %2511 = vmatprep.subr.mxu0 0.0
        %2512 = vmatpush1.msra.mxu0 0.0
        %2513 = vmatprep.subr.mxu0 0.0
        %2514 = vmatpush1.msra.mxu0 0.0
        %2515 = vmatprep.subr.mxu0 0.0
        %2516 = vmatpush1.msra.mxu0 0.0
        %2517 = vmatprep.subr.mxu0 0.0
        %2518 = vmatpush1.msra.mxu0 0.0
        %2519 = vmatprep.subr.mxu0 0.0
        %2520 = vmatpush1.msra.mxu0 0.0
        %2521 = vmatprep.subr.mxu0 0.0
        %2522 = vmatpush1.msra.mxu0 0.0
        %2523 = vmatprep.subr.mxu0 0.0
        %2524 = vmatpush1.msra.mxu0 0.0
        %2525 = vmatprep.mubr.f32.mxu0 0.0
        %2526 = vmatmul.mubr.f32.gmra.mrb[0].mxu0 %v2457
        %v2527 = vpop.f32.mrb[0].mxu0
        %v2528 = vadd.f32 0.0, %v2527
        %v2529 = vpop.f32.mrb[0].mxu0
        %2530 = vdwg.mxu0
        %2531 = vrot.lane.b32.xlu0 %v485, 64
        %v2532 = vpop.permute.xlu0 %2531
        %v2534 = vsel %vm1915, %v1905, 0
        %v2536 = vsel %vm1919, %v2532, 0
        %2538 = vmatprep.subr.mxu0 0.0
        %2539 = vmatpush1.msra.mxu0 %v2536
        %2540 = vmatprep.subr.mxu0 0.0
        %2541 = vmatpush1.msra.mxu0 0.0
        %2542 = vmatprep.subr.mxu0 0.0
        %2543 = vmatpush1.msra.mxu0 0.0
        %2544 = vmatprep.subr.mxu0 0.0
        %2545 = vmatpush1.msra.mxu0 0.0
        %2546 = vmatprep.subr.mxu0 0.0
        %2547 = vmatpush1.msra.mxu0 0.0
        %2548 = vmatprep.subr.mxu0 0.0
        %2549 = vmatpush1.msra.mxu0 0.0
        %2550 = vmatprep.subr.mxu0 0.0
        %2551 = vmatpush1.msra.mxu0 0.0
        %2552 = vmatprep.subr.mxu0 0.0
        %2553 = vmatpush1.msra.mxu0 0.0
        %2554 = vmatprep.subr.mxu0 0.0
        %2555 = vmatpush1.msra.mxu0 0.0
        %2556 = vmatprep.subr.mxu0 0.0
        %2557 = vmatpush1.msra.mxu0 0.0
        %2558 = vmatprep.subr.mxu0 0.0
        %2559 = vmatpush1.msra.mxu0 0.0
        %2560 = vmatprep.subr.mxu0 0.0
        %2561 = vmatpush1.msra.mxu0 0.0
        %2562 = vmatprep.subr.mxu0 0.0
        %2563 = vmatpush1.msra.mxu0 0.0
        %2564 = vmatprep.subr.mxu0 0.0
        %2565 = vmatpush1.msra.mxu0 0.0
        %2566 = vmatprep.subr.mxu0 0.0
        %2567 = vmatpush1.msra.mxu0 0.0
        %2568 = vmatprep.subr.mxu0 0.0
        %2569 = vmatpush1.msra.mxu0 0.0
        %2570 = vmatprep.subr.mxu0 0.0
        %2571 = vmatpush1.msra.mxu0 0.0
        %2572 = vmatprep.subr.mxu0 0.0
        %2573 = vmatpush1.msra.mxu0 0.0
        %2574 = vmatprep.subr.mxu0 0.0
        %2575 = vmatpush1.msra.mxu0 0.0
        %2576 = vmatprep.subr.mxu0 0.0
        %2577 = vmatpush1.msra.mxu0 0.0
        %2578 = vmatprep.subr.mxu0 0.0
        %2579 = vmatpush1.msra.mxu0 0.0
        %2580 = vmatprep.subr.mxu0 0.0
        %2581 = vmatpush1.msra.mxu0 0.0
        %2582 = vmatprep.subr.mxu0 0.0
        %2583 = vmatpush1.msra.mxu0 0.0
        %2584 = vmatprep.subr.mxu0 0.0
        %2585 = vmatpush1.msra.mxu0 0.0
        %2586 = vmatprep.subr.mxu0 0.0
        %2587 = vmatpush1.msra.mxu0 0.0
        %2588 = vmatprep.subr.mxu0 0.0
        %2589 = vmatpush1.msra.mxu0 0.0
        %2590 = vmatprep.subr.mxu0 0.0
        %2591 = vmatpush1.msra.mxu0 0.0
        %2592 = vmatprep.subr.mxu0 0.0
        %2593 = vmatpush1.msra.mxu0 0.0
        %2594 = vmatprep.subr.mxu0 0.0
        %2595 = vmatpush1.msra.mxu0 0.0
        %2596 = vmatprep.subr.mxu0 0.0
        %2597 = vmatpush1.msra.mxu0 0.0
        %2598 = vmatprep.subr.mxu0 0.0
        %2599 = vmatpush1.msra.mxu0 0.0
        %2600 = vmatprep.subr.mxu0 0.0
        %2601 = vmatpush1.msra.mxu0 0.0
        %2602 = vmatprep.mubr.f32.mxu0 0.0
        %2603 = vmatmul.mubr.f32.gmra.mrb[0].mxu0 %v2534
        %v2604 = vpop.f32.mrb[0].mxu0
        %v2605 = vadd.f32 0.0, %v2604
        %v2606 = vpop.f32.mrb[0].mxu0
        %2607 = vdwg.mxu0
        %2608 = vrot.lane.b32.xlu0 %v515, 64
        %v2609 = vpop.permute.xlu0 %2608
        %v2611 = vsel %vm1915, %v1906, 0
        %v2613 = vsel %vm1919, %v2609, 0
        %2615 = vmatprep.subr.mxu0 0.0
        %2616 = vmatpush1.msra.mxu0 %v2613
        %2617 = vmatprep.subr.mxu0 0.0
        %2618 = vmatpush1.msra.mxu0 0.0
        %2619 = vmatprep.subr.mxu0 0.0
        %2620 = vmatpush1.msra.mxu0 0.0
        %2621 = vmatprep.subr.mxu0 0.0
        %2622 = vmatpush1.msra.mxu0 0.0
        %2623 = vmatprep.subr.mxu0 0.0
        %2624 = vmatpush1.msra.mxu0 0.0
        %2625 = vmatprep.subr.mxu0 0.0
        %2626 = vmatpush1.msra.mxu0 0.0
        %2627 = vmatprep.subr.mxu0 0.0
        %2628 = vmatpush1.msra.mxu0 0.0
        %2629 = vmatprep.subr.mxu0 0.0
        %2630 = vmatpush1.msra.mxu0 0.0
        %2631 = vmatprep.subr.mxu0 0.0
        %2632 = vmatpush1.msra.mxu0 0.0
        %2633 = vmatprep.subr.mxu0 0.0
        %2634 = vmatpush1.msra.mxu0 0.0
        %2635 = vmatprep.subr.mxu0 0.0
        %2636 = vmatpush1.msra.mxu0 0.0
        %2637 = vmatprep.subr.mxu0 0.0
        %2638 = vmatpush1.msra.mxu0 0.0
        %2639 = vmatprep.subr.mxu0 0.0
        %2640 = vmatpush1.msra.mxu0 0.0
        %2641 = vmatprep.subr.mxu0 0.0
        %2642 = vmatpush1.msra.mxu0 0.0
        %2643 = vmatprep.subr.mxu0 0.0
        %2644 = vmatpush1.msra.mxu0 0.0
        %2645 = vmatprep.subr.mxu0 0.0
        %2646 = vmatpush1.msra.mxu0 0.0
        %2647 = vmatprep.subr.mxu0 0.0
        %2648 = vmatpush1.msra.mxu0 0.0
        %2649 = vmatprep.subr.mxu0 0.0
        %2650 = vmatpush1.msra.mxu0 0.0
        %2651 = vmatprep.subr.mxu0 0.0
        %2652 = vmatpush1.msra.mxu0 0.0
        %2653 = vmatprep.subr.mxu0 0.0
        %2654 = vmatpush1.msra.mxu0 0.0
        %2655 = vmatprep.subr.mxu0 0.0
        %2656 = vmatpush1.msra.mxu0 0.0
        %2657 = vmatprep.subr.mxu0 0.0
        %2658 = vmatpush1.msra.mxu0 0.0
        %2659 = vmatprep.subr.mxu0 0.0
        %2660 = vmatpush1.msra.mxu0 0.0
        %2661 = vmatprep.subr.mxu0 0.0
        %2662 = vmatpush1.msra.mxu0 0.0
        %2663 = vmatprep.subr.mxu0 0.0
        %2664 = vmatpush1.msra.mxu0 0.0
        %2665 = vmatprep.subr.mxu0 0.0
        %2666 = vmatpush1.msra.mxu0 0.0
        %2667 = vmatprep.subr.mxu0 0.0
        %2668 = vmatpush1.msra.mxu0 0.0
        %2669 = vmatprep.subr.mxu0 0.0
        %2670 = vmatpush1.msra.mxu0 0.0
        %2671 = vmatprep.subr.mxu0 0.0
        %2672 = vmatpush1.msra.mxu0 0.0
        %2673 = vmatprep.subr.mxu0 0.0
        %2674 = vmatpush1.msra.mxu0 0.0
        %2675 = vmatprep.subr.mxu0 0.0
        %2676 = vmatpush1.msra.mxu0 0.0
        %2677 = vmatprep.subr.mxu0 0.0
        %2678 = vmatpush1.msra.mxu0 0.0
        %2679 = vmatprep.mubr.f32.mxu0 0.0
        %2680 = vmatmul.mubr.f32.gmra.mrb[0].mxu0 %v2611
        %v2681 = vpop.f32.mrb[0].mxu0
        %v2682 = vadd.f32 0.0, %v2681
        %v2683 = vpop.f32.mrb[0].mxu0
        %2684 = vdwg.mxu0
        %2685 = vrot.lane.b32.xlu0 %v490, 64
        %v2686 = vpop.permute.xlu0 %2685
        %v2688 = vsel %vm1915, %v1907, 0
        %v2690 = vsel %vm1919, %v2686, 0
        %2692 = vmatprep.subr.mxu0 0.0
        %2693 = vmatpush1.msra.mxu0 %v2690
        %2694 = vmatprep.subr.mxu0 0.0
        %2695 = vmatpush1.msra.mxu0 0.0
        %2696 = vmatprep.subr.mxu0 0.0
        %2697 = vmatpush1.msra.mxu0 0.0
        %2698 = vmatprep.subr.mxu0 0.0
        %2699 = vmatpush1.msra.mxu0 0.0
        %2700 = vmatprep.subr.mxu0 0.0
        %2701 = vmatpush1.msra.mxu0 0.0
        %2702 = vmatprep.subr.mxu0 0.0
        %2703 = vmatpush1.msra.mxu0 0.0
        %2704 = vmatprep.subr.mxu0 0.0
        %2705 = vmatpush1.msra.mxu0 0.0
        %2706 = vmatprep.subr.mxu0 0.0
        %2707 = vmatpush1.msra.mxu0 0.0
        %2708 = vmatprep.subr.mxu0 0.0
        %2709 = vmatpush1.msra.mxu0 0.0
        %2710 = vmatprep.subr.mxu0 0.0
        %2711 = vmatpush1.msra.mxu0 0.0
        %2712 = vmatprep.subr.mxu0 0.0
        %2713 = vmatpush1.msra.mxu0 0.0
        %2714 = vmatprep.subr.mxu0 0.0
        %2715 = vmatpush1.msra.mxu0 0.0
        %2716 = vmatprep.subr.mxu0 0.0
        %2717 = vmatpush1.msra.mxu0 0.0
        %2718 = vmatprep.subr.mxu0 0.0
        %2719 = vmatpush1.msra.mxu0 0.0
        %2720 = vmatprep.subr.mxu0 0.0
        %2721 = vmatpush1.msra.mxu0 0.0
        %2722 = vmatprep.subr.mxu0 0.0
        %2723 = vmatpush1.msra.mxu0 0.0
        %2724 = vmatprep.subr.mxu0 0.0
        %2725 = vmatpush1.msra.mxu0 0.0
        %2726 = vmatprep.subr.mxu0 0.0
        %2727 = vmatpush1.msra.mxu0 0.0
        %2728 = vmatprep.subr.mxu0 0.0
        %2729 = vmatpush1.msra.mxu0 0.0
        %2730 = vmatprep.subr.mxu0 0.0
        %2731 = vmatpush1.msra.mxu0 0.0
        %2732 = vmatprep.subr.mxu0 0.0
        %2733 = vmatpush1.msra.mxu0 0.0
        %2734 = vmatprep.subr.mxu0 0.0
        %2735 = vmatpush1.msra.mxu0 0.0
        %2736 = vmatprep.subr.mxu0 0.0
        %2737 = vmatpush1.msra.mxu0 0.0
        %2738 = vmatprep.subr.mxu0 0.0
        %2739 = vmatpush1.msra.mxu0 0.0
        %2740 = vmatprep.subr.mxu0 0.0
        %2741 = vmatpush1.msra.mxu0 0.0
        %2742 = vmatprep.subr.mxu0 0.0
        %2743 = vmatpush1.msra.mxu0 0.0
        %2744 = vmatprep.subr.mxu0 0.0
        %2745 = vmatpush1.msra.mxu0 0.0
        %2746 = vmatprep.subr.mxu0 0.0
        %2747 = vmatpush1.msra.mxu0 0.0
        %2748 = vmatprep.subr.mxu0 0.0
        %2749 = vmatpush1.msra.mxu0 0.0
        %2750 = vmatprep.subr.mxu0 0.0
        %2751 = vmatpush1.msra.mxu0 0.0
        %2752 = vmatprep.subr.mxu0 0.0
        %2753 = vmatpush1.msra.mxu0 0.0
        %2754 = vmatprep.subr.mxu0 0.0
        %2755 = vmatpush1.msra.mxu0 0.0
        %2756 = vmatprep.mubr.f32.mxu0 0.0
        %2757 = vmatmul.mubr.f32.gmra.mrb[0].mxu0 %v2688
        %v2758 = vpop.f32.mrb[0].mxu0
        %v2759 = vadd.f32 0.0, %v2758
        %v2760 = vpop.f32.mrb[0].mxu0
        %2761 = vdwg.mxu0
        %2762 = vrot.lane.b32.xlu0 %v516, 64
        %v2763 = vpop.permute.xlu0 %2762
        %v2765 = vsel %vm1915, %v1908, 0
        %v2767 = vsel %vm1919, %v2763, 0
        %2769 = vmatprep.subr.mxu0 0.0
        %2770 = vmatpush1.msra.mxu0 %v2767
        %2771 = vmatprep.subr.mxu0 0.0
        %2772 = vmatpush1.msra.mxu0 0.0
        %2773 = vmatprep.subr.mxu0 0.0
        %2774 = vmatpush1.msra.mxu0 0.0
        %2775 = vmatprep.subr.mxu0 0.0
        %2776 = vmatpush1.msra.mxu0 0.0
        %2777 = vmatprep.subr.mxu0 0.0
        %2778 = vmatpush1.msra.mxu0 0.0
        %2779 = vmatprep.subr.mxu0 0.0
        %2780 = vmatpush1.msra.mxu0 0.0
        %2781 = vmatprep.subr.mxu0 0.0
        %2782 = vmatpush1.msra.mxu0 0.0
        %2783 = vmatprep.subr.mxu0 0.0
        %2784 = vmatpush1.msra.mxu0 0.0
        %2785 = vmatprep.subr.mxu0 0.0
        %2786 = vmatpush1.msra.mxu0 0.0
        %2787 = vmatprep.subr.mxu0 0.0
        %2788 = vmatpush1.msra.mxu0 0.0
        %2789 = vmatprep.subr.mxu0 0.0
        %2790 = vmatpush1.msra.mxu0 0.0
        %2791 = vmatprep.subr.mxu0 0.0
        %2792 = vmatpush1.msra.mxu0 0.0
        %2793 = vmatprep.subr.mxu0 0.0
        %2794 = vmatpush1.msra.mxu0 0.0
        %2795 = vmatprep.subr.mxu0 0.0
        %2796 = vmatpush1.msra.mxu0 0.0
        %2797 = vmatprep.subr.mxu0 0.0
        %2798 = vmatpush1.msra.mxu0 0.0
        %2799 = vmatprep.subr.mxu0 0.0
        %2800 = vmatpush1.msra.mxu0 0.0
        %2801 = vmatprep.subr.mxu0 0.0
        %2802 = vmatpush1.msra.mxu0 0.0
        %2803 = vmatprep.subr.mxu0 0.0
        %2804 = vmatpush1.msra.mxu0 0.0
        %2805 = vmatprep.subr.mxu0 0.0
        %2806 = vmatpush1.msra.mxu0 0.0
        %2807 = vmatprep.subr.mxu0 0.0
        %2808 = vmatpush1.msra.mxu0 0.0
        %2809 = vmatprep.subr.mxu0 0.0
        %2810 = vmatpush1.msra.mxu0 0.0
        %2811 = vmatprep.subr.mxu0 0.0
        %2812 = vmatpush1.msra.mxu0 0.0
        %2813 = vmatprep.subr.mxu0 0.0
        %2814 = vmatpush1.msra.mxu0 0.0
        %2815 = vmatprep.subr.mxu0 0.0
        %2816 = vmatpush1.msra.mxu0 0.0
        %2817 = vmatprep.subr.mxu0 0.0
        %2818 = vmatpush1.msra.mxu0 0.0
        %2819 = vmatprep.subr.mxu0 0.0
        %2820 = vmatpush1.msra.mxu0 0.0
        %2821 = vmatprep.subr.mxu0 0.0
        %2822 = vmatpush1.msra.mxu0 0.0
        %2823 = vmatprep.subr.mxu0 0.0
        %2824 = vmatpush1.msra.mxu0 0.0
        %2825 = vmatprep.subr.mxu0 0.0
        %2826 = vmatpush1.msra.mxu0 0.0
        %2827 = vmatprep.subr.mxu0 0.0
        %2828 = vmatpush1.msra.mxu0 0.0
        %2829 = vmatprep.subr.mxu0 0.0
        %2830 = vmatpush1.msra.mxu0 0.0
        %2831 = vmatprep.subr.mxu0 0.0
        %2832 = vmatpush1.msra.mxu0 0.0
        %2833 = vmatprep.mubr.f32.mxu0 0.0
        %2834 = vmatmul.mubr.f32.gmra.mrb[0].mxu0 %v2765
        %v2835 = vpop.f32.mrb[0].mxu0
        %v2836 = vadd.f32 0.0, %v2835
        %v2837 = vpop.f32.mrb[0].mxu0
        %2838 = vdwg.mxu0
        %2839 = vrot.lane.b32.xlu0 %v495, 64
        %v2840 = vpop.permute.xlu0 %2839
        %v2842 = vsel %vm1915, %v1909, 0
        %v2844 = vsel %vm1919, %v2840, 0
        %2846 = vmatprep.subr.mxu0 0.0
        %2847 = vmatpush1.msra.mxu0 %v2844
        %2848 = vmatprep.subr.mxu0 0.0
        %2849 = vmatpush1.msra.mxu0 0.0
        %2850 = vmatprep.subr.mxu0 0.0
        %2851 = vmatpush1.msra.mxu0 0.0
        %2852 = vmatprep.subr.mxu0 0.0
        %2853 = vmatpush1.msra.mxu0 0.0
        %2854 = vmatprep.subr.mxu0 0.0
        %2855 = vmatpush1.msra.mxu0 0.0
        %2856 = vmatprep.subr.mxu0 0.0
        %2857 = vmatpush1.msra.mxu0 0.0
        %2858 = vmatprep.subr.mxu0 0.0
        %2859 = vmatpush1.msra.mxu0 0.0
        %2860 = vmatprep.subr.mxu0 0.0
        %2861 = vmatpush1.msra.mxu0 0.0
        %2862 = vmatprep.subr.mxu0 0.0
        %2863 = vmatpush1.msra.mxu0 0.0
        %2864 = vmatprep.subr.mxu0 0.0
        %2865 = vmatpush1.msra.mxu0 0.0
        %2866 = vmatprep.subr.mxu0 0.0
        %2867 = vmatpush1.msra.mxu0 0.0
        %2868 = vmatprep.subr.mxu0 0.0
        %2869 = vmatpush1.msra.mxu0 0.0
        %2870 = vmatprep.subr.mxu0 0.0
        %2871 = vmatpush1.msra.mxu0 0.0
        %2872 = vmatprep.subr.mxu0 0.0
        %2873 = vmatpush1.msra.mxu0 0.0
        %2874 = vmatprep.subr.mxu0 0.0
        %2875 = vmatpush1.msra.mxu0 0.0
        %2876 = vmatprep.subr.mxu0 0.0
        %2877 = vmatpush1.msra.mxu0 0.0
        %2878 = vmatprep.subr.mxu0 0.0
        %2879 = vmatpush1.msra.mxu0 0.0
        %2880 = vmatprep.subr.mxu0 0.0
        %2881 = vmatpush1.msra.mxu0 0.0
        %2882 = vmatprep.subr.mxu0 0.0
        %2883 = vmatpush1.msra.mxu0 0.0
        %2884 = vmatprep.subr.mxu0 0.0
        %2885 = vmatpush1.msra.mxu0 0.0
        %2886 = vmatprep.subr.mxu0 0.0
        %2887 = vmatpush1.msra.mxu0 0.0
        %2888 = vmatprep.subr.mxu0 0.0
        %2889 = vmatpush1.msra.mxu0 0.0
        %2890 = vmatprep.subr.mxu0 0.0
        %2891 = vmatpush1.msra.mxu0 0.0
        %2892 = vmatprep.subr.mxu0 0.0
        %2893 = vmatpush1.msra.mxu0 0.0
        %2894 = vmatprep.subr.mxu0 0.0
        %2895 = vmatpush1.msra.mxu0 0.0
        %2896 = vmatprep.subr.mxu0 0.0
        %2897 = vmatpush1.msra.mxu0 0.0
        %2898 = vmatprep.subr.mxu0 0.0
        %2899 = vmatpush1.msra.mxu0 0.0
        %2900 = vmatprep.subr.mxu0 0.0
        %2901 = vmatpush1.msra.mxu0 0.0
        %2902 = vmatprep.subr.mxu0 0.0
        %2903 = vmatpush1.msra.mxu0 0.0
        %2904 = vmatprep.subr.mxu0 0.0
        %2905 = vmatpush1.msra.mxu0 0.0
        %2906 = vmatprep.subr.mxu0 0.0
        %2907 = vmatpush1.msra.mxu0 0.0
        %2908 = vmatprep.subr.mxu0 0.0
        %2909 = vmatpush1.msra.mxu0 0.0
        %2910 = vmatprep.mubr.f32.mxu0 0.0
        %2911 = vmatmul.mubr.f32.gmra.mrb[0].mxu0 %v2842
        %v2912 = vpop.f32.mrb[0].mxu0
        %v2913 = vadd.f32 0.0, %v2912
        %v2914 = vpop.f32.mrb[0].mxu0
        %2915 = vdwg.mxu0
        %2916 = vrot.lane.b32.xlu0 %v517, 64
        %v2917 = vpop.permute.xlu0 %2916
        %v2919 = vsel %vm1915, %v1910, 0
        %v2921 = vsel %vm1919, %v2917, 0
        %2923 = vmatprep.subr.mxu0 0.0
        %2924 = vmatpush1.msra.mxu0 %v2921
        %2925 = vmatprep.subr.mxu0 0.0
        %2926 = vmatpush1.msra.mxu0 0.0
        %2927 = vmatprep.subr.mxu0 0.0
        %2928 = vmatpush1.msra.mxu0 0.0
        %2929 = vmatprep.subr.mxu0 0.0
        %2930 = vmatpush1.msra.mxu0 0.0
        %2931 = vmatprep.subr.mxu0 0.0
        %2932 = vmatpush1.msra.mxu0 0.0
        %2933 = vmatprep.subr.mxu0 0.0
        %2934 = vmatpush1.msra.mxu0 0.0
        %2935 = vmatprep.subr.mxu0 0.0
        %2936 = vmatpush1.msra.mxu0 0.0
        %2937 = vmatprep.subr.mxu0 0.0
        %2938 = vmatpush1.msra.mxu0 0.0
        %2939 = vmatprep.subr.mxu0 0.0
        %2940 = vmatpush1.msra.mxu0 0.0
        %2941 = vmatprep.subr.mxu0 0.0
        %2942 = vmatpush1.msra.mxu0 0.0
        %2943 = vmatprep.subr.mxu0 0.0
        %2944 = vmatpush1.msra.mxu0 0.0
        %2945 = vmatprep.subr.mxu0 0.0
        %2946 = vmatpush1.msra.mxu0 0.0
        %2947 = vmatprep.subr.mxu0 0.0
        %2948 = vmatpush1.msra.mxu0 0.0
        %2949 = vmatprep.subr.mxu0 0.0
        %2950 = vmatpush1.msra.mxu0 0.0
        %2951 = vmatprep.subr.mxu0 0.0
        %2952 = vmatpush1.msra.mxu0 0.0
        %2953 = vmatprep.subr.mxu0 0.0
        %2954 = vmatpush1.msra.mxu0 0.0
        %2955 = vmatprep.subr.mxu0 0.0
        %2956 = vmatpush1.msra.mxu0 0.0
        %2957 = vmatprep.subr.mxu0 0.0
        %2958 = vmatpush1.msra.mxu0 0.0
        %2959 = vmatprep.subr.mxu0 0.0
        %2960 = vmatpush1.msra.mxu0 0.0
        %2961 = vmatprep.subr.mxu0 0.0
        %2962 = vmatpush1.msra.mxu0 0.0
        %2963 = vmatprep.subr.mxu0 0.0
        %2964 = vmatpush1.msra.mxu0 0.0
        %2965 = vmatprep.subr.mxu0 0.0
        %2966 = vmatpush1.msra.mxu0 0.0
        %2967 = vmatprep.subr.mxu0 0.0
        %2968 = vmatpush1.msra.mxu0 0.0
        %2969 = vmatprep.subr.mxu0 0.0
        %2970 = vmatpush1.msra.mxu0 0.0
        %2971 = vmatprep.subr.mxu0 0.0
        %2972 = vmatpush1.msra.mxu0 0.0
        %2973 = vmatprep.subr.mxu0 0.0
        %2974 = vmatpush1.msra.mxu0 0.0
        %2975 = vmatprep.subr.mxu0 0.0
        %2976 = vmatpush1.msra.mxu0 0.0
        %2977 = vmatprep.subr.mxu0 0.0
        %2978 = vmatpush1.msra.mxu0 0.0
        %2979 = vmatprep.subr.mxu0 0.0
        %2980 = vmatpush1.msra.mxu0 0.0
        %2981 = vmatprep.subr.mxu0 0.0
        %2982 = vmatpush1.msra.mxu0 0.0
        %2983 = vmatprep.subr.mxu0 0.0
        %2984 = vmatpush1.msra.mxu0 0.0
        %2985 = vmatprep.subr.mxu0 0.0
        %2986 = vmatpush1.msra.mxu0 0.0
        %2987 = vmatprep.mubr.f32.mxu0 0.0
        %2988 = vmatmul.mubr.f32.gmra.mrb[0].mxu0 %v2919
        %v2989 = vpop.f32.mrb[0].mxu0
        %v2990 = vadd.f32 0.0, %v2989
        %v2991 = vpop.f32.mrb[0].mxu0
        %2992 = vdwg.mxu0
        %2993 = vrot.lane.b32.xlu0 %v500, 64
        %v2994 = vpop.permute.xlu0 %2993
        %v2996 = vsel %vm1915, %v1911, 0
        %v2998 = vsel %vm1919, %v2994, 0
        %3000 = vmatprep.subr.mxu0 0.0
        %3001 = vmatpush1.msra.mxu0 %v2998
        %3002 = vmatprep.subr.mxu0 0.0
        %3003 = vmatpush1.msra.mxu0 0.0
        %3004 = vmatprep.subr.mxu0 0.0
        %3005 = vmatpush1.msra.mxu0 0.0
        %3006 = vmatprep.subr.mxu0 0.0
        %3007 = vmatpush1.msra.mxu0 0.0
        %3008 = vmatprep.subr.mxu0 0.0
        %3009 = vmatpush1.msra.mxu0 0.0
        %3010 = vmatprep.subr.mxu0 0.0
        %3011 = vmatpush1.msra.mxu0 0.0
        %3012 = vmatprep.subr.mxu0 0.0
        %3013 = vmatpush1.msra.mxu0 0.0
        %3014 = vmatprep.subr.mxu0 0.0
        %3015 = vmatpush1.msra.mxu0 0.0
        %3016 = vmatprep.subr.mxu0 0.0
        %3017 = vmatpush1.msra.mxu0 0.0
        %3018 = vmatprep.subr.mxu0 0.0
        %3019 = vmatpush1.msra.mxu0 0.0
        %3020 = vmatprep.subr.mxu0 0.0
        %3021 = vmatpush1.msra.mxu0 0.0
        %3022 = vmatprep.subr.mxu0 0.0
        %3023 = vmatpush1.msra.mxu0 0.0
        %3024 = vmatprep.subr.mxu0 0.0
        %3025 = vmatpush1.msra.mxu0 0.0
        %3026 = vmatprep.subr.mxu0 0.0
        %3027 = vmatpush1.msra.mxu0 0.0
        %3028 = vmatprep.subr.mxu0 0.0
        %3029 = vmatpush1.msra.mxu0 0.0
        %3030 = vmatprep.subr.mxu0 0.0
        %3031 = vmatpush1.msra.mxu0 0.0
        %3032 = vmatprep.subr.mxu0 0.0
        %3033 = vmatpush1.msra.mxu0 0.0
        %3034 = vmatprep.subr.mxu0 0.0
        %3035 = vmatpush1.msra.mxu0 0.0
        %3036 = vmatprep.subr.mxu0 0.0
        %3037 = vmatpush1.msra.mxu0 0.0
        %3038 = vmatprep.subr.mxu0 0.0
        %3039 = vmatpush1.msra.mxu0 0.0
        %3040 = vmatprep.subr.mxu0 0.0
        %3041 = vmatpush1.msra.mxu0 0.0
        %3042 = vmatprep.subr.mxu0 0.0
        %3043 = vmatpush1.msra.mxu0 0.0
        %3044 = vmatprep.subr.mxu0 0.0
        %3045 = vmatpush1.msra.mxu0 0.0
        %3046 = vmatprep.subr.mxu0 0.0
        %3047 = vmatpush1.msra.mxu0 0.0
        %3048 = vmatprep.subr.mxu0 0.0
        %3049 = vmatpush1.msra.mxu0 0.0
        %3050 = vmatprep.subr.mxu0 0.0
        %3051 = vmatpush1.msra.mxu0 0.0
        %3052 = vmatprep.subr.mxu0 0.0
        %3053 = vmatpush1.msra.mxu0 0.0
        %3054 = vmatprep.subr.mxu0 0.0
        %3055 = vmatpush1.msra.mxu0 0.0
        %3056 = vmatprep.subr.mxu0 0.0
        %3057 = vmatpush1.msra.mxu0 0.0
        %3058 = vmatprep.subr.mxu0 0.0
        %3059 = vmatpush1.msra.mxu0 0.0
        %3060 = vmatprep.subr.mxu0 0.0
        %3061 = vmatpush1.msra.mxu0 0.0
        %3062 = vmatprep.subr.mxu0 0.0
        %3063 = vmatpush1.msra.mxu0 0.0
        %3064 = vmatprep.mubr.f32.mxu0 0.0
        %3065 = vmatmul.mubr.f32.gmra.mrb[0].mxu0 %v2996
        %v3066 = vpop.f32.mrb[0].mxu0
        %v3067 = vadd.f32 0.0, %v3066
        %v3068 = vpop.f32.mrb[0].mxu0
        %3069 = vdwg.mxu0
        %3070 = vrot.lane.b32.xlu0 %v518, 64
        %v3071 = vpop.permute.xlu0 %3070
        %v3073 = vsel %vm1915, %v1912, 0
        %v3075 = vsel %vm1919, %v3071, 0
        %3077 = vmatprep.subr.mxu0 0.0
        %3078 = vmatpush1.msra.mxu0 %v3075
        %3079 = vmatprep.subr.mxu0 0.0
        %3080 = vmatpush1.msra.mxu0 0.0
        %3081 = vmatprep.subr.mxu0 0.0
        %3082 = vmatpush1.msra.mxu0 0.0
        %3083 = vmatprep.subr.mxu0 0.0
        %3084 = vmatpush1.msra.mxu0 0.0
        %3085 = vmatprep.subr.mxu0 0.0
        %3086 = vmatpush1.msra.mxu0 0.0
        %3087 = vmatprep.subr.mxu0 0.0
        %3088 = vmatpush1.msra.mxu0 0.0
        %3089 = vmatprep.subr.mxu0 0.0
        %3090 = vmatpush1.msra.mxu0 0.0
        %3091 = vmatprep.subr.mxu0 0.0
        %3092 = vmatpush1.msra.mxu0 0.0
        %3093 = vmatprep.subr.mxu0 0.0
        %3094 = vmatpush1.msra.mxu0 0.0
        %3095 = vmatprep.subr.mxu0 0.0
        %3096 = vmatpush1.msra.mxu0 0.0
        %3097 = vmatprep.subr.mxu0 0.0
        %3098 = vmatpush1.msra.mxu0 0.0
        %3099 = vmatprep.subr.mxu0 0.0
        %3100 = vmatpush1.msra.mxu0 0.0
        %3101 = vmatprep.subr.mxu0 0.0
        %3102 = vmatpush1.msra.mxu0 0.0
        %3103 = vmatprep.subr.mxu0 0.0
        %3104 = vmatpush1.msra.mxu0 0.0
        %3105 = vmatprep.subr.mxu0 0.0
        %3106 = vmatpush1.msra.mxu0 0.0
        %3107 = vmatprep.subr.mxu0 0.0
        %3108 = vmatpush1.msra.mxu0 0.0
        %3109 = vmatprep.subr.mxu0 0.0
        %3110 = vmatpush1.msra.mxu0 0.0
        %3111 = vmatprep.subr.mxu0 0.0
        %3112 = vmatpush1.msra.mxu0 0.0
        %3113 = vmatprep.subr.mxu0 0.0
        %3114 = vmatpush1.msra.mxu0 0.0
        %3115 = vmatprep.subr.mxu0 0.0
        %3116 = vmatpush1.msra.mxu0 0.0
        %3117 = vmatprep.subr.mxu0 0.0
        %3118 = vmatpush1.msra.mxu0 0.0
        %3119 = vmatprep.subr.mxu0 0.0
        %3120 = vmatpush1.msra.mxu0 0.0
        %3121 = vmatprep.subr.mxu0 0.0
        %3122 = vmatpush1.msra.mxu0 0.0
        %3123 = vmatprep.subr.mxu0 0.0
        %3124 = vmatpush1.msra.mxu0 0.0
        %3125 = vmatprep.subr.mxu0 0.0
        %3126 = vmatpush1.msra.mxu0 0.0
        %3127 = vmatprep.subr.mxu0 0.0
        %3128 = vmatpush1.msra.mxu0 0.0
        %3129 = vmatprep.subr.mxu0 0.0
        %3130 = vmatpush1.msra.mxu0 0.0
        %3131 = vmatprep.subr.mxu0 0.0
        %3132 = vmatpush1.msra.mxu0 0.0
        %3133 = vmatprep.subr.mxu0 0.0
        %3134 = vmatpush1.msra.mxu0 0.0
        %3135 = vmatprep.subr.mxu0 0.0
        %3136 = vmatpush1.msra.mxu0 0.0
        %3137 = vmatprep.subr.mxu0 0.0
        %3138 = vmatpush1.msra.mxu0 0.0
        %3139 = vmatprep.subr.mxu0 0.0
        %3140 = vmatpush1.msra.mxu0 0.0
        %3141 = vmatprep.mubr.f32.mxu0 0.0
        %3142 = vmatmul.mubr.f32.gmra.mrb[0].mxu0 %v3073
        %v3143 = vpop.f32.mrb[0].mxu0
        %v3144 = vadd.f32 0.0, %v3143
        %v3145 = vpop.f32.mrb[0].mxu0
        %3146 = vdwg.mxu0
        %v3147 = vcombine.low %v1989, %v2143
        %v3149 = vunpack.c.l.s4 1983009808
        %v3150 = vunpack.c.0.s8 %v3149
        %v3151 = vlaneseq
        %v3152 = vshrl.u32 %v3151, 7
        %v3153 = vsub.s32 %v3150, %v3152
        %v3154 = vrot.slane %v3147, %v3153
        %v3155 = vcombine.low %v2066, %v2220
        %v3157 = vunpack.c.l.s4 1983009808
        %v3158 = vunpack.c.0.s8 %v3157
        %v3159 = vlaneseq
        %v3160 = vshrl.u32 %v3159, 7
        %v3161 = vsub.s32 %v3158, %v3160
        %v3162 = vrot.slane %v3155, %v3161
        %v3163 = vcombine.low %v2297, %v2451
        %v3165 = vunpack.c.l.s4 1983009808
        %v3166 = vunpack.c.0.s8 %v3165
        %v3167 = vlaneseq
        %v3168 = vshrl.u32 %v3167, 7
        %v3169 = vsub.s32 %v3166, %v3168
        %v3170 = vrot.slane %v3163, %v3169
        %v3171 = vcombine.low %v2374, %v2528
        %v3173 = vunpack.c.l.s4 1983009808
        %v3174 = vunpack.c.0.s8 %v3173
        %v3175 = vlaneseq
        %v3176 = vshrl.u32 %v3175, 7
        %v3177 = vsub.s32 %v3174, %v3176
        %v3178 = vrot.slane %v3171, %v3177
        %v3179 = vcombine.low %v3154, %v3162
        %v3180 = vcombine.high %v3154, %v3162
        %v3182 = vunpack.c.l.s4 1934713408
        %v3183 = vunpack.c.0.s8 %v3182
        %v3184 = vlaneseq
        %v3185 = vshrl.u32 %v3184, 7
        %v3186 = vsub.s32 %v3183, %v3185
        %v3187 = vrot.slane %v3179, %v3186
        %v3189 = vunpack.c.l.s4 1934713408
        %v3190 = vunpack.c.0.s8 %v3189
        %v3191 = vlaneseq
        %v3192 = vshrl.u32 %v3191, 7
        %v3193 = vsub.s32 %v3190, %v3192
        %v3194 = vrot.slane %v3180, %v3193
        %v3195 = vcombine.low %v3170, %v3178
        %v3196 = vcombine.high %v3170, %v3178
        %v3198 = vunpack.c.l.s4 1934713408
        %v3199 = vunpack.c.0.s8 %v3198
        %v3200 = vlaneseq
        %v3201 = vshrl.u32 %v3200, 7
        %v3202 = vsub.s32 %v3199, %v3201
        %v3203 = vrot.slane %v3195, %v3202
        %v3205 = vunpack.c.l.s4 1934713408
        %v3206 = vunpack.c.0.s8 %v3205
        %v3207 = vlaneseq
        %v3208 = vshrl.u32 %v3207, 7
        %v3209 = vsub.s32 %v3206, %v3208
        %v3210 = vrot.slane %v3196, %v3209
        %v3211 = vcombine.low %v3187, %v3203
        %v3212 = vcombine.high %v3187, %v3203
        %v3213 = vcombine.low %v3194, %v3210
        %v3214 = vcombine.high %v3194, %v3210
        %v3215 = vcombine.low %v2605, %v2759
        %v3217 = vunpack.c.l.s4 1983009808
        %v3218 = vunpack.c.0.s8 %v3217
        %v3219 = vlaneseq
        %v3220 = vshrl.u32 %v3219, 7
        %v3221 = vsub.s32 %v3218, %v3220
        %v3222 = vrot.slane %v3215, %v3221
        %v3223 = vcombine.low %v2682, %v2836
        %v3225 = vunpack.c.l.s4 1983009808
        %v3226 = vunpack.c.0.s8 %v3225
        %v3227 = vlaneseq
        %v3228 = vshrl.u32 %v3227, 7
        %v3229 = vsub.s32 %v3226, %v3228
        %v3230 = vrot.slane %v3223, %v3229
        %v3231 = vcombine.low %v2913, %v3067
        %v3233 = vunpack.c.l.s4 1983009808
        %v3234 = vunpack.c.0.s8 %v3233
        %v3235 = vlaneseq
        %v3236 = vshrl.u32 %v3235, 7
        %v3237 = vsub.s32 %v3234, %v3236
        %v3238 = vrot.slane %v3231, %v3237
        %v3239 = vcombine.low %v2990, %v3144
        %v3241 = vunpack.c.l.s4 1983009808
        %v3242 = vunpack.c.0.s8 %v3241
        %v3243 = vlaneseq
        %v3244 = vshrl.u32 %v3243, 7
        %v3245 = vsub.s32 %v3242, %v3244
        %v3246 = vrot.slane %v3239, %v3245
        %v3247 = vcombine.low %v3222, %v3230
        %v3248 = vcombine.high %v3222, %v3230
        %v3250 = vunpack.c.l.s4 1934713408
        %v3251 = vunpack.c.0.s8 %v3250
        %v3252 = vlaneseq
        %v3253 = vshrl.u32 %v3252, 7
        %v3254 = vsub.s32 %v3251, %v3253
        %v3255 = vrot.slane %v3247, %v3254
        %v3257 = vunpack.c.l.s4 1934713408
        %v3258 = vunpack.c.0.s8 %v3257
        %v3259 = vlaneseq
        %v3260 = vshrl.u32 %v3259, 7
        %v3261 = vsub.s32 %v3258, %v3260
        %v3262 = vrot.slane %v3248, %v3261
        %v3263 = vcombine.low %v3238, %v3246
        %v3264 = vcombine.high %v3238, %v3246
        %v3266 = vunpack.c.l.s4 1934713408
        %v3267 = vunpack.c.0.s8 %v3266
        %v3268 = vlaneseq
        %v3269 = vshrl.u32 %v3268, 7
        %v3270 = vsub.s32 %v3267, %v3269
        %v3271 = vrot.slane %v3263, %v3270
        %v3273 = vunpack.c.l.s4 1934713408
        %v3274 = vunpack.c.0.s8 %v3273
        %v3275 = vlaneseq
        %v3276 = vshrl.u32 %v3275, 7
        %v3277 = vsub.s32 %v3274, %v3276
        %v3278 = vrot.slane %v3264, %v3277
        %v3279 = vcombine.low %v3255, %v3271
        %v3280 = vcombine.high %v3255, %v3271
        %v3281 = vcombine.low %v3262, %v3278
        %v3282 = vcombine.high %v3262, %v3278
        %3283 = vst.msk [vmem:[%s203] sm:$0xff] %vm521, %v3211
        %3284 = vst.msk [vmem:[%s203 + $0x8] sm:$0xff] %vm521, %v3279
        %3285 = vst.msk [vmem:[%s203 + $0x10] sm:$0xff] %vm521, %v3212
        %3286 = vst.msk [vmem:[%s203 + $0x18] sm:$0xff] %vm521, %v3280
        %3287 = vst.msk [vmem:[%s203 + $0x20] sm:$0xff] %vm521, %v3213
        %3288 = vst.msk [vmem:[%s203 + $0x28] sm:$0xff] %vm521, %v3281
        %3289 = vst.msk [vmem:[%s203 + $0x30] sm:$0xff] %vm521, %v3214
        %3290 = vst.msk [vmem:[%s203 + $0x38] sm:$0xff] %vm521, %v3282
        %s3291 = sand.u32 %s97, 1
        %s3292 = scalar_lea.sflag [#allocation4], %s3291
        %s3293 = sand.u32 %s97, 1
        %s3294 = smul.addr %s3293, 64
        %s3295 = scalar_lea.vmem [#allocation7], %s3294
        // Predicated region
        $region41: #{tpu_custom_call.1} parent=31 // pred_check
          %p3296 = pneg %p107
        $region42: #{tpu_custom_call.1} parent=31 // pred_check_branch
          %3298 = sbr.rel (%p3296) target = $region44
        $region43: #{tpu_custom_call.1} parent=31 // pred_region
          %s3300 = ssub.s32 1024, 1024
          %3301 = vsyncadd %s3292, %s3300
          %s3302 = smul.addr %s21, 8
          %s3303 = smul.addr %s3302, 128
          %s3304 = scalar_lea.hbm %s3, %s3303
          %s3305 = sshll.u32 %s3295, 4
          %s3306 = int_to_ptr.vmem [resolvable:$true] %s3305
          %3311 = dma.vmem_to_hbm [thread:$0]  %s3306, 1024, %s3304, %s3292, 128, 128, 8
        $region44: #{tpu_custom_call.1} parent=31 // pred_fallthru
          _
      $region32: #{tpu_custom_call.1} parent=5 // pred_fallthru
        _
      %p3312 = scmp.le.s32.totalorder 2, %s16
      // Predicated region
      $region45: #{tpu_custom_call.1} parent=5 // pred_check
        %p3313 = pneg %p3312
      $region46: #{tpu_custom_call.1} parent=5 // pred_check_branch
        %3315 = sbr.rel (%p3313) target = $region48
      $region47: #{tpu_custom_call.1} parent=5 // pred_region
        %s3316 = ssub.s32 %s16, 2
        // Predicated region
        $region49: #{tpu_custom_call.1} parent=47 // pred_check
          %p3317 = pneg %p113
        $region50: #{tpu_custom_call.1} parent=47 // pred_check_branch
          %3319 = sbr.rel (%p3317) target = $region52
        $region51: #{tpu_custom_call.1} parent=47 // pred_region
          %s3320 = sand.u32 %s98, 1
          %s3321 = scalar_lea.sflag [#allocation4], %s3320
          %s3322 = sand.u32 %s98, 1
          %s3323 = smul.addr %s3322, 64
          %s3324 = scalar_lea.vmem [#allocation7], %s3323
          %3325 = dma.done %s3321, 1024
        $region52: #{tpu_custom_call.1} parent=47 // pred_fallthru
          _
      $region48: #{tpu_custom_call.1} parent=5 // pred_fallthru
        _
    $region6: #{tpu_custom_call.1} parent=1 // loop_footer
      %s20 = sadd.s32 1, %s16
    $region7: #{tpu_custom_call.1} parent=1 // loop_footer_branch
      %15 = sbr.rel target = $region3
    $region8: #{tpu_custom_call.1} parent=1 // loop_exit
      _
    %3326 = vsyncpa [#allocation3], 1
    %s3327 = scalar_lea.sflag [#allocation3], 1
    %3328 = vsyncpa %s3327, 1
    %3329 = vsyncpa [#allocation6], 1
    %3330 = vsyncpa [#allocation4], 1
    %s3331 = scalar_lea.sflag [#allocation4], 1
    %3332 = vsyncpa %s3331, 1

</llo_original>
